<compile_context>
chip_gen: v5e
topology: v5e:2x2
jax: 0.10.0
libtpu: 0.0.40
codegen_flags: <defaults>
</compile_context>

<pallas_src>
import functools

import jax
import jax.numpy as jnp
from jax import lax
from jax.experimental import pallas as pl
from jax.experimental.pallas import tpu as pltpu

# Compiler-params class name changed across JAX versions; prefer the current one.
_CompilerParams = getattr(pltpu, "CompilerParams", None)
if _CompilerParams is None:  # pragma: no cover - older JAX fallback
    _CompilerParams = getattr(pltpu, "TPUCompilerParams")

_VMEM_LIMIT = 32 * 1024 * 1024
_PAD_SENTINEL = 1e17  # padded centroids land "infinitely" far from real ones


def _round_up(x, m):
    return ((x + m - 1) // m) * m


# ---------------------------------------------------------------------------
# Kernel 1: negated pairwise squared centroid distances (top_k-ready).
#   a_ref  : [tile, 8]   centroid rows (cols 3..7 are zero / sentinel padding)
#   bt_ref : [8, tile]   centroid columns (pre-transposed, tiny)
#   o_ref  : [tile, tile] = -(|a-b|^2), diagonal forced to -inf
# -|a-b|^2 = 2 a.b - |a|^2 - |b|^2; the a.b term runs on the MXU so per-element
# VPU work is ~3 ops and the kernel stays HBM-writeback bound on all gens.
# ---------------------------------------------------------------------------
def _neg_dist_kernel(a_ref, bt_ref, o_ref, *, tile):
    a = a_ref[...]                                        # [tile, 8]
    bt = bt_ref[...]                                      # [8, tile]
    ab = jnp.dot(a, bt, preferred_element_type=jnp.float32)   # MXU
    rn = (a[:, 0:1] * a[:, 0:1] + a[:, 1:2] * a[:, 1:2]
          + a[:, 2:3] * a[:, 2:3])                        # [tile, 1]
    cn = (bt[0:1, :] * bt[0:1, :] + bt[1:2, :] * bt[1:2, :]
          + bt[2:3, :] * bt[2:3, :])                      # [1, tile]
    neg = 2.0 * ab - rn - cn

    i = pl.program_id(0)
    j = pl.program_id(1)

    @pl.when(i == j)       # only diagonal tiles contain self-distances
    def _():
        rows = lax.broadcasted_iota(jnp.int32, (tile, tile), 0)
        cols = lax.broadcasted_iota(jnp.int32, (tile, tile), 1)
        o_ref[...] = jnp.where(rows == cols, -jnp.inf, neg)

    @pl.when(i != j)
    def _():
        o_ref[...] = neg


def _neg_pairwise_sq_dists(cent8, *, tile=512):
    fp = cent8.shape[0]
    ct = jnp.transpose(cent8)                             # [8, fp] (tiny)
    kern = functools.partial(_neg_dist_kernel, tile=tile)
    return pl.pallas_call(
        kern,
        out_shape=jax.ShapeDtypeStruct((fp, fp), jnp.float32),
        grid=(fp // tile, fp // tile),
        in_specs=[
            pl.BlockSpec((tile, 8), lambda i, j: (i, 0)),
            pl.BlockSpec((8, tile), lambda i, j: (0, j)),
        ],
        out_specs=pl.BlockSpec((tile, tile), lambda i, j: (i, j)),
        compiler_params=_CompilerParams(
            dimension_semantics=("parallel", "parallel"),
            vmem_limit_bytes=_VMEM_LIMIT),
    )(cent8, ct)


# ---------------------------------------------------------------------------
# Kernel 2: edge-crossing detection, faces on (sublane, lane) axes.
#   fd_ref  : [10, tr, 128]      row 3*slot+comp = face-edge component,
#                                row 9 = face probability
#   ne_ref  : [9, km1, tr, 128]  row 3*slot+comp, second dim = neighbor index
#   out_ref : [tr, 128]          prob * #crossings per face
# Each tile covers tr*128 faces; the (j, l) pairs are Python-unrolled, the
# neighbor index is an in-kernel fori_loop with a vector accumulator.
# Division-free hit test: 0<=t_num/denom<=1 & 0<=u_num/denom<=1 evaluated via
# sign-aware compares, so denom==0 (degenerate / padded faces) never counts,
# matching the torch NaN/inf-comparison-is-false semantics.
# ---------------------------------------------------------------------------
def _crossing_kernel(fd_ref, ne_ref, out_ref, *, km1):
    tr = out_ref.shape[0]
    init = jnp.zeros((tr, 128), jnp.float32)

    def nb_body(nb, crossings):
        for j in range(3):
            ejx = fd_ref[3 * j + 0]
            ejy = fd_ref[3 * j + 1]
            ejz = fd_ref[3 * j + 2]
            for l in range(3):
                nx = ne_ref[3 * l + 0, nb]
                ny = ne_ref[3 * l + 1, nb]
                nz = ne_ref[3 * l + 2, nb]
                # cross = edge_j x neighbor_edge
                cx = ejy * nz - ejz * ny
                cy = ejz * nx - ejx * nz
                cz = ejx * ny - ejy * nx
                t_num = cx * nx + cy * ny + cz * nz       # cross . neighbor
                denom = cx * ejx + cy * ejy + cz * ejz    # cross . edge_j
                t_pos = (denom > 0.0) & (t_num >= 0.0) & (t_num <= denom)
                t_neg = (denom < 0.0) & (t_num <= 0.0) & (t_num >= denom)
                if l == j:
                    # u_num would be bitwise identical to denom -> u == 1
                    # whenever denom != 0, so the u conditions collapse.
                    hit = t_pos | t_neg
                else:
                    elx = fd_ref[3 * l + 0]
                    ely = fd_ref[3 * l + 1]
                    elz = fd_ref[3 * l + 2]
                    u_num = cx * elx + cy * ely + cz * elz  # cross . edges[i,l]
                    hit = ((t_pos & (u_num >= 0.0) & (u_num <= denom)) |
                           (t_neg & (u_num <= 0.0) & (u_num >= denom)))
                crossings = crossings + hit.astype(jnp.float32)
        return crossings

    crossings = lax.fori_loop(0, km1, nb_body, init)
    out_ref[...] = fd_ref[9] * crossings


# ---------------------------------------------------------------------------
# Wrapper: full EdgeCrossingLoss forward
# ---------------------------------------------------------------------------
def edge_crossing_loss(vertices, faces, face_probs, k: int = 20):
    num_faces = int(faces.shape[0])
    if num_faces == 0:
        return jnp.zeros((), jnp.float32)

    vertices = vertices.astype(jnp.float32)
    faces = faces.astype(jnp.int32)
    face_probs = face_probs.astype(jnp.float32)

    # Match face_probs length to number of faces (static-shape glue).
    p = int(face_probs.shape[0])
    if p > num_faces:
        face_probs = face_probs[:num_faces]
    elif p < num_faces:
        face_probs = jnp.concatenate(
            [face_probs, jnp.zeros((num_faces - p,), jnp.float32)])

    keff = min(k, num_faces)
    km1 = keff - 1
    if km1 <= 0:
        # single face -> no neighbors -> zero crossings
        return jnp.zeros((), jnp.float32)

    face_verts = jnp.take(vertices, faces, axis=0)         # [F, 3, 3]
    centroids = jnp.mean(face_verts, axis=1)               # [F, 3]

    # --- kNN among centroids: fused mask/negation in kernel 1 + lax.top_k ---
    tile_d = 512
    fp1 = _round_up(num_faces, tile_d)
    cent8 = jnp.pad(centroids, ((0, 0), (0, 5)))           # [F, 8]
    pad_rows = jnp.full((fp1 - num_faces, 8), _PAD_SENTINEL, jnp.float32)
    cent8 = jnp.concatenate([cent8, pad_rows], axis=0)     # [fp1, 8]
    neg_d = _neg_pairwise_sq_dists(cent8, tile=tile_d)     # [fp1, fp1]
    # TODO(synk): for very large meshes, stream the k-NN selection inside the
    # distance kernel (running k-smallest in VMEM) instead of materializing FxF.
    _, nearest = lax.top_k(neg_d[:num_faces], km1)         # [F, km1]

    # --- edge vectors and kernel-2 operands (faces on the lane axis) --------
    roll = jnp.array([1, 2, 0], dtype=jnp.int32)
    edges = jnp.take(vertices, faces[:, roll], axis=0) - face_verts  # [F,3,3]
    edges9_t = jnp.transpose(edges.reshape(num_faces, 9))            # [9, F]

    tr = min(16, -(-num_faces // 128))          # sublane rows per face tile
    fp2 = _round_up(num_faces, tr * 128)
    rtot = fp2 // 128
    grid2 = rtot // tr
    pad_f = fp2 - num_faces

    # face edges (rows 0..8, index slot*3+comp) + probability (row 9)
    fd = jnp.concatenate([edges9_t, face_probs[None, :]], axis=0)    # [10, F]
    fd = jnp.pad(fd, ((0, 0), (0, pad_f))).reshape(10, rtot, 128)

    # neighbor edges gathered straight into the [9, km1, F] kernel layout
    # (no big materialized transpose between the gather and the kernel)
    ne = jnp.take(edges9_t, jnp.transpose(nearest), axis=1)          # [9,km1,F]
    ne = jnp.pad(ne, ((0, 0), (0, 0), (0, pad_f))).reshape(9, km1, rtot, 128)

    kern = functools.partial(_crossing_kernel, km1=km1)
    weighted = pl.pallas_call(
        kern,
        out_shape=jax.ShapeDtypeStruct((rtot, 128), jnp.float32),
        grid=(grid2,),
        in_specs=[
            pl.BlockSpec((10, tr, 128), lambda i: (0, i, 0)),
            pl.BlockSpec((9, km1, tr, 128), lambda i: (0, 0, i, 0)),
        ],
        out_specs=pl.BlockSpec((tr, 128), lambda i: (i, 0)),
        compiler_params=_CompilerParams(
            dimension_semantics=("parallel",),
            vmem_limit_bytes=_VMEM_LIMIT),
    )(fd, ne)

    return jnp.sum(weighted) / jnp.float32(num_faces)


if __name__ == "__main__":
    key = jax.random.PRNGKey(0)
    k1, k2, k3, k4, k5, k6 = jax.random.split(key, 6)

    # Case 1: small hand-built mesh (F = 8, exercises keff < k path).
    vertices = jax.random.normal(k1, (12, 3), dtype=jnp.float32)
    faces = jnp.array(
        [[0, 1, 2],
         [1, 2, 3],
         [2, 3, 4],
         [4, 5, 6],
         [6, 7, 8],
         [8, 9, 10],
         [9, 10, 11],
         [0, 5, 11]], dtype=jnp.int32)
    face_probs = jax.random.uniform(k2, (8,), dtype=jnp.float32)
    loss1 = edge_crossing_loss(vertices, faces, face_probs, k=20)
    jax.block_until_ready(loss1)

    # Case 2: F = 40 random faces, exercises the full k = 20 neighborhood.
    verts2 = jax.random.normal(k3, (32, 3), dtype=jnp.float32)
    faces2 = jax.random.randint(k4, (40, 3), 0, 32, dtype=jnp.int32)
    probs2 = jax.random.uniform(jax.random.PRNGKey(1), (40,), dtype=jnp.float32)
    loss2 = edge_crossing_loss(verts2, faces2, probs2, k=20)
    jax.block_until_ready(loss2)

    # Case 3: F = 600, exercises the multi-tile (2x2) distance grid with
    # both diagonal and off-diagonal tiles, and a 5-sublane face tile.
    verts3 = jax.random.normal(k5, (200, 3), dtype=jnp.float32)
    faces3 = jax.random.randint(k6, (600, 3), 0, 200, dtype=jnp.int32)
    probs3 = jax.random.uniform(jax.random.PRNGKey(2), (600,), dtype=jnp.float32)
    loss3 = edge_crossing_loss(verts3, faces3, probs3, k=20)
    jax.block_until_ready(loss3)

    for loss in (loss1, loss2, loss3):
        assert loss.shape == () and bool(jnp.isfinite(loss))

    print("KERNEL_OK")
</pallas_src>

<mosaic_0001>
module attributes {stable_mosaic.version = 11 : i64} {
  func.func @_neg_dist_kernel(%arg0: i32, %arg1: i32, %arg2: memref<512x8xf32, #tpu.memory_space<vmem>>, %arg3: memref<8x512xf32, #tpu.memory_space<vmem>>, %arg4: memref<512x512xf32, #tpu.memory_space<vmem>>) attributes {dimension_semantics = [#tpu.dimension_semantics<parallel>, #tpu.dimension_semantics<parallel>], iteration_bounds = array<i64: 1, 1>, scalar_prefetch = 0 : i64, scratch_operands = 0 : i64, tpu.core_type = #tpu.core_type<tc>, window_params = [{transform_indices = @transform_0, window_bounds = array<i64: 512, 8>}, {transform_indices = @transform_1, window_bounds = array<i64: 8, 512>}, {transform_indices = @transform_2, window_bounds = array<i64: 512, 512>}]} {
    %c0 = arith.constant 0 : index
    %c0_0 = arith.constant 0 : index
    %0 = vector.load %arg2[%c0, %c0_0] : memref<512x8xf32, #tpu.memory_space<vmem>>, vector<512x8xf32>
    %c0_1 = arith.constant 0 : index
    %c0_2 = arith.constant 0 : index
    %1 = vector.load %arg3[%c0_1, %c0_2] : memref<8x512xf32, #tpu.memory_space<vmem>>, vector<8x512xf32>
    %cst = arith.constant dense<0.000000e+00> : vector<512x512xf32>
    %2 = tpu.matmul %0, %1, %cst {dimension_numbers = #tpu.dot_dimension_numbers<[1], [0], [0], [1], [0, 0, 1, 1], [], []>} : vector<512x8xf32>, vector<8x512xf32>, vector<512x512xf32> -> vector<512x512xf32>
    %3 = vector.extract_strided_slice %0 {offsets = [0, 0], sizes = [512, 1], strides = [1, 1]} : vector<512x8xf32> to vector<512x1xf32>
    %4 = vector.extract_strided_slice %0 {offsets = [0, 0], sizes = [512, 1], strides = [1, 1]} : vector<512x8xf32> to vector<512x1xf32>
    %5 = arith.mulf %3, %4 : vector<512x1xf32>
    %6 = vector.extract_strided_slice %0 {offsets = [0, 1], sizes = [512, 1], strides = [1, 1]} : vector<512x8xf32> to vector<512x1xf32>
    %7 = vector.extract_strided_slice %0 {offsets = [0, 1], sizes = [512, 1], strides = [1, 1]} : vector<512x8xf32> to vector<512x1xf32>
    %8 = arith.mulf %6, %7 : vector<512x1xf32>
    %9 = arith.addf %5, %8 : vector<512x1xf32>
    %10 = vector.extract_strided_slice %0 {offsets = [0, 2], sizes = [512, 1], strides = [1, 1]} : vector<512x8xf32> to vector<512x1xf32>
    %11 = vector.extract_strided_slice %0 {offsets = [0, 2], sizes = [512, 1], strides = [1, 1]} : vector<512x8xf32> to vector<512x1xf32>
    %12 = arith.mulf %10, %11 : vector<512x1xf32>
    %13 = arith.addf %9, %12 : vector<512x1xf32>
    %14 = vector.extract_strided_slice %1 {offsets = [0, 0], sizes = [1, 512], strides = [1, 1]} : vector<8x512xf32> to vector<1x512xf32>
    %15 = vector.extract_strided_slice %1 {offsets = [0, 0], sizes = [1, 512], strides = [1, 1]} : vector<8x512xf32> to vector<1x512xf32>
    %16 = arith.mulf %14, %15 : vector<1x512xf32>
    %17 = vector.extract_strided_slice %1 {offsets = [1, 0], sizes = [1, 512], strides = [1, 1]} : vector<8x512xf32> to vector<1x512xf32>
    %18 = vector.extract_strided_slice %1 {offsets = [1, 0], sizes = [1, 512], strides = [1, 1]} : vector<8x512xf32> to vector<1x512xf32>
    %19 = arith.mulf %17, %18 : vector<1x512xf32>
    %20 = arith.addf %16, %19 : vector<1x512xf32>
    %21 = vector.extract_strided_slice %1 {offsets = [2, 0], sizes = [1, 512], strides = [1, 1]} : vector<8x512xf32> to vector<1x512xf32>
    %22 = vector.extract_strided_slice %1 {offsets = [2, 0], sizes = [1, 512], strides = [1, 1]} : vector<8x512xf32> to vector<1x512xf32>
    %23 = arith.mulf %21, %22 : vector<1x512xf32>
    %24 = arith.addf %20, %23 : vector<1x512xf32>
    %cst_3 = arith.constant 2.000000e+00 : f32
    %25 = vector.broadcast %cst_3 : f32 to vector<512x512xf32>
    %26 = arith.mulf %25, %2 : vector<512x512xf32>
    %27 = vector.broadcast %13 : vector<512x1xf32> to vector<512x512xf32>
    %28 = arith.subf %26, %27 : vector<512x512xf32>
    %29 = vector.broadcast %24 : vector<1x512xf32> to vector<512x512xf32>
    %30 = arith.subf %28, %29 : vector<512x512xf32>
    %31 = arith.cmpi eq, %arg0, %arg1 : i32
    %32 = arith.extui %31 : i1 to i32
    %c0_i32 = arith.constant 0 : i32
    %33 = arith.cmpi ne, %32, %c0_i32 : i32
    scf.if %33 {
      %37 = tpu.iota {dimensions = array<i32: 0>} : vector<512x512xi32>
      %38 = tpu.iota {dimensions = array<i32: 1>} : vector<512x512xi32>
      %39 = arith.cmpi eq, %37, %38 : vector<512x512xi32>
      %cst_5 = arith.constant 0xFF800000 : f32
      %40 = vector.broadcast %cst_5 : f32 to vector<512x512xf32>
      %41 = arith.select %39, %40, %30 : vector<512x512xi1>, vector<512x512xf32>
      %c0_6 = arith.constant 0 : index
      %c0_7 = arith.constant 0 : index
      %42 = vector.load %arg4[%c0_6, %c0_7] : memref<512x512xf32, #tpu.memory_space<vmem>>, vector<512x512xf32>
      tpu.vector_store %arg4[%c0_6, %c0_7], %41 {strides = array<i32>} : memref<512x512xf32, #tpu.memory_space<vmem>>, vector<512x512xf32>,
    } else {
    }
    %34 = arith.cmpi ne, %arg0, %arg1 : i32
    %35 = arith.extui %34 : i1 to i32
    %c0_i32_4 = arith.constant 0 : i32
    %36 = arith.cmpi ne, %35, %c0_i32_4 : i32
    scf.if %36 {
      %c0_5 = arith.constant 0 : index
      %c0_6 = arith.constant 0 : index
      %37 = vector.load %arg4[%c0_5, %c0_6] : memref<512x512xf32, #tpu.memory_space<vmem>>, vector<512x512xf32>
      tpu.vector_store %arg4[%c0_5, %c0_6], %30 {strides = array<i32>} : memref<512x512xf32, #tpu.memory_space<vmem>>, vector<512x512xf32>,
    } else {
    }
    return
  }
  func.func @transform_0(%arg0: i32, %arg1: i32) -> (i32, i32) {
    %c0_i32 = arith.constant 0 : i32
    %c0_i32_0 = arith.constant 0 : i32
    return %arg0, %c0_i32 : i32, i32
  }
  func.func @transform_1(%arg0: i32, %arg1: i32) -> (i32, i32) {
    %c0_i32 = arith.constant 0 : i32
    %c0_i32_0 = arith.constant 0 : i32
    return %c0_i32, %arg1 : i32, i32
  }
  func.func @transform_2(%arg0: i32, %arg1: i32) -> (i32, i32) {
    %c0_i32 = arith.constant 0 : i32
    return %arg0, %arg1 : i32, i32
  }
}

</mosaic_0001>

<llo_original>
// kernel: tpu_custom_call.1
$region0: #{tpu_custom_call.1}
  #allocation0 [shape = 'u32[]', space=smem, size = 0x4, offset = 0x4, fixed_abs, tag = 'smem constant byte address 0x4 - core index']
  #allocation1 [shape = 'u32[72,128]{1,0:T(1,128)}', space=vmem, size = 0x9000, scoped, tag = 'internal scratch']
  %s0 = inlined_call_operand.vmem [shape: f32[512,8], index: 0, kind: input, shape index: {}]
  %s1 = inlined_call_operand.vmem [shape: f32[8,512], index: 1, kind: input, shape index: {}]
  %s2 = inlined_call_operand.hbm [shape: f32[512,512], index: 2, kind: output, shape index: {}]
  %s3 = sld [smem:[#allocation0]]
  $region26: #{tpu_custom_call.1} parent=0
    _
  %s5 = ssub.s32 1, %s3
  %s6 = scalar_select 0, %s5, %s3
  $region1: #{tpu_custom_call.1} parent=0
    #allocation2 [shape = 'u8[1048576]{0}', space=vmem, size = 0x100000, scoped, tag = 'output window, operand 0, single buffered']
    #allocation3 [shape = 's32[1]{0}', space=sflag, size = 0x4, scoped, tag = 'scoped memory for tpu_custom_call.1']
    %7 = vsyncpa [#allocation3], 0
    // Predicated region
    $region2: #{tpu_custom_call.1} parent=1 // pred_check
      _
    $region3: #{tpu_custom_call.1} parent=1 // pred_check_branch
      %9 = sbr.rel (0) target = $region5
    $region4: #{tpu_custom_call.1} parent=1 // pred_region
      _
    $region5: #{tpu_custom_call.1} parent=1 // pred_fallthru
      _
    // Predicated region
    $region6: #{tpu_custom_call.1} parent=1 // pred_check
      _
    $region7: #{tpu_custom_call.1} parent=1 // pred_check_branch
      %11 = sbr.rel (0) target = $region9
    $region8: #{tpu_custom_call.1} parent=1 // pred_region
      _
    $region9: #{tpu_custom_call.1} parent=1 // pred_fallthru
      _
    %v12 = vld [vmem:[%s0] sm:$0xff]
    %v13 = vld [vmem:[%s0 + $0x8] sm:$0xff]
    %v14 = vld [vmem:[%s0 + $0x10] sm:$0xff]
    %v15 = vld [vmem:[%s0 + $0x18] sm:$0xff]
    %v16 = vld [vmem:[%s0 + $0x20] sm:$0xff]
    %v17 = vld [vmem:[%s0 + $0x28] sm:$0xff]
    %v18 = vld [vmem:[%s0 + $0x30] sm:$0xff]
    %v19 = vld [vmem:[%s0 + $0x38] sm:$0xff]
    %v20 = vld [vmem:[%s0 + $0x40] sm:$0xff]
    %v21 = vld [vmem:[%s0 + $0x48] sm:$0xff]
    %v22 = vld [vmem:[%s0 + $0x50] sm:$0xff]
    %v23 = vld [vmem:[%s0 + $0x58] sm:$0xff]
    %v24 = vld [vmem:[%s0 + $0x60] sm:$0xff]
    %v25 = vld [vmem:[%s0 + $0x68] sm:$0xff]
    %v26 = vld [vmem:[%s0 + $0x70] sm:$0xff]
    %v27 = vld [vmem:[%s0 + $0x78] sm:$0xff]
    %v28 = vld [vmem:[%s0 + $0x80] sm:$0xff]
    %v29 = vld [vmem:[%s0 + $0x88] sm:$0xff]
    %v30 = vld [vmem:[%s0 + $0x90] sm:$0xff]
    %v31 = vld [vmem:[%s0 + $0x98] sm:$0xff]
    %v32 = vld [vmem:[%s0 + $0xa0] sm:$0xff]
    %v33 = vld [vmem:[%s0 + $0xa8] sm:$0xff]
    %v34 = vld [vmem:[%s0 + $0xb0] sm:$0xff]
    %v35 = vld [vmem:[%s0 + $0xb8] sm:$0xff]
    %v36 = vld [vmem:[%s0 + $0xc0] sm:$0xff]
    %v37 = vld [vmem:[%s0 + $0xc8] sm:$0xff]
    %v38 = vld [vmem:[%s0 + $0xd0] sm:$0xff]
    %v39 = vld [vmem:[%s0 + $0xd8] sm:$0xff]
    %v40 = vld [vmem:[%s0 + $0xe0] sm:$0xff]
    %v41 = vld [vmem:[%s0 + $0xe8] sm:$0xff]
    %v42 = vld [vmem:[%s0 + $0xf0] sm:$0xff]
    %v43 = vld [vmem:[%s0 + $0xf8] sm:$0xff]
    %v44 = vld [vmem:[%s0 + $0x100] sm:$0xff]
    %v45 = vld [vmem:[%s0 + $0x108] sm:$0xff]
    %v46 = vld [vmem:[%s0 + $0x110] sm:$0xff]
    %v47 = vld [vmem:[%s0 + $0x118] sm:$0xff]
    %v48 = vld [vmem:[%s0 + $0x120] sm:$0xff]
    %v49 = vld [vmem:[%s0 + $0x128] sm:$0xff]
    %v50 = vld [vmem:[%s0 + $0x130] sm:$0xff]
    %v51 = vld [vmem:[%s0 + $0x138] sm:$0xff]
    %v52 = vld [vmem:[%s0 + $0x140] sm:$0xff]
    %v53 = vld [vmem:[%s0 + $0x148] sm:$0xff]
    %v54 = vld [vmem:[%s0 + $0x150] sm:$0xff]
    %v55 = vld [vmem:[%s0 + $0x158] sm:$0xff]
    %v56 = vld [vmem:[%s0 + $0x160] sm:$0xff]
    %v57 = vld [vmem:[%s0 + $0x168] sm:$0xff]
    %v58 = vld [vmem:[%s0 + $0x170] sm:$0xff]
    %v59 = vld [vmem:[%s0 + $0x178] sm:$0xff]
    %v60 = vld [vmem:[%s0 + $0x180] sm:$0xff]
    %v61 = vld [vmem:[%s0 + $0x188] sm:$0xff]
    %v62 = vld [vmem:[%s0 + $0x190] sm:$0xff]
    %v63 = vld [vmem:[%s0 + $0x198] sm:$0xff]
    %v64 = vld [vmem:[%s0 + $0x1a0] sm:$0xff]
    %v65 = vld [vmem:[%s0 + $0x1a8] sm:$0xff]
    %v66 = vld [vmem:[%s0 + $0x1b0] sm:$0xff]
    %v67 = vld [vmem:[%s0 + $0x1b8] sm:$0xff]
    %v68 = vld [vmem:[%s0 + $0x1c0] sm:$0xff]
    %v69 = vld [vmem:[%s0 + $0x1c8] sm:$0xff]
    %v70 = vld [vmem:[%s0 + $0x1d0] sm:$0xff]
    %v71 = vld [vmem:[%s0 + $0x1d8] sm:$0xff]
    %v72 = vld [vmem:[%s0 + $0x1e0] sm:$0xff]
    %v73 = vld [vmem:[%s0 + $0x1e8] sm:$0xff]
    %v74 = vld [vmem:[%s0 + $0x1f0] sm:$0xff]
    %v75 = vld [vmem:[%s0 + $0x1f8] sm:$0xff]
    %v76 = vld [vmem:[%s1] sm:$0xff]
    %v77 = vld [vmem:[%s1 + $0x8] sm:$0xff]
    %v78 = vld [vmem:[%s1 + $0x10] sm:$0xff]
    %v79 = vld [vmem:[%s1 + $0x18] sm:$0xff]
    %vm80 = vcmask 64512
    %v82 = vsel %vm80, %v12, 0
    %v85 = vsel %vm80, %v13, 0
    %v88 = vsel %vm80, %v14, 0
    %v91 = vsel %vm80, %v15, 0
    %v94 = vsel %vm80, %v16, 0
    %v97 = vsel %vm80, %v17, 0
    %v100 = vsel %vm80, %v18, 0
    %v103 = vsel %vm80, %v19, 0
    %v106 = vsel %vm80, %v20, 0
    %v109 = vsel %vm80, %v21, 0
    %v112 = vsel %vm80, %v22, 0
    %v115 = vsel %vm80, %v23, 0
    %v118 = vsel %vm80, %v24, 0
    %v121 = vsel %vm80, %v25, 0
    %v124 = vsel %vm80, %v26, 0
    %v127 = vsel %vm80, %v27, 0
    %v130 = vsel %vm80, %v28, 0
    %v133 = vsel %vm80, %v29, 0
    %v136 = vsel %vm80, %v30, 0
    %v139 = vsel %vm80, %v31, 0
    %v142 = vsel %vm80, %v32, 0
    %v145 = vsel %vm80, %v33, 0
    %v148 = vsel %vm80, %v34, 0
    %v151 = vsel %vm80, %v35, 0
    %v154 = vsel %vm80, %v36, 0
    %v157 = vsel %vm80, %v37, 0
    %v160 = vsel %vm80, %v38, 0
    %v163 = vsel %vm80, %v39, 0
    %v166 = vsel %vm80, %v40, 0
    %v169 = vsel %vm80, %v41, 0
    %v172 = vsel %vm80, %v42, 0
    %v175 = vsel %vm80, %v43, 0
    %v178 = vsel %vm80, %v44, 0
    %v181 = vsel %vm80, %v45, 0
    %v184 = vsel %vm80, %v46, 0
    %v187 = vsel %vm80, %v47, 0
    %v190 = vsel %vm80, %v48, 0
    %v193 = vsel %vm80, %v49, 0
    %v196 = vsel %vm80, %v50, 0
    %v199 = vsel %vm80, %v51, 0
    %v202 = vsel %vm80, %v52, 0
    %v205 = vsel %vm80, %v53, 0
    %v208 = vsel %vm80, %v54, 0
    %v211 = vsel %vm80, %v55, 0
    %v214 = vsel %vm80, %v56, 0
    %v217 = vsel %vm80, %v57, 0
    %v220 = vsel %vm80, %v58, 0
    %v223 = vsel %vm80, %v59, 0
    %v226 = vsel %vm80, %v60, 0
    %v229 = vsel %vm80, %v61, 0
    %v232 = vsel %vm80, %v62, 0
    %v235 = vsel %vm80, %v63, 0
    %v238 = vsel %vm80, %v64, 0
    %v241 = vsel %vm80, %v65, 0
    %v244 = vsel %vm80, %v66, 0
    %v247 = vsel %vm80, %v67, 0
    %v250 = vsel %vm80, %v68, 0
    %v253 = vsel %vm80, %v69, 0
    %v256 = vsel %vm80, %v70, 0
    %v259 = vsel %vm80, %v71, 0
    %v262 = vsel %vm80, %v72, 0
    %v265 = vsel %vm80, %v73, 0
    %v268 = vsel %vm80, %v74, 0
    %v271 = vsel %vm80, %v75, 0
    %273 = vmatpush.msra.mxu0 0.0
    %274 = vmatpush.msra.mxu0 0.0
    %275 = vmatpush.msra.mxu0 0.0
    %276 = vmatpush.msra.mxu0 0.0
    %277 = vmatpush.msra.mxu0 0.0
    %278 = vmatpush.msra.mxu0 0.0
    %279 = vmatpush.msra.mxu0 0.0
    %280 = vmatpush.msra.mxu0 0.0
    %281 = vmatpush.msra.mxu0 0.0
    %282 = vmatpush.msra.mxu0 0.0
    %283 = vmatpush.msra.mxu0 0.0
    %284 = vmatpush.msra.mxu0 0.0
    %285 = vmatpush.msra.mxu0 0.0
    %286 = vmatpush.msra.mxu0 0.0
    %287 = vmatpush.msra.mxu0 0.0
    %288 = vmatpush.msra.mxu0 %v76
    %289 = vmatmul.f32.gmra.mxu0 %v82
    %v290 = vpop.f32.mrf.mxu0
    %v291 = vadd.f32 0.0, %v290
    %292 = vmatmul.f32.gmra.mxu0 %v85
    %v293 = vpop.f32.mrf.mxu0
    %v294 = vadd.f32 0.0, %v293
    %295 = vmatmul.f32.gmra.mxu0 %v88
    %v296 = vpop.f32.mrf.mxu0
    %v297 = vadd.f32 0.0, %v296
    %298 = vmatmul.f32.gmra.mxu0 %v91
    %v299 = vpop.f32.mrf.mxu0
    %v300 = vadd.f32 0.0, %v299
    %301 = vmatmul.f32.gmra.mxu0 %v94
    %v302 = vpop.f32.mrf.mxu0
    %v303 = vadd.f32 0.0, %v302
    %304 = vmatmul.f32.gmra.mxu0 %v97
    %v305 = vpop.f32.mrf.mxu0
    %v306 = vadd.f32 0.0, %v305
    %307 = vmatmul.f32.gmra.mxu0 %v100
    %v308 = vpop.f32.mrf.mxu0
    %v309 = vadd.f32 0.0, %v308
    %310 = vmatmul.f32.gmra.mxu0 %v103
    %v311 = vpop.f32.mrf.mxu0
    %v312 = vadd.f32 0.0, %v311
    %313 = vmatmul.f32.gmra.mxu0 %v106
    %v314 = vpop.f32.mrf.mxu0
    %v315 = vadd.f32 0.0, %v314
    %316 = vmatmul.f32.gmra.mxu0 %v109
    %v317 = vpop.f32.mrf.mxu0
    %v318 = vadd.f32 0.0, %v317
    %319 = vmatmul.f32.gmra.mxu0 %v112
    %v320 = vpop.f32.mrf.mxu0
    %v321 = vadd.f32 0.0, %v320
    %322 = vmatmul.f32.gmra.mxu0 %v115
    %v323 = vpop.f32.mrf.mxu0
    %v324 = vadd.f32 0.0, %v323
    %325 = vmatmul.f32.gmra.mxu0 %v118
    %v326 = vpop.f32.mrf.mxu0
    %v327 = vadd.f32 0.0, %v326
    %328 = vmatmul.f32.gmra.mxu0 %v121
    %v329 = vpop.f32.mrf.mxu0
    %v330 = vadd.f32 0.0, %v329
    %331 = vmatmul.f32.gmra.mxu0 %v124
    %v332 = vpop.f32.mrf.mxu0
    %v333 = vadd.f32 0.0, %v332
    %334 = vmatmul.f32.gmra.mxu0 %v127
    %v335 = vpop.f32.mrf.mxu0
    %v336 = vadd.f32 0.0, %v335
    %337 = vmatmul.f32.gmra.mxu0 %v130
    %v338 = vpop.f32.mrf.mxu0
    %v339 = vadd.f32 0.0, %v338
    %340 = vmatmul.f32.gmra.mxu0 %v133
    %v341 = vpop.f32.mrf.mxu0
    %v342 = vadd.f32 0.0, %v341
    %343 = vmatmul.f32.gmra.mxu0 %v136
    %v344 = vpop.f32.mrf.mxu0
    %v345 = vadd.f32 0.0, %v344
    %346 = vmatmul.f32.gmra.mxu0 %v139
    %v347 = vpop.f32.mrf.mxu0
    %v348 = vadd.f32 0.0, %v347
    %349 = vmatmul.f32.gmra.mxu0 %v142
    %v350 = vpop.f32.mrf.mxu0
    %v351 = vadd.f32 0.0, %v350
    %352 = vmatmul.f32.gmra.mxu0 %v145
    %v353 = vpop.f32.mrf.mxu0
    %v354 = vadd.f32 0.0, %v353
    %355 = vmatmul.f32.gmra.mxu0 %v148
    %v356 = vpop.f32.mrf.mxu0
    %v357 = vadd.f32 0.0, %v356
    %358 = vmatmul.f32.gmra.mxu0 %v151
    %v359 = vpop.f32.mrf.mxu0
    %v360 = vadd.f32 0.0, %v359
    %361 = vmatmul.f32.gmra.mxu0 %v154
    %v362 = vpop.f32.mrf.mxu0
    %v363 = vadd.f32 0.0, %v362
    %364 = vmatmul.f32.gmra.mxu0 %v157
    %v365 = vpop.f32.mrf.mxu0
    %v366 = vadd.f32 0.0, %v365
    %367 = vmatmul.f32.gmra.mxu0 %v160
    %v368 = vpop.f32.mrf.mxu0
    %v369 = vadd.f32 0.0, %v368
    %370 = vmatmul.f32.gmra.mxu0 %v163
    %v371 = vpop.f32.mrf.mxu0
    %v372 = vadd.f32 0.0, %v371
    %373 = vmatmul.f32.gmra.mxu0 %v166
    %v374 = vpop.f32.mrf.mxu0
    %v375 = vadd.f32 0.0, %v374
    %376 = vmatmul.f32.gmra.mxu0 %v169
    %v377 = vpop.f32.mrf.mxu0
    %v378 = vadd.f32 0.0, %v377
    %379 = vmatmul.f32.gmra.mxu0 %v172
    %v380 = vpop.f32.mrf.mxu0
    %v381 = vadd.f32 0.0, %v380
    %382 = vmatmul.f32.gmra.mxu0 %v175
    %v383 = vpop.f32.mrf.mxu0
    %v384 = vadd.f32 0.0, %v383
    %385 = vmatmul.f32.gmra.mxu0 %v178
    %v386 = vpop.f32.mrf.mxu0
    %v387 = vadd.f32 0.0, %v386
    %388 = vmatmul.f32.gmra.mxu0 %v181
    %v389 = vpop.f32.mrf.mxu0
    %v390 = vadd.f32 0.0, %v389
    %391 = vmatmul.f32.gmra.mxu0 %v184
    %v392 = vpop.f32.mrf.mxu0
    %v393 = vadd.f32 0.0, %v392
    %394 = vmatmul.f32.gmra.mxu0 %v187
    %v395 = vpop.f32.mrf.mxu0
    %v396 = vadd.f32 0.0, %v395
    %397 = vmatmul.f32.gmra.mxu0 %v190
    %v398 = vpop.f32.mrf.mxu0
    %v399 = vadd.f32 0.0, %v398
    %400 = vmatmul.f32.gmra.mxu0 %v193
    %v401 = vpop.f32.mrf.mxu0
    %v402 = vadd.f32 0.0, %v401
    %403 = vmatmul.f32.gmra.mxu0 %v196
    %v404 = vpop.f32.mrf.mxu0
    %v405 = vadd.f32 0.0, %v404
    %406 = vmatmul.f32.gmra.mxu0 %v199
    %v407 = vpop.f32.mrf.mxu0
    %v408 = vadd.f32 0.0, %v407
    %409 = vmatmul.f32.gmra.mxu0 %v202
    %v410 = vpop.f32.mrf.mxu0
    %v411 = vadd.f32 0.0, %v410
    %412 = vmatmul.f32.gmra.mxu0 %v205
    %v413 = vpop.f32.mrf.mxu0
    %v414 = vadd.f32 0.0, %v413
    %415 = vmatmul.f32.gmra.mxu0 %v208
    %v416 = vpop.f32.mrf.mxu0
    %v417 = vadd.f32 0.0, %v416
    %418 = vmatmul.f32.gmra.mxu0 %v211
    %v419 = vpop.f32.mrf.mxu0
    %v420 = vadd.f32 0.0, %v419
    %421 = vmatmul.f32.gmra.mxu0 %v214
    %v422 = vpop.f32.mrf.mxu0
    %v423 = vadd.f32 0.0, %v422
    %424 = vmatmul.f32.gmra.mxu0 %v217
    %v425 = vpop.f32.mrf.mxu0
    %v426 = vadd.f32 0.0, %v425
    %427 = vmatmul.f32.gmra.mxu0 %v220
    %v428 = vpop.f32.mrf.mxu0
    %v429 = vadd.f32 0.0, %v428
    %430 = vmatmul.f32.gmra.mxu0 %v223
    %v431 = vpop.f32.mrf.mxu0
    %v432 = vadd.f32 0.0, %v431
    %433 = vmatmul.f32.gmra.mxu0 %v226
    %v434 = vpop.f32.mrf.mxu0
    %v435 = vadd.f32 0.0, %v434
    %436 = vmatmul.f32.gmra.mxu0 %v229
    %v437 = vpop.f32.mrf.mxu0
    %v438 = vadd.f32 0.0, %v437
    %439 = vmatmul.f32.gmra.mxu0 %v232
    %v440 = vpop.f32.mrf.mxu0
    %v441 = vadd.f32 0.0, %v440
    %442 = vmatmul.f32.gmra.mxu0 %v235
    %v443 = vpop.f32.mrf.mxu0
    %v444 = vadd.f32 0.0, %v443
    %445 = vmatmul.f32.gmra.mxu0 %v238
    %v446 = vpop.f32.mrf.mxu0
    %v447 = vadd.f32 0.0, %v446
    %448 = vmatmul.f32.gmra.mxu0 %v241
    %v449 = vpop.f32.mrf.mxu0
    %v450 = vadd.f32 0.0, %v449
    %451 = vmatmul.f32.gmra.mxu0 %v244
    %v452 = vpop.f32.mrf.mxu0
    %v453 = vadd.f32 0.0, %v452
    %454 = vmatmul.f32.gmra.mxu0 %v247
    %v455 = vpop.f32.mrf.mxu0
    %v456 = vadd.f32 0.0, %v455
    %457 = vmatmul.f32.gmra.mxu0 %v250
    %v458 = vpop.f32.mrf.mxu0
    %v459 = vadd.f32 0.0, %v458
    %460 = vmatmul.f32.gmra.mxu0 %v253
    %v461 = vpop.f32.mrf.mxu0
    %v462 = vadd.f32 0.0, %v461
    %463 = vmatmul.f32.gmra.mxu0 %v256
    %v464 = vpop.f32.mrf.mxu0
    %v465 = vadd.f32 0.0, %v464
    %466 = vmatmul.f32.gmra.mxu0 %v259
    %v467 = vpop.f32.mrf.mxu0
    %v468 = vadd.f32 0.0, %v467
    %469 = vmatmul.f32.gmra.mxu0 %v262
    %v470 = vpop.f32.mrf.mxu0
    %v471 = vadd.f32 0.0, %v470
    %472 = vmatmul.f32.gmra.mxu0 %v265
    %v473 = vpop.f32.mrf.mxu0
    %v474 = vadd.f32 0.0, %v473
    %475 = vmatmul.f32.gmra.mxu0 %v268
    %v476 = vpop.f32.mrf.mxu0
    %v477 = vadd.f32 0.0, %v476
    %478 = vmatmul.f32.gmra.mxu0 %v271
    %v479 = vpop.f32.mrf.mxu0
    %v480 = vadd.f32 0.0, %v479
    %481 = vdwg.mxu0
    %482 = vmatpush.msra.mxu0 0.0
    %483 = vmatpush.msra.mxu0 0.0
    %484 = vmatpush.msra.mxu0 0.0
    %485 = vmatpush.msra.mxu0 0.0
    %486 = vmatpush.msra.mxu0 0.0
    %487 = vmatpush.msra.mxu0 0.0
    %488 = vmatpush.msra.mxu0 0.0
    %489 = vmatpush.msra.mxu0 0.0
    %490 = vmatpush.msra.mxu0 0.0
    %491 = vmatpush.msra.mxu0 0.0
    %492 = vmatpush.msra.mxu0 0.0
    %493 = vmatpush.msra.mxu0 0.0
    %494 = vmatpush.msra.mxu0 0.0
    %495 = vmatpush.msra.mxu0 0.0
    %496 = vmatpush.msra.mxu0 0.0
    %497 = vmatpush.msra.mxu0 %v77
    %498 = vmatmul.f32.gmra.mxu0 %v82
    %v499 = vpop.f32.mrf.mxu0
    %v500 = vadd.f32 0.0, %v499
    %501 = vmatmul.f32.gmra.mxu0 %v85
    %v502 = vpop.f32.mrf.mxu0
    %v503 = vadd.f32 0.0, %v502
    %504 = vmatmul.f32.gmra.mxu0 %v88
    %v505 = vpop.f32.mrf.mxu0
    %v506 = vadd.f32 0.0, %v505
    %507 = vmatmul.f32.gmra.mxu0 %v91
    %v508 = vpop.f32.mrf.mxu0
    %v509 = vadd.f32 0.0, %v508
    %510 = vmatmul.f32.gmra.mxu0 %v94
    %v511 = vpop.f32.mrf.mxu0
    %v512 = vadd.f32 0.0, %v511
    %513 = vmatmul.f32.gmra.mxu0 %v97
    %v514 = vpop.f32.mrf.mxu0
    %v515 = vadd.f32 0.0, %v514
    %516 = vmatmul.f32.gmra.mxu0 %v100
    %v517 = vpop.f32.mrf.mxu0
    %v518 = vadd.f32 0.0, %v517
    %519 = vmatmul.f32.gmra.mxu0 %v103
    %v520 = vpop.f32.mrf.mxu0
    %v521 = vadd.f32 0.0, %v520
    %522 = vmatmul.f32.gmra.mxu0 %v106
    %v523 = vpop.f32.mrf.mxu0
    %v524 = vadd.f32 0.0, %v523
    %525 = vmatmul.f32.gmra.mxu0 %v109
    %v526 = vpop.f32.mrf.mxu0
    %v527 = vadd.f32 0.0, %v526
    %528 = vmatmul.f32.gmra.mxu0 %v112
    %v529 = vpop.f32.mrf.mxu0
    %v530 = vadd.f32 0.0, %v529
    %531 = vmatmul.f32.gmra.mxu0 %v115
    %v532 = vpop.f32.mrf.mxu0
    %v533 = vadd.f32 0.0, %v532
    %534 = vmatmul.f32.gmra.mxu0 %v118
    %v535 = vpop.f32.mrf.mxu0
    %v536 = vadd.f32 0.0, %v535
    %537 = vmatmul.f32.gmra.mxu0 %v121
    %v538 = vpop.f32.mrf.mxu0
    %v539 = vadd.f32 0.0, %v538
    %540 = vmatmul.f32.gmra.mxu0 %v124
    %v541 = vpop.f32.mrf.mxu0
    %v542 = vadd.f32 0.0, %v541
    %543 = vmatmul.f32.gmra.mxu0 %v127
    %v544 = vpop.f32.mrf.mxu0
    %v545 = vadd.f32 0.0, %v544
    %546 = vmatmul.f32.gmra.mxu0 %v130
    %v547 = vpop.f32.mrf.mxu0
    %v548 = vadd.f32 0.0, %v547
    %549 = vmatmul.f32.gmra.mxu0 %v133
    %v550 = vpop.f32.mrf.mxu0
    %v551 = vadd.f32 0.0, %v550
    %552 = vmatmul.f32.gmra.mxu0 %v136
    %v553 = vpop.f32.mrf.mxu0
    %v554 = vadd.f32 0.0, %v553
    %555 = vmatmul.f32.gmra.mxu0 %v139
    %v556 = vpop.f32.mrf.mxu0
    %v557 = vadd.f32 0.0, %v556
    %558 = vmatmul.f32.gmra.mxu0 %v142
    %v559 = vpop.f32.mrf.mxu0
    %v560 = vadd.f32 0.0, %v559
    %561 = vmatmul.f32.gmra.mxu0 %v145
    %v562 = vpop.f32.mrf.mxu0
    %v563 = vadd.f32 0.0, %v562
    %564 = vmatmul.f32.gmra.mxu0 %v148
    %v565 = vpop.f32.mrf.mxu0
    %v566 = vadd.f32 0.0, %v565
    %567 = vmatmul.f32.gmra.mxu0 %v151
    %v568 = vpop.f32.mrf.mxu0
    %v569 = vadd.f32 0.0, %v568
    %570 = vmatmul.f32.gmra.mxu0 %v154
    %v571 = vpop.f32.mrf.mxu0
    %v572 = vadd.f32 0.0, %v571
    %573 = vmatmul.f32.gmra.mxu0 %v157
    %v574 = vpop.f32.mrf.mxu0
    %v575 = vadd.f32 0.0, %v574
    %576 = vmatmul.f32.gmra.mxu0 %v160
    %v577 = vpop.f32.mrf.mxu0
    %v578 = vadd.f32 0.0, %v577
    %579 = vmatmul.f32.gmra.mxu0 %v163
    %v580 = vpop.f32.mrf.mxu0
    %v581 = vadd.f32 0.0, %v580
    %582 = vmatmul.f32.gmra.mxu0 %v166
    %v583 = vpop.f32.mrf.mxu0
    %v584 = vadd.f32 0.0, %v583
    %585 = vmatmul.f32.gmra.mxu0 %v169
    %v586 = vpop.f32.mrf.mxu0
    %v587 = vadd.f32 0.0, %v586
    %588 = vmatmul.f32.gmra.mxu0 %v172
    %v589 = vpop.f32.mrf.mxu0
    %v590 = vadd.f32 0.0, %v589
    %591 = vmatmul.f32.gmra.mxu0 %v175
    %v592 = vpop.f32.mrf.mxu0
    %v593 = vadd.f32 0.0, %v592
    %594 = vmatmul.f32.gmra.mxu0 %v178
    %v595 = vpop.f32.mrf.mxu0
    %v596 = vadd.f32 0.0, %v595
    %597 = vmatmul.f32.gmra.mxu0 %v181
    %v598 = vpop.f32.mrf.mxu0
    %v599 = vadd.f32 0.0, %v598
    %600 = vmatmul.f32.gmra.mxu0 %v184
    %v601 = vpop.f32.mrf.mxu0
    %v602 = vadd.f32 0.0, %v601
    %603 = vmatmul.f32.gmra.mxu0 %v187
    %v604 = vpop.f32.mrf.mxu0
    %v605 = vadd.f32 0.0, %v604
    %606 = vmatmul.f32.gmra.mxu0 %v190
    %v607 = vpop.f32.mrf.mxu0
    %v608 = vadd.f32 0.0, %v607
    %609 = vmatmul.f32.gmra.mxu0 %v193
    %v610 = vpop.f32.mrf.mxu0
    %v611 = vadd.f32 0.0, %v610
    %612 = vmatmul.f32.gmra.mxu0 %v196
    %v613 = vpop.f32.mrf.mxu0
    %v614 = vadd.f32 0.0, %v613
    %615 = vmatmul.f32.gmra.mxu0 %v199
    %v616 = vpop.f32.mrf.mxu0
    %v617 = vadd.f32 0.0, %v616
    %618 = vmatmul.f32.gmra.mxu0 %v202
    %v619 = vpop.f32.mrf.mxu0
    %v620 = vadd.f32 0.0, %v619
    %621 = vmatmul.f32.gmra.mxu0 %v205
    %v622 = vpop.f32.mrf.mxu0
    %v623 = vadd.f32 0.0, %v622
    %624 = vmatmul.f32.gmra.mxu0 %v208
    %v625 = vpop.f32.mrf.mxu0
    %v626 = vadd.f32 0.0, %v625
    %627 = vmatmul.f32.gmra.mxu0 %v211
    %v628 = vpop.f32.mrf.mxu0
    %v629 = vadd.f32 0.0, %v628
    %630 = vmatmul.f32.gmra.mxu0 %v214
    %v631 = vpop.f32.mrf.mxu0
    %v632 = vadd.f32 0.0, %v631
    %633 = vmatmul.f32.gmra.mxu0 %v217
    %v634 = vpop.f32.mrf.mxu0
    %v635 = vadd.f32 0.0, %v634
    %636 = vmatmul.f32.gmra.mxu0 %v220
    %v637 = vpop.f32.mrf.mxu0
    %v638 = vadd.f32 0.0, %v637
    %639 = vmatmul.f32.gmra.mxu0 %v223
    %v640 = vpop.f32.mrf.mxu0
    %v641 = vadd.f32 0.0, %v640
    %642 = vmatmul.f32.gmra.mxu0 %v226
    %v643 = vpop.f32.mrf.mxu0
    %v644 = vadd.f32 0.0, %v643
    %645 = vmatmul.f32.gmra.mxu0 %v229
    %v646 = vpop.f32.mrf.mxu0
    %v647 = vadd.f32 0.0, %v646
    %648 = vmatmul.f32.gmra.mxu0 %v232
    %v649 = vpop.f32.mrf.mxu0
    %v650 = vadd.f32 0.0, %v649
    %651 = vmatmul.f32.gmra.mxu0 %v235
    %v652 = vpop.f32.mrf.mxu0
    %v653 = vadd.f32 0.0, %v652
    %654 = vmatmul.f32.gmra.mxu0 %v238
    %v655 = vpop.f32.mrf.mxu0
    %v656 = vadd.f32 0.0, %v655
    %657 = vmatmul.f32.gmra.mxu0 %v241
    %v658 = vpop.f32.mrf.mxu0
    %v659 = vadd.f32 0.0, %v658
    %660 = vmatmul.f32.gmra.mxu0 %v244
    %v661 = vpop.f32.mrf.mxu0
    %v662 = vadd.f32 0.0, %v661
    %663 = vmatmul.f32.gmra.mxu0 %v247
    %v664 = vpop.f32.mrf.mxu0
    %v665 = vadd.f32 0.0, %v664
    %666 = vmatmul.f32.gmra.mxu0 %v250
    %v667 = vpop.f32.mrf.mxu0
    %v668 = vadd.f32 0.0, %v667
    %669 = vmatmul.f32.gmra.mxu0 %v253
    %v670 = vpop.f32.mrf.mxu0
    %v671 = vadd.f32 0.0, %v670
    %672 = vmatmul.f32.gmra.mxu0 %v256
    %v673 = vpop.f32.mrf.mxu0
    %v674 = vadd.f32 0.0, %v673
    %675 = vmatmul.f32.gmra.mxu0 %v259
    %v676 = vpop.f32.mrf.mxu0
    %v677 = vadd.f32 0.0, %v676
    %678 = vmatmul.f32.gmra.mxu0 %v262
    %v679 = vpop.f32.mrf.mxu0
    %v680 = vadd.f32 0.0, %v679
    %681 = vmatmul.f32.gmra.mxu0 %v265
    %v682 = vpop.f32.mrf.mxu0
    %v683 = vadd.f32 0.0, %v682
    %684 = vmatmul.f32.gmra.mxu0 %v268
    %v685 = vpop.f32.mrf.mxu0
    %v686 = vadd.f32 0.0, %v685
    %687 = vmatmul.f32.gmra.mxu0 %v271
    %v688 = vpop.f32.mrf.mxu0
    %v689 = vadd.f32 0.0, %v688
    %690 = vdwg.mxu0
    %691 = vmatpush.msra.mxu0 0.0
    %692 = vmatpush.msra.mxu0 0.0
    %693 = vmatpush.msra.mxu0 0.0
    %694 = vmatpush.msra.mxu0 0.0
    %695 = vmatpush.msra.mxu0 0.0
    %696 = vmatpush.msra.mxu0 0.0
    %697 = vmatpush.msra.mxu0 0.0
    %698 = vmatpush.msra.mxu0 0.0
    %699 = vmatpush.msra.mxu0 0.0
    %700 = vmatpush.msra.mxu0 0.0
    %701 = vmatpush.msra.mxu0 0.0
    %702 = vmatpush.msra.mxu0 0.0
    %703 = vmatpush.msra.mxu0 0.0
    %704 = vmatpush.msra.mxu0 0.0
    %705 = vmatpush.msra.mxu0 0.0
    %706 = vmatpush.msra.mxu0 %v78
    %707 = vmatmul.f32.gmra.mxu0 %v82
    %v708 = vpop.f32.mrf.mxu0
    %v709 = vadd.f32 0.0, %v708
    %710 = vmatmul.f32.gmra.mxu0 %v85
    %v711 = vpop.f32.mrf.mxu0
    %v712 = vadd.f32 0.0, %v711
    %713 = vmatmul.f32.gmra.mxu0 %v88
    %v714 = vpop.f32.mrf.mxu0
    %v715 = vadd.f32 0.0, %v714
    %716 = vmatmul.f32.gmra.mxu0 %v91
    %v717 = vpop.f32.mrf.mxu0
    %v718 = vadd.f32 0.0, %v717
    %719 = vmatmul.f32.gmra.mxu0 %v94
    %v720 = vpop.f32.mrf.mxu0
    %v721 = vadd.f32 0.0, %v720
    %722 = vmatmul.f32.gmra.mxu0 %v97
    %v723 = vpop.f32.mrf.mxu0
    %v724 = vadd.f32 0.0, %v723
    %725 = vmatmul.f32.gmra.mxu0 %v100
    %v726 = vpop.f32.mrf.mxu0
    %v727 = vadd.f32 0.0, %v726
    %728 = vmatmul.f32.gmra.mxu0 %v103
    %v729 = vpop.f32.mrf.mxu0
    %v730 = vadd.f32 0.0, %v729
    %731 = vmatmul.f32.gmra.mxu0 %v106
    %v732 = vpop.f32.mrf.mxu0
    %v733 = vadd.f32 0.0, %v732
    %734 = vmatmul.f32.gmra.mxu0 %v109
    %v735 = vpop.f32.mrf.mxu0
    %v736 = vadd.f32 0.0, %v735
    %737 = vmatmul.f32.gmra.mxu0 %v112
    %v738 = vpop.f32.mrf.mxu0
    %v739 = vadd.f32 0.0, %v738
    %740 = vmatmul.f32.gmra.mxu0 %v115
    %v741 = vpop.f32.mrf.mxu0
    %v742 = vadd.f32 0.0, %v741
    %743 = vmatmul.f32.gmra.mxu0 %v118
    %v744 = vpop.f32.mrf.mxu0
    %v745 = vadd.f32 0.0, %v744
    %746 = vmatmul.f32.gmra.mxu0 %v121
    %v747 = vpop.f32.mrf.mxu0
    %v748 = vadd.f32 0.0, %v747
    %749 = vmatmul.f32.gmra.mxu0 %v124
    %v750 = vpop.f32.mrf.mxu0
    %v751 = vadd.f32 0.0, %v750
    %752 = vmatmul.f32.gmra.mxu0 %v127
    %v753 = vpop.f32.mrf.mxu0
    %v754 = vadd.f32 0.0, %v753
    %755 = vmatmul.f32.gmra.mxu0 %v130
    %v756 = vpop.f32.mrf.mxu0
    %v757 = vadd.f32 0.0, %v756
    %758 = vmatmul.f32.gmra.mxu0 %v133
    %v759 = vpop.f32.mrf.mxu0
    %v760 = vadd.f32 0.0, %v759
    %761 = vmatmul.f32.gmra.mxu0 %v136
    %v762 = vpop.f32.mrf.mxu0
    %v763 = vadd.f32 0.0, %v762
    %764 = vmatmul.f32.gmra.mxu0 %v139
    %v765 = vpop.f32.mrf.mxu0
    %v766 = vadd.f32 0.0, %v765
    %767 = vmatmul.f32.gmra.mxu0 %v142
    %v768 = vpop.f32.mrf.mxu0
    %v769 = vadd.f32 0.0, %v768
    %770 = vmatmul.f32.gmra.mxu0 %v145
    %v771 = vpop.f32.mrf.mxu0
    %v772 = vadd.f32 0.0, %v771
    %773 = vmatmul.f32.gmra.mxu0 %v148
    %v774 = vpop.f32.mrf.mxu0
    %v775 = vadd.f32 0.0, %v774
    %776 = vmatmul.f32.gmra.mxu0 %v151
    %v777 = vpop.f32.mrf.mxu0
    %v778 = vadd.f32 0.0, %v777
    %779 = vmatmul.f32.gmra.mxu0 %v154
    %v780 = vpop.f32.mrf.mxu0
    %v781 = vadd.f32 0.0, %v780
    %782 = vmatmul.f32.gmra.mxu0 %v157
    %v783 = vpop.f32.mrf.mxu0
    %v784 = vadd.f32 0.0, %v783
    %785 = vmatmul.f32.gmra.mxu0 %v160
    %v786 = vpop.f32.mrf.mxu0
    %v787 = vadd.f32 0.0, %v786
    %788 = vmatmul.f32.gmra.mxu0 %v163
    %v789 = vpop.f32.mrf.mxu0
    %v790 = vadd.f32 0.0, %v789
    %791 = vmatmul.f32.gmra.mxu0 %v166
    %v792 = vpop.f32.mrf.mxu0
    %v793 = vadd.f32 0.0, %v792
    %794 = vmatmul.f32.gmra.mxu0 %v169
    %v795 = vpop.f32.mrf.mxu0
    %v796 = vadd.f32 0.0, %v795
    %797 = vmatmul.f32.gmra.mxu0 %v172
    %v798 = vpop.f32.mrf.mxu0
    %v799 = vadd.f32 0.0, %v798
    %800 = vmatmul.f32.gmra.mxu0 %v175
    %v801 = vpop.f32.mrf.mxu0
    %v802 = vadd.f32 0.0, %v801
    %803 = vmatmul.f32.gmra.mxu0 %v178
    %v804 = vpop.f32.mrf.mxu0
    %v805 = vadd.f32 0.0, %v804
    %806 = vmatmul.f32.gmra.mxu0 %v181
    %v807 = vpop.f32.mrf.mxu0
    %v808 = vadd.f32 0.0, %v807
    %809 = vmatmul.f32.gmra.mxu0 %v184
    %v810 = vpop.f32.mrf.mxu0
    %v811 = vadd.f32 0.0, %v810
    %812 = vmatmul.f32.gmra.mxu0 %v187
    %v813 = vpop.f32.mrf.mxu0
    %v814 = vadd.f32 0.0, %v813
    %815 = vmatmul.f32.gmra.mxu0 %v190
    %v816 = vpop.f32.mrf.mxu0
    %v817 = vadd.f32 0.0, %v816
    %818 = vmatmul.f32.gmra.mxu0 %v193
    %v819 = vpop.f32.mrf.mxu0
    %v820 = vadd.f32 0.0, %v819
    %821 = vmatmul.f32.gmra.mxu0 %v196
    %v822 = vpop.f32.mrf.mxu0
    %v823 = vadd.f32 0.0, %v822
    %824 = vmatmul.f32.gmra.mxu0 %v199
    %v825 = vpop.f32.mrf.mxu0
    %v826 = vadd.f32 0.0, %v825
    %827 = vmatmul.f32.gmra.mxu0 %v202
    %v828 = vpop.f32.mrf.mxu0
    %v829 = vadd.f32 0.0, %v828
    %830 = vmatmul.f32.gmra.mxu0 %v205
    %v831 = vpop.f32.mrf.mxu0
    %v832 = vadd.f32 0.0, %v831
    %833 = vmatmul.f32.gmra.mxu0 %v208
    %v834 = vpop.f32.mrf.mxu0
    %v835 = vadd.f32 0.0, %v834
    %836 = vmatmul.f32.gmra.mxu0 %v211
    %v837 = vpop.f32.mrf.mxu0
    %v838 = vadd.f32 0.0, %v837
    %839 = vmatmul.f32.gmra.mxu0 %v214
    %v840 = vpop.f32.mrf.mxu0
    %v841 = vadd.f32 0.0, %v840
    %842 = vmatmul.f32.gmra.mxu0 %v217
    %v843 = vpop.f32.mrf.mxu0
    %v844 = vadd.f32 0.0, %v843
    %845 = vmatmul.f32.gmra.mxu0 %v220
    %v846 = vpop.f32.mrf.mxu0
    %v847 = vadd.f32 0.0, %v846
    %848 = vmatmul.f32.gmra.mxu0 %v223
    %v849 = vpop.f32.mrf.mxu0
    %v850 = vadd.f32 0.0, %v849
    %851 = vmatmul.f32.gmra.mxu0 %v226
    %v852 = vpop.f32.mrf.mxu0
    %v853 = vadd.f32 0.0, %v852
    %854 = vmatmul.f32.gmra.mxu0 %v229
    %v855 = vpop.f32.mrf.mxu0
    %v856 = vadd.f32 0.0, %v855
    %857 = vmatmul.f32.gmra.mxu0 %v232
    %v858 = vpop.f32.mrf.mxu0
    %v859 = vadd.f32 0.0, %v858
    %860 = vmatmul.f32.gmra.mxu0 %v235
    %v861 = vpop.f32.mrf.mxu0
    %v862 = vadd.f32 0.0, %v861
    %863 = vmatmul.f32.gmra.mxu0 %v238
    %v864 = vpop.f32.mrf.mxu0
    %v865 = vadd.f32 0.0, %v864
    %866 = vmatmul.f32.gmra.mxu0 %v241
    %v867 = vpop.f32.mrf.mxu0
    %v868 = vadd.f32 0.0, %v867
    %869 = vmatmul.f32.gmra.mxu0 %v244
    %v870 = vpop.f32.mrf.mxu0
    %v871 = vadd.f32 0.0, %v870
    %872 = vmatmul.f32.gmra.mxu0 %v247
    %v873 = vpop.f32.mrf.mxu0
    %v874 = vadd.f32 0.0, %v873
    %875 = vmatmul.f32.gmra.mxu0 %v250
    %v876 = vpop.f32.mrf.mxu0
    %v877 = vadd.f32 0.0, %v876
    %878 = vmatmul.f32.gmra.mxu0 %v253
    %v879 = vpop.f32.mrf.mxu0
    %v880 = vadd.f32 0.0, %v879
    %881 = vmatmul.f32.gmra.mxu0 %v256
    %v882 = vpop.f32.mrf.mxu0
    %v883 = vadd.f32 0.0, %v882
    %884 = vmatmul.f32.gmra.mxu0 %v259
    %v885 = vpop.f32.mrf.mxu0
    %v886 = vadd.f32 0.0, %v885
    %887 = vmatmul.f32.gmra.mxu0 %v262
    %v888 = vpop.f32.mrf.mxu0
    %v889 = vadd.f32 0.0, %v888
    %890 = vmatmul.f32.gmra.mxu0 %v265
    %v891 = vpop.f32.mrf.mxu0
    %v892 = vadd.f32 0.0, %v891
    %893 = vmatmul.f32.gmra.mxu0 %v268
    %v894 = vpop.f32.mrf.mxu0
    %v895 = vadd.f32 0.0, %v894
    %896 = vmatmul.f32.gmra.mxu0 %v271
    %v897 = vpop.f32.mrf.mxu0
    %v898 = vadd.f32 0.0, %v897
    %899 = vdwg.mxu0
    %900 = vmatpush.msra.mxu0 0.0
    %901 = vmatpush.msra.mxu0 0.0
    %902 = vmatpush.msra.mxu0 0.0
    %903 = vmatpush.msra.mxu0 0.0
    %904 = vmatpush.msra.mxu0 0.0
    %905 = vmatpush.msra.mxu0 0.0
    %906 = vmatpush.msra.mxu0 0.0
    %907 = vmatpush.msra.mxu0 0.0
    %908 = vmatpush.msra.mxu0 0.0
    %909 = vmatpush.msra.mxu0 0.0
    %910 = vmatpush.msra.mxu0 0.0
    %911 = vmatpush.msra.mxu0 0.0
    %912 = vmatpush.msra.mxu0 0.0
    %913 = vmatpush.msra.mxu0 0.0
    %914 = vmatpush.msra.mxu0 0.0
    %915 = vmatpush.msra.mxu0 %v79
    %916 = vmatmul.f32.gmra.mxu0 %v82
    %v917 = vpop.f32.mrf.mxu0
    %v918 = vadd.f32 0.0, %v917
    %919 = vmatmul.f32.gmra.mxu0 %v85
    %v920 = vpop.f32.mrf.mxu0
    %v921 = vadd.f32 0.0, %v920
    %922 = vmatmul.f32.gmra.mxu0 %v88
    %v923 = vpop.f32.mrf.mxu0
    %v924 = vadd.f32 0.0, %v923
    %925 = vmatmul.f32.gmra.mxu0 %v91
    %v926 = vpop.f32.mrf.mxu0
    %v927 = vadd.f32 0.0, %v926
    %928 = vmatmul.f32.gmra.mxu0 %v94
    %v929 = vpop.f32.mrf.mxu0
    %v930 = vadd.f32 0.0, %v929
    %931 = vmatmul.f32.gmra.mxu0 %v97
    %v932 = vpop.f32.mrf.mxu0
    %v933 = vadd.f32 0.0, %v932
    %934 = vmatmul.f32.gmra.mxu0 %v100
    %v935 = vpop.f32.mrf.mxu0
    %v936 = vadd.f32 0.0, %v935
    %937 = vmatmul.f32.gmra.mxu0 %v103
    %v938 = vpop.f32.mrf.mxu0
    %v939 = vadd.f32 0.0, %v938
    %940 = vmatmul.f32.gmra.mxu0 %v106
    %v941 = vpop.f32.mrf.mxu0
    %v942 = vadd.f32 0.0, %v941
    %943 = vmatmul.f32.gmra.mxu0 %v109
    %v944 = vpop.f32.mrf.mxu0
    %v945 = vadd.f32 0.0, %v944
    %946 = vmatmul.f32.gmra.mxu0 %v112
    %v947 = vpop.f32.mrf.mxu0
    %v948 = vadd.f32 0.0, %v947
    %949 = vmatmul.f32.gmra.mxu0 %v115
    %v950 = vpop.f32.mrf.mxu0
    %v951 = vadd.f32 0.0, %v950
    %952 = vmatmul.f32.gmra.mxu0 %v118
    %v953 = vpop.f32.mrf.mxu0
    %v954 = vadd.f32 0.0, %v953
    %955 = vmatmul.f32.gmra.mxu0 %v121
    %v956 = vpop.f32.mrf.mxu0
    %v957 = vadd.f32 0.0, %v956
    %958 = vmatmul.f32.gmra.mxu0 %v124
    %v959 = vpop.f32.mrf.mxu0
    %v960 = vadd.f32 0.0, %v959
    %961 = vmatmul.f32.gmra.mxu0 %v127
    %v962 = vpop.f32.mrf.mxu0
    %v963 = vadd.f32 0.0, %v962
    %964 = vmatmul.f32.gmra.mxu0 %v130
    %v965 = vpop.f32.mrf.mxu0
    %v966 = vadd.f32 0.0, %v965
    %967 = vmatmul.f32.gmra.mxu0 %v133
    %v968 = vpop.f32.mrf.mxu0
    %v969 = vadd.f32 0.0, %v968
    %970 = vmatmul.f32.gmra.mxu0 %v136
    %v971 = vpop.f32.mrf.mxu0
    %v972 = vadd.f32 0.0, %v971
    %973 = vmatmul.f32.gmra.mxu0 %v139
    %v974 = vpop.f32.mrf.mxu0
    %v975 = vadd.f32 0.0, %v974
    %976 = vmatmul.f32.gmra.mxu0 %v142
    %v977 = vpop.f32.mrf.mxu0
    %v978 = vadd.f32 0.0, %v977
    %979 = vmatmul.f32.gmra.mxu0 %v145
    %v980 = vpop.f32.mrf.mxu0
    %v981 = vadd.f32 0.0, %v980
    %982 = vmatmul.f32.gmra.mxu0 %v148
    %v983 = vpop.f32.mrf.mxu0
    %v984 = vadd.f32 0.0, %v983
    %985 = vmatmul.f32.gmra.mxu0 %v151
    %v986 = vpop.f32.mrf.mxu0
    %v987 = vadd.f32 0.0, %v986
    %988 = vmatmul.f32.gmra.mxu0 %v154
    %v989 = vpop.f32.mrf.mxu0
    %v990 = vadd.f32 0.0, %v989
    %991 = vmatmul.f32.gmra.mxu0 %v157
    %v992 = vpop.f32.mrf.mxu0
    %v993 = vadd.f32 0.0, %v992
    %994 = vmatmul.f32.gmra.mxu0 %v160
    %v995 = vpop.f32.mrf.mxu0
    %v996 = vadd.f32 0.0, %v995
    %997 = vmatmul.f32.gmra.mxu0 %v163
    %v998 = vpop.f32.mrf.mxu0
    %v999 = vadd.f32 0.0, %v998
    %1000 = vmatmul.f32.gmra.mxu0 %v166
    %v1001 = vpop.f32.mrf.mxu0
    %v1002 = vadd.f32 0.0, %v1001
    %1003 = vmatmul.f32.gmra.mxu0 %v169
    %v1004 = vpop.f32.mrf.mxu0
    %v1005 = vadd.f32 0.0, %v1004
    %1006 = vmatmul.f32.gmra.mxu0 %v172
    %v1007 = vpop.f32.mrf.mxu0
    %v1008 = vadd.f32 0.0, %v1007
    %1009 = vmatmul.f32.gmra.mxu0 %v175
    %v1010 = vpop.f32.mrf.mxu0
    %v1011 = vadd.f32 0.0, %v1010
    %1012 = vmatmul.f32.gmra.mxu0 %v178
    %v1013 = vpop.f32.mrf.mxu0
    %v1014 = vadd.f32 0.0, %v1013
    %1015 = vmatmul.f32.gmra.mxu0 %v181
    %v1016 = vpop.f32.mrf.mxu0
    %v1017 = vadd.f32 0.0, %v1016
    %1018 = vmatmul.f32.gmra.mxu0 %v184
    %v1019 = vpop.f32.mrf.mxu0
    %v1020 = vadd.f32 0.0, %v1019
    %1021 = vmatmul.f32.gmra.mxu0 %v187
    %v1022 = vpop.f32.mrf.mxu0
    %v1023 = vadd.f32 0.0, %v1022
    %1024 = vmatmul.f32.gmra.mxu0 %v190
    %v1025 = vpop.f32.mrf.mxu0
    %v1026 = vadd.f32 0.0, %v1025
    %1027 = vmatmul.f32.gmra.mxu0 %v193
    %v1028 = vpop.f32.mrf.mxu0
    %v1029 = vadd.f32 0.0, %v1028
    %1030 = vmatmul.f32.gmra.mxu0 %v196
    %v1031 = vpop.f32.mrf.mxu0
    %v1032 = vadd.f32 0.0, %v1031
    %1033 = vmatmul.f32.gmra.mxu0 %v199
    %v1034 = vpop.f32.mrf.mxu0
    %v1035 = vadd.f32 0.0, %v1034
    %1036 = vmatmul.f32.gmra.mxu0 %v202
    %v1037 = vpop.f32.mrf.mxu0
    %v1038 = vadd.f32 0.0, %v1037
    %1039 = vmatmul.f32.gmra.mxu0 %v205
    %v1040 = vpop.f32.mrf.mxu0
    %v1041 = vadd.f32 0.0, %v1040
    %1042 = vmatmul.f32.gmra.mxu0 %v208
    %v1043 = vpop.f32.mrf.mxu0
    %v1044 = vadd.f32 0.0, %v1043
    %1045 = vmatmul.f32.gmra.mxu0 %v211
    %v1046 = vpop.f32.mrf.mxu0
    %v1047 = vadd.f32 0.0, %v1046
    %1048 = vmatmul.f32.gmra.mxu0 %v214
    %v1049 = vpop.f32.mrf.mxu0
    %v1050 = vadd.f32 0.0, %v1049
    %1051 = vmatmul.f32.gmra.mxu0 %v217
    %v1052 = vpop.f32.mrf.mxu0
    %v1053 = vadd.f32 0.0, %v1052
    %1054 = vmatmul.f32.gmra.mxu0 %v220
    %v1055 = vpop.f32.mrf.mxu0
    %v1056 = vadd.f32 0.0, %v1055
    %1057 = vmatmul.f32.gmra.mxu0 %v223
    %v1058 = vpop.f32.mrf.mxu0
    %v1059 = vadd.f32 0.0, %v1058
    %1060 = vmatmul.f32.gmra.mxu0 %v226
    %v1061 = vpop.f32.mrf.mxu0
    %v1062 = vadd.f32 0.0, %v1061
    %1063 = vmatmul.f32.gmra.mxu0 %v229
    %v1064 = vpop.f32.mrf.mxu0
    %v1065 = vadd.f32 0.0, %v1064
    %1066 = vmatmul.f32.gmra.mxu0 %v232
    %v1067 = vpop.f32.mrf.mxu0
    %v1068 = vadd.f32 0.0, %v1067
    %1069 = vmatmul.f32.gmra.mxu0 %v235
    %v1070 = vpop.f32.mrf.mxu0
    %v1071 = vadd.f32 0.0, %v1070
    %1072 = vmatmul.f32.gmra.mxu0 %v238
    %v1073 = vpop.f32.mrf.mxu0
    %v1074 = vadd.f32 0.0, %v1073
    %1075 = vmatmul.f32.gmra.mxu0 %v241
    %v1076 = vpop.f32.mrf.mxu0
    %v1077 = vadd.f32 0.0, %v1076
    %1078 = vmatmul.f32.gmra.mxu0 %v244
    %v1079 = vpop.f32.mrf.mxu0
    %v1080 = vadd.f32 0.0, %v1079
    %1081 = vmatmul.f32.gmra.mxu0 %v247
    %v1082 = vpop.f32.mrf.mxu0
    %v1083 = vadd.f32 0.0, %v1082
    %1084 = vmatmul.f32.gmra.mxu0 %v250
    %v1085 = vpop.f32.mrf.mxu0
    %v1086 = vadd.f32 0.0, %v1085
    %1087 = vmatmul.f32.gmra.mxu0 %v253
    %v1088 = vpop.f32.mrf.mxu0
    %v1089 = vadd.f32 0.0, %v1088
    %1090 = vmatmul.f32.gmra.mxu0 %v256
    %v1091 = vpop.f32.mrf.mxu0
    %v1092 = vadd.f32 0.0, %v1091
    %1093 = vmatmul.f32.gmra.mxu0 %v259
    %v1094 = vpop.f32.mrf.mxu0
    %v1095 = vadd.f32 0.0, %v1094
    %1096 = vmatmul.f32.gmra.mxu0 %v262
    %v1097 = vpop.f32.mrf.mxu0
    %v1098 = vadd.f32 0.0, %v1097
    %1099 = vmatmul.f32.gmra.mxu0 %v265
    %v1100 = vpop.f32.mrf.mxu0
    %v1101 = vadd.f32 0.0, %v1100
    %1102 = vmatmul.f32.gmra.mxu0 %v268
    %v1103 = vpop.f32.mrf.mxu0
    %v1104 = vadd.f32 0.0, %v1103
    %1105 = vmatmul.f32.gmra.mxu0 %v271
    %v1106 = vpop.f32.mrf.mxu0
    %v1107 = vadd.f32 0.0, %v1106
    %1108 = vdwg.mxu0
    %v1109 = vmul.f32 %v12, %v12
    %v1110 = vmul.f32 %v13, %v13
    %v1111 = vmul.f32 %v14, %v14
    %v1112 = vmul.f32 %v15, %v15
    %v1113 = vmul.f32 %v16, %v16
    %v1114 = vmul.f32 %v17, %v17
    %v1115 = vmul.f32 %v18, %v18
    %v1116 = vmul.f32 %v19, %v19
    %v1117 = vmul.f32 %v20, %v20
    %v1118 = vmul.f32 %v21, %v21
    %v1119 = vmul.f32 %v22, %v22
    %v1120 = vmul.f32 %v23, %v23
    %v1121 = vmul.f32 %v24, %v24
    %v1122 = vmul.f32 %v25, %v25
    %v1123 = vmul.f32 %v26, %v26
    %v1124 = vmul.f32 %v27, %v27
    %v1125 = vmul.f32 %v28, %v28
    %v1126 = vmul.f32 %v29, %v29
    %v1127 = vmul.f32 %v30, %v30
    %v1128 = vmul.f32 %v31, %v31
    %v1129 = vmul.f32 %v32, %v32
    %v1130 = vmul.f32 %v33, %v33
    %v1131 = vmul.f32 %v34, %v34
    %v1132 = vmul.f32 %v35, %v35
    %v1133 = vmul.f32 %v36, %v36
    %v1134 = vmul.f32 %v37, %v37
    %v1135 = vmul.f32 %v38, %v38
    %v1136 = vmul.f32 %v39, %v39
    %v1137 = vmul.f32 %v40, %v40
    %v1138 = vmul.f32 %v41, %v41
    %v1139 = vmul.f32 %v42, %v42
    %v1140 = vmul.f32 %v43, %v43
    %v1141 = vmul.f32 %v44, %v44
    %v1142 = vmul.f32 %v45, %v45
    %v1143 = vmul.f32 %v46, %v46
    %v1144 = vmul.f32 %v47, %v47
    %v1145 = vmul.f32 %v48, %v48
    %v1146 = vmul.f32 %v49, %v49
    %v1147 = vmul.f32 %v50, %v50
    %v1148 = vmul.f32 %v51, %v51
    %v1149 = vmul.f32 %v52, %v52
    %v1150 = vmul.f32 %v53, %v53
    %v1151 = vmul.f32 %v54, %v54
    %v1152 = vmul.f32 %v55, %v55
    %v1153 = vmul.f32 %v56, %v56
    %v1154 = vmul.f32 %v57, %v57
    %v1155 = vmul.f32 %v58, %v58
    %v1156 = vmul.f32 %v59, %v59
    %v1157 = vmul.f32 %v60, %v60
    %v1158 = vmul.f32 %v61, %v61
    %v1159 = vmul.f32 %v62, %v62
    %v1160 = vmul.f32 %v63, %v63
    %v1161 = vmul.f32 %v64, %v64
    %v1162 = vmul.f32 %v65, %v65
    %v1163 = vmul.f32 %v66, %v66
    %v1164 = vmul.f32 %v67, %v67
    %v1165 = vmul.f32 %v68, %v68
    %v1166 = vmul.f32 %v69, %v69
    %v1167 = vmul.f32 %v70, %v70
    %v1168 = vmul.f32 %v71, %v71
    %v1169 = vmul.f32 %v72, %v72
    %v1170 = vmul.f32 %v73, %v73
    %v1171 = vmul.f32 %v74, %v74
    %v1172 = vmul.f32 %v75, %v75
    %1237 = vrot.lane.b32.xlu0 %v1109, 127
    %v1238 = vpop.permute.xlu0 %1237
    %1239 = vrot.lane.b32.xlu0 %v1110, 127
    %v1240 = vpop.permute.xlu0 %1239
    %1241 = vrot.lane.b32.xlu0 %v1111, 127
    %v1242 = vpop.permute.xlu0 %1241
    %1243 = vrot.lane.b32.xlu0 %v1112, 127
    %v1244 = vpop.permute.xlu0 %1243
    %1245 = vrot.lane.b32.xlu0 %v1113, 127
    %v1246 = vpop.permute.xlu0 %1245
    %1247 = vrot.lane.b32.xlu0 %v1114, 127
    %v1248 = vpop.permute.xlu0 %1247
    %1249 = vrot.lane.b32.xlu0 %v1115, 127
    %v1250 = vpop.permute.xlu0 %1249
    %1251 = vrot.lane.b32.xlu0 %v1116, 127
    %v1252 = vpop.permute.xlu0 %1251
    %1253 = vrot.lane.b32.xlu0 %v1117, 127
    %v1254 = vpop.permute.xlu0 %1253
    %1255 = vrot.lane.b32.xlu0 %v1118, 127
    %v1256 = vpop.permute.xlu0 %1255
    %1257 = vrot.lane.b32.xlu0 %v1119, 127
    %v1258 = vpop.permute.xlu0 %1257
    %1259 = vrot.lane.b32.xlu0 %v1120, 127
    %v1260 = vpop.permute.xlu0 %1259
    %1261 = vrot.lane.b32.xlu0 %v1121, 127
    %v1262 = vpop.permute.xlu0 %1261
    %1263 = vrot.lane.b32.xlu0 %v1122, 127
    %v1264 = vpop.permute.xlu0 %1263
    %1265 = vrot.lane.b32.xlu0 %v1123, 127
    %v1266 = vpop.permute.xlu0 %1265
    %1267 = vrot.lane.b32.xlu0 %v1124, 127
    %v1268 = vpop.permute.xlu0 %1267
    %1269 = vrot.lane.b32.xlu0 %v1125, 127
    %v1270 = vpop.permute.xlu0 %1269
    %1271 = vrot.lane.b32.xlu0 %v1126, 127
    %v1272 = vpop.permute.xlu0 %1271
    %1273 = vrot.lane.b32.xlu0 %v1127, 127
    %v1274 = vpop.permute.xlu0 %1273
    %1275 = vrot.lane.b32.xlu0 %v1128, 127
    %v1276 = vpop.permute.xlu0 %1275
    %1277 = vrot.lane.b32.xlu0 %v1129, 127
    %v1278 = vpop.permute.xlu0 %1277
    %1279 = vrot.lane.b32.xlu0 %v1130, 127
    %v1280 = vpop.permute.xlu0 %1279
    %1281 = vrot.lane.b32.xlu0 %v1131, 127
    %v1282 = vpop.permute.xlu0 %1281
    %1283 = vrot.lane.b32.xlu0 %v1132, 127
    %v1284 = vpop.permute.xlu0 %1283
    %1285 = vrot.lane.b32.xlu0 %v1133, 127
    %v1286 = vpop.permute.xlu0 %1285
    %1287 = vrot.lane.b32.xlu0 %v1134, 127
    %v1288 = vpop.permute.xlu0 %1287
    %1289 = vrot.lane.b32.xlu0 %v1135, 127
    %v1290 = vpop.permute.xlu0 %1289
    %1291 = vrot.lane.b32.xlu0 %v1136, 127
    %v1292 = vpop.permute.xlu0 %1291
    %1293 = vrot.lane.b32.xlu0 %v1137, 127
    %v1294 = vpop.permute.xlu0 %1293
    %1295 = vrot.lane.b32.xlu0 %v1138, 127
    %v1296 = vpop.permute.xlu0 %1295
    %1297 = vrot.lane.b32.xlu0 %v1139, 127
    %v1298 = vpop.permute.xlu0 %1297
    %1299 = vrot.lane.b32.xlu0 %v1140, 127
    %v1300 = vpop.permute.xlu0 %1299
    %1301 = vrot.lane.b32.xlu0 %v1141, 127
    %v1302 = vpop.permute.xlu0 %1301
    %1303 = vrot.lane.b32.xlu0 %v1142, 127
    %v1304 = vpop.permute.xlu0 %1303
    %1305 = vrot.lane.b32.xlu0 %v1143, 127
    %v1306 = vpop.permute.xlu0 %1305
    %1307 = vrot.lane.b32.xlu0 %v1144, 127
    %v1308 = vpop.permute.xlu0 %1307
    %1309 = vrot.lane.b32.xlu0 %v1145, 127
    %v1310 = vpop.permute.xlu0 %1309
    %1311 = vrot.lane.b32.xlu0 %v1146, 127
    %v1312 = vpop.permute.xlu0 %1311
    %1313 = vrot.lane.b32.xlu0 %v1147, 127
    %v1314 = vpop.permute.xlu0 %1313
    %1315 = vrot.lane.b32.xlu0 %v1148, 127
    %v1316 = vpop.permute.xlu0 %1315
    %1317 = vrot.lane.b32.xlu0 %v1149, 127
    %v1318 = vpop.permute.xlu0 %1317
    %1319 = vrot.lane.b32.xlu0 %v1150, 127
    %v1320 = vpop.permute.xlu0 %1319
    %1321 = vrot.lane.b32.xlu0 %v1151, 127
    %v1322 = vpop.permute.xlu0 %1321
    %1323 = vrot.lane.b32.xlu0 %v1152, 127
    %v1324 = vpop.permute.xlu0 %1323
    %1325 = vrot.lane.b32.xlu0 %v1153, 127
    %v1326 = vpop.permute.xlu0 %1325
    %1327 = vrot.lane.b32.xlu0 %v1154, 127
    %v1328 = vpop.permute.xlu0 %1327
    %1329 = vrot.lane.b32.xlu0 %v1155, 127
    %v1330 = vpop.permute.xlu0 %1329
    %1331 = vrot.lane.b32.xlu0 %v1156, 127
    %v1332 = vpop.permute.xlu0 %1331
    %1333 = vrot.lane.b32.xlu0 %v1157, 127
    %v1334 = vpop.permute.xlu0 %1333
    %1335 = vrot.lane.b32.xlu0 %v1158, 127
    %v1336 = vpop.permute.xlu0 %1335
    %1337 = vrot.lane.b32.xlu0 %v1159, 127
    %v1338 = vpop.permute.xlu0 %1337
    %1339 = vrot.lane.b32.xlu0 %v1160, 127
    %v1340 = vpop.permute.xlu0 %1339
    %1341 = vrot.lane.b32.xlu0 %v1161, 127
    %v1342 = vpop.permute.xlu0 %1341
    %1343 = vrot.lane.b32.xlu0 %v1162, 127
    %v1344 = vpop.permute.xlu0 %1343
    %1345 = vrot.lane.b32.xlu0 %v1163, 127
    %v1346 = vpop.permute.xlu0 %1345
    %1347 = vrot.lane.b32.xlu0 %v1164, 127
    %v1348 = vpop.permute.xlu0 %1347
    %1349 = vrot.lane.b32.xlu0 %v1165, 127
    %v1350 = vpop.permute.xlu0 %1349
    %1351 = vrot.lane.b32.xlu0 %v1166, 127
    %v1352 = vpop.permute.xlu0 %1351
    %1353 = vrot.lane.b32.xlu0 %v1167, 127
    %v1354 = vpop.permute.xlu0 %1353
    %1355 = vrot.lane.b32.xlu0 %v1168, 127
    %v1356 = vpop.permute.xlu0 %1355
    %1357 = vrot.lane.b32.xlu0 %v1169, 127
    %v1358 = vpop.permute.xlu0 %1357
    %1359 = vrot.lane.b32.xlu0 %v1170, 127
    %v1360 = vpop.permute.xlu0 %1359
    %1361 = vrot.lane.b32.xlu0 %v1171, 127
    %v1362 = vpop.permute.xlu0 %1361
    %1363 = vrot.lane.b32.xlu0 %v1172, 127
    %v1364 = vpop.permute.xlu0 %1363
    %v1429 = vadd.f32 %v1109, %v1238
    %v1430 = vadd.f32 %v1110, %v1240
    %v1431 = vadd.f32 %v1111, %v1242
    %v1432 = vadd.f32 %v1112, %v1244
    %v1433 = vadd.f32 %v1113, %v1246
    %v1434 = vadd.f32 %v1114, %v1248
    %v1435 = vadd.f32 %v1115, %v1250
    %v1436 = vadd.f32 %v1116, %v1252
    %v1437 = vadd.f32 %v1117, %v1254
    %v1438 = vadd.f32 %v1118, %v1256
    %v1439 = vadd.f32 %v1119, %v1258
    %v1440 = vadd.f32 %v1120, %v1260
    %v1441 = vadd.f32 %v1121, %v1262
    %v1442 = vadd.f32 %v1122, %v1264
    %v1443 = vadd.f32 %v1123, %v1266
    %v1444 = vadd.f32 %v1124, %v1268
    %v1445 = vadd.f32 %v1125, %v1270
    %v1446 = vadd.f32 %v1126, %v1272
    %v1447 = vadd.f32 %v1127, %v1274
    %v1448 = vadd.f32 %v1128, %v1276
    %v1449 = vadd.f32 %v1129, %v1278
    %v1450 = vadd.f32 %v1130, %v1280
    %v1451 = vadd.f32 %v1131, %v1282
    %v1452 = vadd.f32 %v1132, %v1284
    %v1453 = vadd.f32 %v1133, %v1286
    %v1454 = vadd.f32 %v1134, %v1288
    %v1455 = vadd.f32 %v1135, %v1290
    %v1456 = vadd.f32 %v1136, %v1292
    %v1457 = vadd.f32 %v1137, %v1294
    %v1458 = vadd.f32 %v1138, %v1296
    %v1459 = vadd.f32 %v1139, %v1298
    %v1460 = vadd.f32 %v1140, %v1300
    %v1461 = vadd.f32 %v1141, %v1302
    %v1462 = vadd.f32 %v1142, %v1304
    %v1463 = vadd.f32 %v1143, %v1306
    %v1464 = vadd.f32 %v1144, %v1308
    %v1465 = vadd.f32 %v1145, %v1310
    %v1466 = vadd.f32 %v1146, %v1312
    %v1467 = vadd.f32 %v1147, %v1314
    %v1468 = vadd.f32 %v1148, %v1316
    %v1469 = vadd.f32 %v1149, %v1318
    %v1470 = vadd.f32 %v1150, %v1320
    %v1471 = vadd.f32 %v1151, %v1322
    %v1472 = vadd.f32 %v1152, %v1324
    %v1473 = vadd.f32 %v1153, %v1326
    %v1474 = vadd.f32 %v1154, %v1328
    %v1475 = vadd.f32 %v1155, %v1330
    %v1476 = vadd.f32 %v1156, %v1332
    %v1477 = vadd.f32 %v1157, %v1334
    %v1478 = vadd.f32 %v1158, %v1336
    %v1479 = vadd.f32 %v1159, %v1338
    %v1480 = vadd.f32 %v1160, %v1340
    %v1481 = vadd.f32 %v1161, %v1342
    %v1482 = vadd.f32 %v1162, %v1344
    %v1483 = vadd.f32 %v1163, %v1346
    %v1484 = vadd.f32 %v1164, %v1348
    %v1485 = vadd.f32 %v1165, %v1350
    %v1486 = vadd.f32 %v1166, %v1352
    %v1487 = vadd.f32 %v1167, %v1354
    %v1488 = vadd.f32 %v1168, %v1356
    %v1489 = vadd.f32 %v1169, %v1358
    %v1490 = vadd.f32 %v1170, %v1360
    %v1491 = vadd.f32 %v1171, %v1362
    %v1492 = vadd.f32 %v1172, %v1364
    %1493 = vrot.lane.b32.xlu0 %v1109, 126
    %v1494 = vpop.permute.xlu0 %1493
    %1495 = vrot.lane.b32.xlu0 %v1110, 126
    %v1496 = vpop.permute.xlu0 %1495
    %1497 = vrot.lane.b32.xlu0 %v1111, 126
    %v1498 = vpop.permute.xlu0 %1497
    %1499 = vrot.lane.b32.xlu0 %v1112, 126
    %v1500 = vpop.permute.xlu0 %1499
    %1501 = vrot.lane.b32.xlu0 %v1113, 126
    %v1502 = vpop.permute.xlu0 %1501
    %1503 = vrot.lane.b32.xlu0 %v1114, 126
    %v1504 = vpop.permute.xlu0 %1503
    %1505 = vrot.lane.b32.xlu0 %v1115, 126
    %v1506 = vpop.permute.xlu0 %1505
    %1507 = vrot.lane.b32.xlu0 %v1116, 126
    %v1508 = vpop.permute.xlu0 %1507
    %1509 = vrot.lane.b32.xlu0 %v1117, 126
    %v1510 = vpop.permute.xlu0 %1509
    %1511 = vrot.lane.b32.xlu0 %v1118, 126
    %v1512 = vpop.permute.xlu0 %1511
    %1513 = vrot.lane.b32.xlu0 %v1119, 126
    %v1514 = vpop.permute.xlu0 %1513
    %1515 = vrot.lane.b32.xlu0 %v1120, 126
    %v1516 = vpop.permute.xlu0 %1515
    %1517 = vrot.lane.b32.xlu0 %v1121, 126
    %v1518 = vpop.permute.xlu0 %1517
    %1519 = vrot.lane.b32.xlu0 %v1122, 126
    %v1520 = vpop.permute.xlu0 %1519
    %1521 = vrot.lane.b32.xlu0 %v1123, 126
    %v1522 = vpop.permute.xlu0 %1521
    %1523 = vrot.lane.b32.xlu0 %v1124, 126
    %v1524 = vpop.permute.xlu0 %1523
    %1525 = vrot.lane.b32.xlu0 %v1125, 126
    %v1526 = vpop.permute.xlu0 %1525
    %1527 = vrot.lane.b32.xlu0 %v1126, 126
    %v1528 = vpop.permute.xlu0 %1527
    %1529 = vrot.lane.b32.xlu0 %v1127, 126
    %v1530 = vpop.permute.xlu0 %1529
    %1531 = vrot.lane.b32.xlu0 %v1128, 126
    %v1532 = vpop.permute.xlu0 %1531
    %1533 = vrot.lane.b32.xlu0 %v1129, 126
    %v1534 = vpop.permute.xlu0 %1533
    %1535 = vrot.lane.b32.xlu0 %v1130, 126
    %v1536 = vpop.permute.xlu0 %1535
    %1537 = vrot.lane.b32.xlu0 %v1131, 126
    %v1538 = vpop.permute.xlu0 %1537
    %1539 = vrot.lane.b32.xlu0 %v1132, 126
    %v1540 = vpop.permute.xlu0 %1539
    %1541 = vrot.lane.b32.xlu0 %v1133, 126
    %v1542 = vpop.permute.xlu0 %1541
    %1543 = vrot.lane.b32.xlu0 %v1134, 126
    %v1544 = vpop.permute.xlu0 %1543
    %1545 = vrot.lane.b32.xlu0 %v1135, 126
    %v1546 = vpop.permute.xlu0 %1545
    %1547 = vrot.lane.b32.xlu0 %v1136, 126
    %v1548 = vpop.permute.xlu0 %1547
    %1549 = vrot.lane.b32.xlu0 %v1137, 126
    %v1550 = vpop.permute.xlu0 %1549
    %1551 = vrot.lane.b32.xlu0 %v1138, 126
    %v1552 = vpop.permute.xlu0 %1551
    %1553 = vrot.lane.b32.xlu0 %v1139, 126
    %v1554 = vpop.permute.xlu0 %1553
    %1555 = vrot.lane.b32.xlu0 %v1140, 126
    %v1556 = vpop.permute.xlu0 %1555
    %1557 = vrot.lane.b32.xlu0 %v1141, 126
    %v1558 = vpop.permute.xlu0 %1557
    %1559 = vrot.lane.b32.xlu0 %v1142, 126
    %v1560 = vpop.permute.xlu0 %1559
    %1561 = vrot.lane.b32.xlu0 %v1143, 126
    %v1562 = vpop.permute.xlu0 %1561
    %1563 = vrot.lane.b32.xlu0 %v1144, 126
    %v1564 = vpop.permute.xlu0 %1563
    %1565 = vrot.lane.b32.xlu0 %v1145, 126
    %v1566 = vpop.permute.xlu0 %1565
    %1567 = vrot.lane.b32.xlu0 %v1146, 126
    %v1568 = vpop.permute.xlu0 %1567
    %1569 = vrot.lane.b32.xlu0 %v1147, 126
    %v1570 = vpop.permute.xlu0 %1569
    %1571 = vrot.lane.b32.xlu0 %v1148, 126
    %v1572 = vpop.permute.xlu0 %1571
    %1573 = vrot.lane.b32.xlu0 %v1149, 126
    %v1574 = vpop.permute.xlu0 %1573
    %1575 = vrot.lane.b32.xlu0 %v1150, 126
    %v1576 = vpop.permute.xlu0 %1575
    %1577 = vrot.lane.b32.xlu0 %v1151, 126
    %v1578 = vpop.permute.xlu0 %1577
    %1579 = vrot.lane.b32.xlu0 %v1152, 126
    %v1580 = vpop.permute.xlu0 %1579
    %1581 = vrot.lane.b32.xlu0 %v1153, 126
    %v1582 = vpop.permute.xlu0 %1581
    %1583 = vrot.lane.b32.xlu0 %v1154, 126
    %v1584 = vpop.permute.xlu0 %1583
    %1585 = vrot.lane.b32.xlu0 %v1155, 126
    %v1586 = vpop.permute.xlu0 %1585
    %1587 = vrot.lane.b32.xlu0 %v1156, 126
    %v1588 = vpop.permute.xlu0 %1587
    %1589 = vrot.lane.b32.xlu0 %v1157, 126
    %v1590 = vpop.permute.xlu0 %1589
    %1591 = vrot.lane.b32.xlu0 %v1158, 126
    %v1592 = vpop.permute.xlu0 %1591
    %1593 = vrot.lane.b32.xlu0 %v1159, 126
    %v1594 = vpop.permute.xlu0 %1593
    %1595 = vrot.lane.b32.xlu0 %v1160, 126
    %v1596 = vpop.permute.xlu0 %1595
    %1597 = vrot.lane.b32.xlu0 %v1161, 126
    %v1598 = vpop.permute.xlu0 %1597
    %1599 = vrot.lane.b32.xlu0 %v1162, 126
    %v1600 = vpop.permute.xlu0 %1599
    %1601 = vrot.lane.b32.xlu0 %v1163, 126
    %v1602 = vpop.permute.xlu0 %1601
    %1603 = vrot.lane.b32.xlu0 %v1164, 126
    %v1604 = vpop.permute.xlu0 %1603
    %1605 = vrot.lane.b32.xlu0 %v1165, 126
    %v1606 = vpop.permute.xlu0 %1605
    %1607 = vrot.lane.b32.xlu0 %v1166, 126
    %v1608 = vpop.permute.xlu0 %1607
    %1609 = vrot.lane.b32.xlu0 %v1167, 126
    %v1610 = vpop.permute.xlu0 %1609
    %1611 = vrot.lane.b32.xlu0 %v1168, 126
    %v1612 = vpop.permute.xlu0 %1611
    %1613 = vrot.lane.b32.xlu0 %v1169, 126
    %v1614 = vpop.permute.xlu0 %1613
    %1615 = vrot.lane.b32.xlu0 %v1170, 126
    %v1616 = vpop.permute.xlu0 %1615
    %1617 = vrot.lane.b32.xlu0 %v1171, 126
    %v1618 = vpop.permute.xlu0 %1617
    %1619 = vrot.lane.b32.xlu0 %v1172, 126
    %v1620 = vpop.permute.xlu0 %1619
    %v1685 = vadd.f32 %v1429, %v1494
    %v1686 = vadd.f32 %v1430, %v1496
    %v1687 = vadd.f32 %v1431, %v1498
    %v1688 = vadd.f32 %v1432, %v1500
    %v1689 = vadd.f32 %v1433, %v1502
    %v1690 = vadd.f32 %v1434, %v1504
    %v1691 = vadd.f32 %v1435, %v1506
    %v1692 = vadd.f32 %v1436, %v1508
    %v1693 = vadd.f32 %v1437, %v1510
    %v1694 = vadd.f32 %v1438, %v1512
    %v1695 = vadd.f32 %v1439, %v1514
    %v1696 = vadd.f32 %v1440, %v1516
    %v1697 = vadd.f32 %v1441, %v1518
    %v1698 = vadd.f32 %v1442, %v1520
    %v1699 = vadd.f32 %v1443, %v1522
    %v1700 = vadd.f32 %v1444, %v1524
    %v1701 = vadd.f32 %v1445, %v1526
    %v1702 = vadd.f32 %v1446, %v1528
    %v1703 = vadd.f32 %v1447, %v1530
    %v1704 = vadd.f32 %v1448, %v1532
    %v1705 = vadd.f32 %v1449, %v1534
    %v1706 = vadd.f32 %v1450, %v1536
    %v1707 = vadd.f32 %v1451, %v1538
    %v1708 = vadd.f32 %v1452, %v1540
    %v1709 = vadd.f32 %v1453, %v1542
    %v1710 = vadd.f32 %v1454, %v1544
    %v1711 = vadd.f32 %v1455, %v1546
    %v1712 = vadd.f32 %v1456, %v1548
    %v1713 = vadd.f32 %v1457, %v1550
    %v1714 = vadd.f32 %v1458, %v1552
    %v1715 = vadd.f32 %v1459, %v1554
    %v1716 = vadd.f32 %v1460, %v1556
    %v1717 = vadd.f32 %v1461, %v1558
    %v1718 = vadd.f32 %v1462, %v1560
    %v1719 = vadd.f32 %v1463, %v1562
    %v1720 = vadd.f32 %v1464, %v1564
    %v1721 = vadd.f32 %v1465, %v1566
    %v1722 = vadd.f32 %v1466, %v1568
    %v1723 = vadd.f32 %v1467, %v1570
    %v1724 = vadd.f32 %v1468, %v1572
    %v1725 = vadd.f32 %v1469, %v1574
    %v1726 = vadd.f32 %v1470, %v1576
    %v1727 = vadd.f32 %v1471, %v1578
    %v1728 = vadd.f32 %v1472, %v1580
    %v1729 = vadd.f32 %v1473, %v1582
    %v1730 = vadd.f32 %v1474, %v1584
    %v1731 = vadd.f32 %v1475, %v1586
    %v1732 = vadd.f32 %v1476, %v1588
    %v1733 = vadd.f32 %v1477, %v1590
    %v1734 = vadd.f32 %v1478, %v1592
    %v1735 = vadd.f32 %v1479, %v1594
    %v1736 = vadd.f32 %v1480, %v1596
    %v1737 = vadd.f32 %v1481, %v1598
    %v1738 = vadd.f32 %v1482, %v1600
    %v1739 = vadd.f32 %v1483, %v1602
    %v1740 = vadd.f32 %v1484, %v1604
    %v1741 = vadd.f32 %v1485, %v1606
    %v1742 = vadd.f32 %v1486, %v1608
    %v1743 = vadd.f32 %v1487, %v1610
    %v1744 = vadd.f32 %v1488, %v1612
    %v1745 = vadd.f32 %v1489, %v1614
    %v1746 = vadd.f32 %v1490, %v1616
    %v1747 = vadd.f32 %v1491, %v1618
    %v1748 = vadd.f32 %v1492, %v1620
    %v1749 = vmul.f32 %v76, %v76
    %v1750 = vmul.f32 %v77, %v77
    %v1751 = vmul.f32 %v78, %v78
    %v1752 = vmul.f32 %v79, %v79
    %v1757 = vrot.slane %v1749, 1
    %v1758 = vrot.slane %v1750, 1
    %v1759 = vrot.slane %v1751, 1
    %v1760 = vrot.slane %v1752, 1
    %v1765 = vadd.f32 %v1749, %v1757
    %v1766 = vadd.f32 %v1750, %v1758
    %v1767 = vadd.f32 %v1751, %v1759
    %v1768 = vadd.f32 %v1752, %v1760
    %v1769 = vrot.slane %v1749, 2
    %v1770 = vrot.slane %v1750, 2
    %v1771 = vrot.slane %v1751, 2
    %v1772 = vrot.slane %v1752, 2
    %v1777 = vadd.f32 %v1765, %v1769
    %v1778 = vadd.f32 %v1766, %v1770
    %v1779 = vadd.f32 %v1767, %v1771
    %v1780 = vadd.f32 %v1768, %v1772
    %v1781 = vmul.f32 %v291, 2.0
    %v1782 = vmul.f32 %v500, 2.0
    %v1783 = vmul.f32 %v709, 2.0
    %v1784 = vmul.f32 %v918, 2.0
    %v1785 = vmul.f32 %v294, 2.0
    %v1786 = vmul.f32 %v503, 2.0
    %v1787 = vmul.f32 %v712, 2.0
    %v1788 = vmul.f32 %v921, 2.0
    %v1789 = vmul.f32 %v297, 2.0
    %v1790 = vmul.f32 %v506, 2.0
    %v1791 = vmul.f32 %v715, 2.0
    %v1792 = vmul.f32 %v924, 2.0
    %v1793 = vmul.f32 %v300, 2.0
    %v1794 = vmul.f32 %v509, 2.0
    %v1795 = vmul.f32 %v718, 2.0
    %v1796 = vmul.f32 %v927, 2.0
    %v1797 = vmul.f32 %v303, 2.0
    %v1798 = vmul.f32 %v512, 2.0
    %v1799 = vmul.f32 %v721, 2.0
    %v1800 = vmul.f32 %v930, 2.0
    %v1801 = vmul.f32 %v306, 2.0
    %v1802 = vmul.f32 %v515, 2.0
    %v1803 = vmul.f32 %v724, 2.0
    %v1804 = vmul.f32 %v933, 2.0
    %v1805 = vmul.f32 %v309, 2.0
    %v1806 = vmul.f32 %v518, 2.0
    %v1807 = vmul.f32 %v727, 2.0
    %v1808 = vmul.f32 %v936, 2.0
    %v1809 = vmul.f32 %v312, 2.0
    %v1810 = vmul.f32 %v521, 2.0
    %v1811 = vmul.f32 %v730, 2.0
    %v1812 = vmul.f32 %v939, 2.0
    %v1813 = vmul.f32 %v315, 2.0
    %v1814 = vmul.f32 %v524, 2.0
    %v1815 = vmul.f32 %v733, 2.0
    %v1816 = vmul.f32 %v942, 2.0
    %v1817 = vmul.f32 %v318, 2.0
    %v1818 = vmul.f32 %v527, 2.0
    %v1819 = vmul.f32 %v736, 2.0
    %v1820 = vmul.f32 %v945, 2.0
    %v1821 = vmul.f32 %v321, 2.0
    %v1822 = vmul.f32 %v530, 2.0
    %v1823 = vmul.f32 %v739, 2.0
    %v1824 = vmul.f32 %v948, 2.0
    %v1825 = vmul.f32 %v324, 2.0
    %v1826 = vmul.f32 %v533, 2.0
    %v1827 = vmul.f32 %v742, 2.0
    %v1828 = vmul.f32 %v951, 2.0
    %v1829 = vmul.f32 %v327, 2.0
    %v1830 = vmul.f32 %v536, 2.0
    %v1831 = vmul.f32 %v745, 2.0
    %v1832 = vmul.f32 %v954, 2.0
    %v1833 = vmul.f32 %v330, 2.0
    %v1834 = vmul.f32 %v539, 2.0
    %v1835 = vmul.f32 %v748, 2.0
    %v1836 = vmul.f32 %v957, 2.0
    %v1837 = vmul.f32 %v333, 2.0
    %v1838 = vmul.f32 %v542, 2.0
    %v1839 = vmul.f32 %v751, 2.0
    %v1840 = vmul.f32 %v960, 2.0
    %v1841 = vmul.f32 %v336, 2.0
    %v1842 = vmul.f32 %v545, 2.0
    %v1843 = vmul.f32 %v754, 2.0
    %v1844 = vmul.f32 %v963, 2.0
    %v1845 = vmul.f32 %v339, 2.0
    %v1846 = vmul.f32 %v548, 2.0
    %v1847 = vmul.f32 %v757, 2.0
    %v1848 = vmul.f32 %v966, 2.0
    %v1849 = vmul.f32 %v342, 2.0
    %v1850 = vmul.f32 %v551, 2.0
    %v1851 = vmul.f32 %v760, 2.0
    %v1852 = vmul.f32 %v969, 2.0
    %v1853 = vmul.f32 %v345, 2.0
    %v1854 = vmul.f32 %v554, 2.0
    %v1855 = vmul.f32 %v763, 2.0
    %v1856 = vmul.f32 %v972, 2.0
    %v1857 = vmul.f32 %v348, 2.0
    %v1858 = vmul.f32 %v557, 2.0
    %v1859 = vmul.f32 %v766, 2.0
    %v1860 = vmul.f32 %v975, 2.0
    %v1861 = vmul.f32 %v351, 2.0
    %v1862 = vmul.f32 %v560, 2.0
    %v1863 = vmul.f32 %v769, 2.0
    %v1864 = vmul.f32 %v978, 2.0
    %v1865 = vmul.f32 %v354, 2.0
    %v1866 = vmul.f32 %v563, 2.0
    %v1867 = vmul.f32 %v772, 2.0
    %v1868 = vmul.f32 %v981, 2.0
    %v1869 = vmul.f32 %v357, 2.0
    %v1870 = vmul.f32 %v566, 2.0
    %v1871 = vmul.f32 %v775, 2.0
    %v1872 = vmul.f32 %v984, 2.0
    %v1873 = vmul.f32 %v360, 2.0
    %v1874 = vmul.f32 %v569, 2.0
    %v1875 = vmul.f32 %v778, 2.0
    %v1876 = vmul.f32 %v987, 2.0
    %v1877 = vmul.f32 %v363, 2.0
    %v1878 = vmul.f32 %v572, 2.0
    %v1879 = vmul.f32 %v781, 2.0
    %v1880 = vmul.f32 %v990, 2.0
    %v1881 = vmul.f32 %v366, 2.0
    %v1882 = vmul.f32 %v575, 2.0
    %v1883 = vmul.f32 %v784, 2.0
    %v1884 = vmul.f32 %v993, 2.0
    %v1885 = vmul.f32 %v369, 2.0
    %v1886 = vmul.f32 %v578, 2.0
    %v1887 = vmul.f32 %v787, 2.0
    %v1888 = vmul.f32 %v996, 2.0
    %v1889 = vmul.f32 %v372, 2.0
    %v1890 = vmul.f32 %v581, 2.0
    %v1891 = vmul.f32 %v790, 2.0
    %v1892 = vmul.f32 %v999, 2.0
    %v1893 = vmul.f32 %v375, 2.0
    %v1894 = vmul.f32 %v584, 2.0
    %v1895 = vmul.f32 %v793, 2.0
    %v1896 = vmul.f32 %v1002, 2.0
    %v1897 = vmul.f32 %v378, 2.0
    %v1898 = vmul.f32 %v587, 2.0
    %v1899 = vmul.f32 %v796, 2.0
    %v1900 = vmul.f32 %v1005, 2.0
    %v1901 = vmul.f32 %v381, 2.0
    %v1902 = vmul.f32 %v590, 2.0
    %v1903 = vmul.f32 %v799, 2.0
    %v1904 = vmul.f32 %v1008, 2.0
    %v1905 = vmul.f32 %v384, 2.0
    %v1906 = vmul.f32 %v593, 2.0
    %v1907 = vmul.f32 %v802, 2.0
    %v1908 = vmul.f32 %v1011, 2.0
    %v1909 = vmul.f32 %v387, 2.0
    %v1910 = vmul.f32 %v596, 2.0
    %v1911 = vmul.f32 %v805, 2.0
    %v1912 = vmul.f32 %v1014, 2.0
    %v1913 = vmul.f32 %v390, 2.0
    %v1914 = vmul.f32 %v599, 2.0
    %v1915 = vmul.f32 %v808, 2.0
    %v1916 = vmul.f32 %v1017, 2.0
    %v1917 = vmul.f32 %v393, 2.0
    %v1918 = vmul.f32 %v602, 2.0
    %v1919 = vmul.f32 %v811, 2.0
    %v1920 = vmul.f32 %v1020, 2.0
    %v1921 = vmul.f32 %v396, 2.0
    %v1922 = vmul.f32 %v605, 2.0
    %v1923 = vmul.f32 %v814, 2.0
    %v1924 = vmul.f32 %v1023, 2.0
    %v1925 = vmul.f32 %v399, 2.0
    %v1926 = vmul.f32 %v608, 2.0
    %v1927 = vmul.f32 %v817, 2.0
    %v1928 = vmul.f32 %v1026, 2.0
    %v1929 = vmul.f32 %v402, 2.0
    %v1930 = vmul.f32 %v611, 2.0
    %v1931 = vmul.f32 %v820, 2.0
    %v1932 = vmul.f32 %v1029, 2.0
    %v1933 = vmul.f32 %v405, 2.0
    %v1934 = vmul.f32 %v614, 2.0
    %v1935 = vmul.f32 %v823, 2.0
    %v1936 = vmul.f32 %v1032, 2.0
    %v1937 = vmul.f32 %v408, 2.0
    %v1938 = vmul.f32 %v617, 2.0
    %v1939 = vmul.f32 %v826, 2.0
    %v1940 = vmul.f32 %v1035, 2.0
    %v1941 = vmul.f32 %v411, 2.0
    %v1942 = vmul.f32 %v620, 2.0
    %v1943 = vmul.f32 %v829, 2.0
    %v1944 = vmul.f32 %v1038, 2.0
    %v1945 = vmul.f32 %v414, 2.0
    %v1946 = vmul.f32 %v623, 2.0
    %v1947 = vmul.f32 %v832, 2.0
    %v1948 = vmul.f32 %v1041, 2.0
    %v1949 = vmul.f32 %v417, 2.0
    %v1950 = vmul.f32 %v626, 2.0
    %v1951 = vmul.f32 %v835, 2.0
    %v1952 = vmul.f32 %v1044, 2.0
    %v1953 = vmul.f32 %v420, 2.0
    %v1954 = vmul.f32 %v629, 2.0
    %v1955 = vmul.f32 %v838, 2.0
    %v1956 = vmul.f32 %v1047, 2.0
    %v1957 = vmul.f32 %v423, 2.0
    %v1958 = vmul.f32 %v632, 2.0
    %v1959 = vmul.f32 %v841, 2.0
    %v1960 = vmul.f32 %v1050, 2.0
    %v1961 = vmul.f32 %v426, 2.0
    %v1962 = vmul.f32 %v635, 2.0
    %v1963 = vmul.f32 %v844, 2.0
    %v1964 = vmul.f32 %v1053, 2.0
    %v1965 = vmul.f32 %v429, 2.0
    %v1966 = vmul.f32 %v638, 2.0
    %v1967 = vmul.f32 %v847, 2.0
    %v1968 = vmul.f32 %v1056, 2.0
    %v1969 = vmul.f32 %v432, 2.0
    %v1970 = vmul.f32 %v641, 2.0
    %v1971 = vmul.f32 %v850, 2.0
    %v1972 = vmul.f32 %v1059, 2.0
    %v1973 = vmul.f32 %v435, 2.0
    %v1974 = vmul.f32 %v644, 2.0
    %v1975 = vmul.f32 %v853, 2.0
    %v1976 = vmul.f32 %v1062, 2.0
    %v1977 = vmul.f32 %v438, 2.0
    %v1978 = vmul.f32 %v647, 2.0
    %v1979 = vmul.f32 %v856, 2.0
    %v1980 = vmul.f32 %v1065, 2.0
    %v1981 = vmul.f32 %v441, 2.0
    %v1982 = vmul.f32 %v650, 2.0
    %v1983 = vmul.f32 %v859, 2.0
    %v1984 = vmul.f32 %v1068, 2.0
    %v1985 = vmul.f32 %v444, 2.0
    %v1986 = vmul.f32 %v653, 2.0
    %v1987 = vmul.f32 %v862, 2.0
    %v1988 = vmul.f32 %v1071, 2.0
    %v1989 = vmul.f32 %v447, 2.0
    %v1990 = vmul.f32 %v656, 2.0
    %v1991 = vmul.f32 %v865, 2.0
    %v1992 = vmul.f32 %v1074, 2.0
    %v1993 = vmul.f32 %v450, 2.0
    %v1994 = vmul.f32 %v659, 2.0
    %v1995 = vmul.f32 %v868, 2.0
    %v1996 = vmul.f32 %v1077, 2.0
    %v1997 = vmul.f32 %v453, 2.0
    %v1998 = vmul.f32 %v662, 2.0
    %v1999 = vmul.f32 %v871, 2.0
    %v2000 = vmul.f32 %v1080, 2.0
    %v2001 = vmul.f32 %v456, 2.0
    %v2002 = vmul.f32 %v665, 2.0
    %v2003 = vmul.f32 %v874, 2.0
    %v2004 = vmul.f32 %v1083, 2.0
    %v2005 = vmul.f32 %v459, 2.0
    %v2006 = vmul.f32 %v668, 2.0
    %v2007 = vmul.f32 %v877, 2.0
    %v2008 = vmul.f32 %v1086, 2.0
    %v2009 = vmul.f32 %v462, 2.0
    %v2010 = vmul.f32 %v671, 2.0
    %v2011 = vmul.f32 %v880, 2.0
    %v2012 = vmul.f32 %v1089, 2.0
    %v2013 = vmul.f32 %v465, 2.0
    %v2014 = vmul.f32 %v674, 2.0
    %v2015 = vmul.f32 %v883, 2.0
    %v2016 = vmul.f32 %v1092, 2.0
    %v2017 = vmul.f32 %v468, 2.0
    %v2018 = vmul.f32 %v677, 2.0
    %v2019 = vmul.f32 %v886, 2.0
    %v2020 = vmul.f32 %v1095, 2.0
    %v2021 = vmul.f32 %v471, 2.0
    %v2022 = vmul.f32 %v680, 2.0
    %v2023 = vmul.f32 %v889, 2.0
    %v2024 = vmul.f32 %v1098, 2.0
    %v2025 = vmul.f32 %v474, 2.0
    %v2026 = vmul.f32 %v683, 2.0
    %v2027 = vmul.f32 %v892, 2.0
    %v2028 = vmul.f32 %v1101, 2.0
    %v2029 = vmul.f32 %v477, 2.0
    %v2030 = vmul.f32 %v686, 2.0
    %v2031 = vmul.f32 %v895, 2.0
    %v2032 = vmul.f32 %v1104, 2.0
    %v2033 = vmul.f32 %v480, 2.0
    %v2034 = vmul.f32 %v689, 2.0
    %v2035 = vmul.f32 %v898, 2.0
    %v2036 = vmul.f32 %v1107, 2.0
    %2038 = vset.pattern.permute.xlu0 0
    %2039 = vperm.xlu0 %2038, %v1685
    %v2040 = vpop.permute.xlu0 %2039
    %2043 = vset.pattern.permute.xlu0 0
    %2044 = vperm.xlu0 %2043, %v1686
    %v2045 = vpop.permute.xlu0 %2044
    %2048 = vset.pattern.permute.xlu0 0
    %2049 = vperm.xlu0 %2048, %v1687
    %v2050 = vpop.permute.xlu0 %2049
    %2053 = vset.pattern.permute.xlu0 0
    %2054 = vperm.xlu0 %2053, %v1688
    %v2055 = vpop.permute.xlu0 %2054
    %2058 = vset.pattern.permute.xlu0 0
    %2059 = vperm.xlu0 %2058, %v1689
    %v2060 = vpop.permute.xlu0 %2059
    %2063 = vset.pattern.permute.xlu0 0
    %2064 = vperm.xlu0 %2063, %v1690
    %v2065 = vpop.permute.xlu0 %2064
    %2068 = vset.pattern.permute.xlu0 0
    %2069 = vperm.xlu0 %2068, %v1691
    %v2070 = vpop.permute.xlu0 %2069
    %2073 = vset.pattern.permute.xlu0 0
    %2074 = vperm.xlu0 %2073, %v1692
    %v2075 = vpop.permute.xlu0 %2074
    %2078 = vset.pattern.permute.xlu0 0
    %2079 = vperm.xlu0 %2078, %v1693
    %v2080 = vpop.permute.xlu0 %2079
    %2083 = vset.pattern.permute.xlu0 0
    %2084 = vperm.xlu0 %2083, %v1694
    %v2085 = vpop.permute.xlu0 %2084
    %2088 = vset.pattern.permute.xlu0 0
    %2089 = vperm.xlu0 %2088, %v1695
    %v2090 = vpop.permute.xlu0 %2089
    %2093 = vset.pattern.permute.xlu0 0
    %2094 = vperm.xlu0 %2093, %v1696
    %v2095 = vpop.permute.xlu0 %2094
    %2098 = vset.pattern.permute.xlu0 0
    %2099 = vperm.xlu0 %2098, %v1697
    %v2100 = vpop.permute.xlu0 %2099
    %2103 = vset.pattern.permute.xlu0 0
    %2104 = vperm.xlu0 %2103, %v1698
    %v2105 = vpop.permute.xlu0 %2104
    %2108 = vset.pattern.permute.xlu0 0
    %2109 = vperm.xlu0 %2108, %v1699
    %v2110 = vpop.permute.xlu0 %2109
    %2113 = vset.pattern.permute.xlu0 0
    %2114 = vperm.xlu0 %2113, %v1700
    %v2115 = vpop.permute.xlu0 %2114
    %2118 = vset.pattern.permute.xlu0 0
    %2119 = vperm.xlu0 %2118, %v1701
    %v2120 = vpop.permute.xlu0 %2119
    %2123 = vset.pattern.permute.xlu0 0
    %2124 = vperm.xlu0 %2123, %v1702
    %v2125 = vpop.permute.xlu0 %2124
    %2128 = vset.pattern.permute.xlu0 0
    %2129 = vperm.xlu0 %2128, %v1703
    %v2130 = vpop.permute.xlu0 %2129
    %2133 = vset.pattern.permute.xlu0 0
    %2134 = vperm.xlu0 %2133, %v1704
    %v2135 = vpop.permute.xlu0 %2134
    %2138 = vset.pattern.permute.xlu0 0
    %2139 = vperm.xlu0 %2138, %v1705
    %v2140 = vpop.permute.xlu0 %2139
    %2143 = vset.pattern.permute.xlu0 0
    %2144 = vperm.xlu0 %2143, %v1706
    %v2145 = vpop.permute.xlu0 %2144
    %2148 = vset.pattern.permute.xlu0 0
    %2149 = vperm.xlu0 %2148, %v1707
    %v2150 = vpop.permute.xlu0 %2149
    %2153 = vset.pattern.permute.xlu0 0
    %2154 = vperm.xlu0 %2153, %v1708
    %v2155 = vpop.permute.xlu0 %2154
    %2158 = vset.pattern.permute.xlu0 0
    %2159 = vperm.xlu0 %2158, %v1709
    %v2160 = vpop.permute.xlu0 %2159
    %2163 = vset.pattern.permute.xlu0 0
    %2164 = vperm.xlu0 %2163, %v1710
    %v2165 = vpop.permute.xlu0 %2164
    %2168 = vset.pattern.permute.xlu0 0
    %2169 = vperm.xlu0 %2168, %v1711
    %v2170 = vpop.permute.xlu0 %2169
    %2173 = vset.pattern.permute.xlu0 0
    %2174 = vperm.xlu0 %2173, %v1712
    %v2175 = vpop.permute.xlu0 %2174
    %2178 = vset.pattern.permute.xlu0 0
    %2179 = vperm.xlu0 %2178, %v1713
    %v2180 = vpop.permute.xlu0 %2179
    %2183 = vset.pattern.permute.xlu0 0
    %2184 = vperm.xlu0 %2183, %v1714
    %v2185 = vpop.permute.xlu0 %2184
    %2188 = vset.pattern.permute.xlu0 0
    %2189 = vperm.xlu0 %2188, %v1715
    %v2190 = vpop.permute.xlu0 %2189
    %2193 = vset.pattern.permute.xlu0 0
    %2194 = vperm.xlu0 %2193, %v1716
    %v2195 = vpop.permute.xlu0 %2194
    %2198 = vset.pattern.permute.xlu0 0
    %2199 = vperm.xlu0 %2198, %v1717
    %v2200 = vpop.permute.xlu0 %2199
    %2203 = vset.pattern.permute.xlu0 0
    %2204 = vperm.xlu0 %2203, %v1718
    %v2205 = vpop.permute.xlu0 %2204
    %2208 = vset.pattern.permute.xlu0 0
    %2209 = vperm.xlu0 %2208, %v1719
    %v2210 = vpop.permute.xlu0 %2209
    %2213 = vset.pattern.permute.xlu0 0
    %2214 = vperm.xlu0 %2213, %v1720
    %v2215 = vpop.permute.xlu0 %2214
    %2218 = vset.pattern.permute.xlu0 0
    %2219 = vperm.xlu0 %2218, %v1721
    %v2220 = vpop.permute.xlu0 %2219
    %2223 = vset.pattern.permute.xlu0 0
    %2224 = vperm.xlu0 %2223, %v1722
    %v2225 = vpop.permute.xlu0 %2224
    %2228 = vset.pattern.permute.xlu0 0
    %2229 = vperm.xlu0 %2228, %v1723
    %v2230 = vpop.permute.xlu0 %2229
    %2233 = vset.pattern.permute.xlu0 0
    %2234 = vperm.xlu0 %2233, %v1724
    %v2235 = vpop.permute.xlu0 %2234
    %2238 = vset.pattern.permute.xlu0 0
    %2239 = vperm.xlu0 %2238, %v1725
    %v2240 = vpop.permute.xlu0 %2239
    %2243 = vset.pattern.permute.xlu0 0
    %2244 = vperm.xlu0 %2243, %v1726
    %v2245 = vpop.permute.xlu0 %2244
    %2248 = vset.pattern.permute.xlu0 0
    %2249 = vperm.xlu0 %2248, %v1727
    %v2250 = vpop.permute.xlu0 %2249
    %2253 = vset.pattern.permute.xlu0 0
    %2254 = vperm.xlu0 %2253, %v1728
    %v2255 = vpop.permute.xlu0 %2254
    %2258 = vset.pattern.permute.xlu0 0
    %2259 = vperm.xlu0 %2258, %v1729
    %v2260 = vpop.permute.xlu0 %2259
    %2263 = vset.pattern.permute.xlu0 0
    %2264 = vperm.xlu0 %2263, %v1730
    %v2265 = vpop.permute.xlu0 %2264
    %2268 = vset.pattern.permute.xlu0 0
    %2269 = vperm.xlu0 %2268, %v1731
    %v2270 = vpop.permute.xlu0 %2269
    %2273 = vset.pattern.permute.xlu0 0
    %2274 = vperm.xlu0 %2273, %v1732
    %v2275 = vpop.permute.xlu0 %2274
    %2278 = vset.pattern.permute.xlu0 0
    %2279 = vperm.xlu0 %2278, %v1733
    %v2280 = vpop.permute.xlu0 %2279
    %2283 = vset.pattern.permute.xlu0 0
    %2284 = vperm.xlu0 %2283, %v1734
    %v2285 = vpop.permute.xlu0 %2284
    %2288 = vset.pattern.permute.xlu0 0
    %2289 = vperm.xlu0 %2288, %v1735
    %v2290 = vpop.permute.xlu0 %2289
    %2293 = vset.pattern.permute.xlu0 0
    %2294 = vperm.xlu0 %2293, %v1736
    %v2295 = vpop.permute.xlu0 %2294
    %2298 = vset.pattern.permute.xlu0 0
    %2299 = vperm.xlu0 %2298, %v1737
    %v2300 = vpop.permute.xlu0 %2299
    %2303 = vset.pattern.permute.xlu0 0
    %2304 = vperm.xlu0 %2303, %v1738
    %v2305 = vpop.permute.xlu0 %2304
    %2308 = vset.pattern.permute.xlu0 0
    %2309 = vperm.xlu0 %2308, %v1739
    %v2310 = vpop.permute.xlu0 %2309
    %2313 = vset.pattern.permute.xlu0 0
    %2314 = vperm.xlu0 %2313, %v1740
    %v2315 = vpop.permute.xlu0 %2314
    %2318 = vset.pattern.permute.xlu0 0
    %2319 = vperm.xlu0 %2318, %v1741
    %v2320 = vpop.permute.xlu0 %2319
    %2323 = vset.pattern.permute.xlu0 0
    %2324 = vperm.xlu0 %2323, %v1742
    %v2325 = vpop.permute.xlu0 %2324
    %2328 = vset.pattern.permute.xlu0 0
    %2329 = vperm.xlu0 %2328, %v1743
    %v2330 = vpop.permute.xlu0 %2329
    %2333 = vset.pattern.permute.xlu0 0
    %2334 = vperm.xlu0 %2333, %v1744
    %v2335 = vpop.permute.xlu0 %2334
    %2338 = vset.pattern.permute.xlu0 0
    %2339 = vperm.xlu0 %2338, %v1745
    %v2340 = vpop.permute.xlu0 %2339
    %2343 = vset.pattern.permute.xlu0 0
    %2344 = vperm.xlu0 %2343, %v1746
    %v2345 = vpop.permute.xlu0 %2344
    %2348 = vset.pattern.permute.xlu0 0
    %2349 = vperm.xlu0 %2348, %v1747
    %v2350 = vpop.permute.xlu0 %2349
    %2353 = vset.pattern.permute.xlu0 0
    %2354 = vperm.xlu0 %2353, %v1748
    %v2355 = vpop.permute.xlu0 %2354
    %v2357 = vsub.f32 %v1781, %v2040
    %v2358 = vsub.f32 %v1782, %v2040
    %v2359 = vsub.f32 %v1783, %v2040
    %v2360 = vsub.f32 %v1784, %v2040
    %v2361 = vsub.f32 %v1785, %v2045
    %v2362 = vsub.f32 %v1786, %v2045
    %v2363 = vsub.f32 %v1787, %v2045
    %v2364 = vsub.f32 %v1788, %v2045
    %v2365 = vsub.f32 %v1789, %v2050
    %v2366 = vsub.f32 %v1790, %v2050
    %v2367 = vsub.f32 %v1791, %v2050
    %v2368 = vsub.f32 %v1792, %v2050
    %v2369 = vsub.f32 %v1793, %v2055
    %v2370 = vsub.f32 %v1794, %v2055
    %v2371 = vsub.f32 %v1795, %v2055
    %v2372 = vsub.f32 %v1796, %v2055
    %v2373 = vsub.f32 %v1797, %v2060
    %v2374 = vsub.f32 %v1798, %v2060
    %v2375 = vsub.f32 %v1799, %v2060
    %v2376 = vsub.f32 %v1800, %v2060
    %v2377 = vsub.f32 %v1801, %v2065
    %v2378 = vsub.f32 %v1802, %v2065
    %v2379 = vsub.f32 %v1803, %v2065
    %v2380 = vsub.f32 %v1804, %v2065
    %v2381 = vsub.f32 %v1805, %v2070
    %v2382 = vsub.f32 %v1806, %v2070
    %v2383 = vsub.f32 %v1807, %v2070
    %v2384 = vsub.f32 %v1808, %v2070
    %v2385 = vsub.f32 %v1809, %v2075
    %v2386 = vsub.f32 %v1810, %v2075
    %v2387 = vsub.f32 %v1811, %v2075
    %v2388 = vsub.f32 %v1812, %v2075
    %v2389 = vsub.f32 %v1813, %v2080
    %v2390 = vsub.f32 %v1814, %v2080
    %v2391 = vsub.f32 %v1815, %v2080
    %v2392 = vsub.f32 %v1816, %v2080
    %v2393 = vsub.f32 %v1817, %v2085
    %v2394 = vsub.f32 %v1818, %v2085
    %v2395 = vsub.f32 %v1819, %v2085
    %v2396 = vsub.f32 %v1820, %v2085
    %v2397 = vsub.f32 %v1821, %v2090
    %v2398 = vsub.f32 %v1822, %v2090
    %v2399 = vsub.f32 %v1823, %v2090
    %v2400 = vsub.f32 %v1824, %v2090
    %v2401 = vsub.f32 %v1825, %v2095
    %v2402 = vsub.f32 %v1826, %v2095
    %v2403 = vsub.f32 %v1827, %v2095
    %v2404 = vsub.f32 %v1828, %v2095
    %v2405 = vsub.f32 %v1829, %v2100
    %v2406 = vsub.f32 %v1830, %v2100
    %v2407 = vsub.f32 %v1831, %v2100
    %v2408 = vsub.f32 %v1832, %v2100
    %v2409 = vsub.f32 %v1833, %v2105
    %v2410 = vsub.f32 %v1834, %v2105
    %v2411 = vsub.f32 %v1835, %v2105
    %v2412 = vsub.f32 %v1836, %v2105
    %v2413 = vsub.f32 %v1837, %v2110
    %v2414 = vsub.f32 %v1838, %v2110
    %v2415 = vsub.f32 %v1839, %v2110
    %v2416 = vsub.f32 %v1840, %v2110
    %v2417 = vsub.f32 %v1841, %v2115
    %v2418 = vsub.f32 %v1842, %v2115
    %v2419 = vsub.f32 %v1843, %v2115
    %v2420 = vsub.f32 %v1844, %v2115
    %v2421 = vsub.f32 %v1845, %v2120
    %v2422 = vsub.f32 %v1846, %v2120
    %v2423 = vsub.f32 %v1847, %v2120
    %v2424 = vsub.f32 %v1848, %v2120
    %v2425 = vsub.f32 %v1849, %v2125
    %v2426 = vsub.f32 %v1850, %v2125
    %v2427 = vsub.f32 %v1851, %v2125
    %v2428 = vsub.f32 %v1852, %v2125
    %v2429 = vsub.f32 %v1853, %v2130
    %v2430 = vsub.f32 %v1854, %v2130
    %v2431 = vsub.f32 %v1855, %v2130
    %v2432 = vsub.f32 %v1856, %v2130
    %v2433 = vsub.f32 %v1857, %v2135
    %v2434 = vsub.f32 %v1858, %v2135
    %v2435 = vsub.f32 %v1859, %v2135
    %v2436 = vsub.f32 %v1860, %v2135
    %v2437 = vsub.f32 %v1861, %v2140
    %v2438 = vsub.f32 %v1862, %v2140
    %v2439 = vsub.f32 %v1863, %v2140
    %v2440 = vsub.f32 %v1864, %v2140
    %v2441 = vsub.f32 %v1865, %v2145
    %v2442 = vsub.f32 %v1866, %v2145
    %v2443 = vsub.f32 %v1867, %v2145
    %v2444 = vsub.f32 %v1868, %v2145
    %v2445 = vsub.f32 %v1869, %v2150
    %v2446 = vsub.f32 %v1870, %v2150
    %v2447 = vsub.f32 %v1871, %v2150
    %v2448 = vsub.f32 %v1872, %v2150
    %v2449 = vsub.f32 %v1873, %v2155
    %v2450 = vsub.f32 %v1874, %v2155
    %v2451 = vsub.f32 %v1875, %v2155
    %v2452 = vsub.f32 %v1876, %v2155
    %v2453 = vsub.f32 %v1877, %v2160
    %v2454 = vsub.f32 %v1878, %v2160
    %v2455 = vsub.f32 %v1879, %v2160
    %v2456 = vsub.f32 %v1880, %v2160
    %v2457 = vsub.f32 %v1881, %v2165
    %v2458 = vsub.f32 %v1882, %v2165
    %v2459 = vsub.f32 %v1883, %v2165
    %v2460 = vsub.f32 %v1884, %v2165
    %v2461 = vsub.f32 %v1885, %v2170
    %v2462 = vsub.f32 %v1886, %v2170
    %v2463 = vsub.f32 %v1887, %v2170
    %v2464 = vsub.f32 %v1888, %v2170
    %v2465 = vsub.f32 %v1889, %v2175
    %v2466 = vsub.f32 %v1890, %v2175
    %v2467 = vsub.f32 %v1891, %v2175
    %v2468 = vsub.f32 %v1892, %v2175
    %v2469 = vsub.f32 %v1893, %v2180
    %v2470 = vsub.f32 %v1894, %v2180
    %v2471 = vsub.f32 %v1895, %v2180
    %v2472 = vsub.f32 %v1896, %v2180
    %v2473 = vsub.f32 %v1897, %v2185
    %v2474 = vsub.f32 %v1898, %v2185
    %v2475 = vsub.f32 %v1899, %v2185
    %v2476 = vsub.f32 %v1900, %v2185
    %v2477 = vsub.f32 %v1901, %v2190
    %v2478 = vsub.f32 %v1902, %v2190
    %v2479 = vsub.f32 %v1903, %v2190
    %v2480 = vsub.f32 %v1904, %v2190
    %v2481 = vsub.f32 %v1905, %v2195
    %v2482 = vsub.f32 %v1906, %v2195
    %v2483 = vsub.f32 %v1907, %v2195
    %v2484 = vsub.f32 %v1908, %v2195
    %v2485 = vsub.f32 %v1909, %v2200
    %v2486 = vsub.f32 %v1910, %v2200
    %v2487 = vsub.f32 %v1911, %v2200
    %v2488 = vsub.f32 %v1912, %v2200
    %v2489 = vsub.f32 %v1913, %v2205
    %v2490 = vsub.f32 %v1914, %v2205
    %v2491 = vsub.f32 %v1915, %v2205
    %v2492 = vsub.f32 %v1916, %v2205
    %v2493 = vsub.f32 %v1917, %v2210
    %v2494 = vsub.f32 %v1918, %v2210
    %v2495 = vsub.f32 %v1919, %v2210
    %v2496 = vsub.f32 %v1920, %v2210
    %v2497 = vsub.f32 %v1921, %v2215
    %v2498 = vsub.f32 %v1922, %v2215
    %v2499 = vsub.f32 %v1923, %v2215
    %v2500 = vsub.f32 %v1924, %v2215
    %v2501 = vsub.f32 %v1925, %v2220
    %v2502 = vsub.f32 %v1926, %v2220
    %v2503 = vsub.f32 %v1927, %v2220
    %v2504 = vsub.f32 %v1928, %v2220
    %v2505 = vsub.f32 %v1929, %v2225
    %v2506 = vsub.f32 %v1930, %v2225
    %v2507 = vsub.f32 %v1931, %v2225
    %v2508 = vsub.f32 %v1932, %v2225
    %v2509 = vsub.f32 %v1933, %v2230
    %v2510 = vsub.f32 %v1934, %v2230
    %v2511 = vsub.f32 %v1935, %v2230
    %v2512 = vsub.f32 %v1936, %v2230
    %v2513 = vsub.f32 %v1937, %v2235
    %v2514 = vsub.f32 %v1938, %v2235
    %v2515 = vsub.f32 %v1939, %v2235
    %v2516 = vsub.f32 %v1940, %v2235
    %v2517 = vsub.f32 %v1941, %v2240
    %v2518 = vsub.f32 %v1942, %v2240
    %v2519 = vsub.f32 %v1943, %v2240
    %v2520 = vsub.f32 %v1944, %v2240
    %v2521 = vsub.f32 %v1945, %v2245
    %v2522 = vsub.f32 %v1946, %v2245
    %v2523 = vsub.f32 %v1947, %v2245
    %v2524 = vsub.f32 %v1948, %v2245
    %v2525 = vsub.f32 %v1949, %v2250
    %v2526 = vsub.f32 %v1950, %v2250
    %v2527 = vsub.f32 %v1951, %v2250
    %v2528 = vsub.f32 %v1952, %v2250
    %v2529 = vsub.f32 %v1953, %v2255
    %v2530 = vsub.f32 %v1954, %v2255
    %v2531 = vsub.f32 %v1955, %v2255
    %v2532 = vsub.f32 %v1956, %v2255
    %v2533 = vsub.f32 %v1957, %v2260
    %v2534 = vsub.f32 %v1958, %v2260
    %v2535 = vsub.f32 %v1959, %v2260
    %v2536 = vsub.f32 %v1960, %v2260
    %v2537 = vsub.f32 %v1961, %v2265
    %v2538 = vsub.f32 %v1962, %v2265
    %v2539 = vsub.f32 %v1963, %v2265
    %v2540 = vsub.f32 %v1964, %v2265
    %v2541 = vsub.f32 %v1965, %v2270
    %v2542 = vsub.f32 %v1966, %v2270
    %v2543 = vsub.f32 %v1967, %v2270
    %v2544 = vsub.f32 %v1968, %v2270
    %v2545 = vsub.f32 %v1969, %v2275
    %v2546 = vsub.f32 %v1970, %v2275
    %v2547 = vsub.f32 %v1971, %v2275
    %v2548 = vsub.f32 %v1972, %v2275
    %v2549 = vsub.f32 %v1973, %v2280
    %v2550 = vsub.f32 %v1974, %v2280
    %v2551 = vsub.f32 %v1975, %v2280
    %v2552 = vsub.f32 %v1976, %v2280
    %v2553 = vsub.f32 %v1977, %v2285
    %v2554 = vsub.f32 %v1978, %v2285
    %v2555 = vsub.f32 %v1979, %v2285
    %v2556 = vsub.f32 %v1980, %v2285
    %v2557 = vsub.f32 %v1981, %v2290
    %v2558 = vsub.f32 %v1982, %v2290
    %v2559 = vsub.f32 %v1983, %v2290
    %v2560 = vsub.f32 %v1984, %v2290
    %v2561 = vsub.f32 %v1985, %v2295
    %v2562 = vsub.f32 %v1986, %v2295
    %v2563 = vsub.f32 %v1987, %v2295
    %v2564 = vsub.f32 %v1988, %v2295
    %v2565 = vsub.f32 %v1989, %v2300
    %v2566 = vsub.f32 %v1990, %v2300
    %v2567 = vsub.f32 %v1991, %v2300
    %v2568 = vsub.f32 %v1992, %v2300
    %v2569 = vsub.f32 %v1993, %v2305
    %v2570 = vsub.f32 %v1994, %v2305
    %v2571 = vsub.f32 %v1995, %v2305
    %v2572 = vsub.f32 %v1996, %v2305
    %v2573 = vsub.f32 %v1997, %v2310
    %v2574 = vsub.f32 %v1998, %v2310
    %v2575 = vsub.f32 %v1999, %v2310
    %v2576 = vsub.f32 %v2000, %v2310
    %v2577 = vsub.f32 %v2001, %v2315
    %v2578 = vsub.f32 %v2002, %v2315
    %v2579 = vsub.f32 %v2003, %v2315
    %v2580 = vsub.f32 %v2004, %v2315
    %v2581 = vsub.f32 %v2005, %v2320
    %v2582 = vsub.f32 %v2006, %v2320
    %v2583 = vsub.f32 %v2007, %v2320
    %v2584 = vsub.f32 %v2008, %v2320
    %v2585 = vsub.f32 %v2009, %v2325
    %v2586 = vsub.f32 %v2010, %v2325
    %v2587 = vsub.f32 %v2011, %v2325
    %v2588 = vsub.f32 %v2012, %v2325
    %v2589 = vsub.f32 %v2013, %v2330
    %v2590 = vsub.f32 %v2014, %v2330
    %v2591 = vsub.f32 %v2015, %v2330
    %v2592 = vsub.f32 %v2016, %v2330
    %v2593 = vsub.f32 %v2017, %v2335
    %v2594 = vsub.f32 %v2018, %v2335
    %v2595 = vsub.f32 %v2019, %v2335
    %v2596 = vsub.f32 %v2020, %v2335
    %v2597 = vsub.f32 %v2021, %v2340
    %v2598 = vsub.f32 %v2022, %v2340
    %v2599 = vsub.f32 %v2023, %v2340
    %v2600 = vsub.f32 %v2024, %v2340
    %v2601 = vsub.f32 %v2025, %v2345
    %v2602 = vsub.f32 %v2026, %v2345
    %v2603 = vsub.f32 %v2027, %v2345
    %v2604 = vsub.f32 %v2028, %v2345
    %v2605 = vsub.f32 %v2029, %v2350
    %v2606 = vsub.f32 %v2030, %v2350
    %v2607 = vsub.f32 %v2031, %v2350
    %v2608 = vsub.f32 %v2032, %v2350
    %v2609 = vsub.f32 %v2033, %v2355
    %v2610 = vsub.f32 %v2034, %v2355
    %v2611 = vsub.f32 %v2035, %v2355
    %v2612 = vsub.f32 %v2036, %v2355
    %v2613 = vperm.slane %v1777, 0
    %v2614 = vperm.slane %v1778, 0
    %v2615 = vperm.slane %v1779, 0
    %v2616 = vperm.slane %v1780, 0
    %v2617 = vsub.f32 %v2357, %v2613
    %v2618 = vsub.f32 %v2358, %v2614
    %v2619 = vsub.f32 %v2359, %v2615
    %v2620 = vsub.f32 %v2360, %v2616
    %v2621 = vsub.f32 %v2361, %v2613
    %v2622 = vsub.f32 %v2362, %v2614
    %v2623 = vsub.f32 %v2363, %v2615
    %v2624 = vsub.f32 %v2364, %v2616
    %v2625 = vsub.f32 %v2365, %v2613
    %v2626 = vsub.f32 %v2366, %v2614
    %v2627 = vsub.f32 %v2367, %v2615
    %v2628 = vsub.f32 %v2368, %v2616
    %v2629 = vsub.f32 %v2369, %v2613
    %v2630 = vsub.f32 %v2370, %v2614
    %v2631 = vsub.f32 %v2371, %v2615
    %v2632 = vsub.f32 %v2372, %v2616
    %v2633 = vsub.f32 %v2373, %v2613
    %v2634 = vsub.f32 %v2374, %v2614
    %v2635 = vsub.f32 %v2375, %v2615
    %v2636 = vsub.f32 %v2376, %v2616
    %v2637 = vsub.f32 %v2377, %v2613
    %v2638 = vsub.f32 %v2378, %v2614
    %v2639 = vsub.f32 %v2379, %v2615
    %v2640 = vsub.f32 %v2380, %v2616
    %v2641 = vsub.f32 %v2381, %v2613
    %v2642 = vsub.f32 %v2382, %v2614
    %v2643 = vsub.f32 %v2383, %v2615
    %v2644 = vsub.f32 %v2384, %v2616
    %v2645 = vsub.f32 %v2385, %v2613
    %v2646 = vsub.f32 %v2386, %v2614
    %v2647 = vsub.f32 %v2387, %v2615
    %v2648 = vsub.f32 %v2388, %v2616
    %v2649 = vsub.f32 %v2389, %v2613
    %v2650 = vsub.f32 %v2390, %v2614
    %v2651 = vsub.f32 %v2391, %v2615
    %v2652 = vsub.f32 %v2392, %v2616
    %v2653 = vsub.f32 %v2393, %v2613
    %v2654 = vsub.f32 %v2394, %v2614
    %v2655 = vsub.f32 %v2395, %v2615
    %v2656 = vsub.f32 %v2396, %v2616
    %v2657 = vsub.f32 %v2397, %v2613
    %v2658 = vsub.f32 %v2398, %v2614
    %v2659 = vsub.f32 %v2399, %v2615
    %v2660 = vsub.f32 %v2400, %v2616
    %v2661 = vsub.f32 %v2401, %v2613
    %v2662 = vsub.f32 %v2402, %v2614
    %v2663 = vsub.f32 %v2403, %v2615
    %v2664 = vsub.f32 %v2404, %v2616
    %v2665 = vsub.f32 %v2405, %v2613
    %v2666 = vsub.f32 %v2406, %v2614
    %v2667 = vsub.f32 %v2407, %v2615
    %v2668 = vsub.f32 %v2408, %v2616
    %v2669 = vsub.f32 %v2409, %v2613
    %v2670 = vsub.f32 %v2410, %v2614
    %v2671 = vsub.f32 %v2411, %v2615
    %v2672 = vsub.f32 %v2412, %v2616
    %v2673 = vsub.f32 %v2413, %v2613
    %v2674 = vsub.f32 %v2414, %v2614
    %v2675 = vsub.f32 %v2415, %v2615
    %v2676 = vsub.f32 %v2416, %v2616
    %v2677 = vsub.f32 %v2417, %v2613
    %v2678 = vsub.f32 %v2418, %v2614
    %v2679 = vsub.f32 %v2419, %v2615
    %v2680 = vsub.f32 %v2420, %v2616
    %v2681 = vsub.f32 %v2421, %v2613
    %v2682 = vsub.f32 %v2422, %v2614
    %v2683 = vsub.f32 %v2423, %v2615
    %v2684 = vsub.f32 %v2424, %v2616
    %v2685 = vsub.f32 %v2425, %v2613
    %v2686 = vsub.f32 %v2426, %v2614
    %v2687 = vsub.f32 %v2427, %v2615
    %v2688 = vsub.f32 %v2428, %v2616
    %v2689 = vsub.f32 %v2429, %v2613
    %v2690 = vsub.f32 %v2430, %v2614
    %v2691 = vsub.f32 %v2431, %v2615
    %v2692 = vsub.f32 %v2432, %v2616
    %v2693 = vsub.f32 %v2433, %v2613
    %v2694 = vsub.f32 %v2434, %v2614
    %v2695 = vsub.f32 %v2435, %v2615
    %v2696 = vsub.f32 %v2436, %v2616
    %v2697 = vsub.f32 %v2437, %v2613
    %v2698 = vsub.f32 %v2438, %v2614
    %v2699 = vsub.f32 %v2439, %v2615
    %v2700 = vsub.f32 %v2440, %v2616
    %v2701 = vsub.f32 %v2441, %v2613
    %v2702 = vsub.f32 %v2442, %v2614
    %v2703 = vsub.f32 %v2443, %v2615
    %v2704 = vsub.f32 %v2444, %v2616
    %v2705 = vsub.f32 %v2445, %v2613
    %v2706 = vsub.f32 %v2446, %v2614
    %v2707 = vsub.f32 %v2447, %v2615
    %v2708 = vsub.f32 %v2448, %v2616
    %v2709 = vsub.f32 %v2449, %v2613
    %v2710 = vsub.f32 %v2450, %v2614
    %v2711 = vsub.f32 %v2451, %v2615
    %v2712 = vsub.f32 %v2452, %v2616
    %v2713 = vsub.f32 %v2453, %v2613
    %v2714 = vsub.f32 %v2454, %v2614
    %v2715 = vsub.f32 %v2455, %v2615
    %v2716 = vsub.f32 %v2456, %v2616
    %v2717 = vsub.f32 %v2457, %v2613
    %v2718 = vsub.f32 %v2458, %v2614
    %v2719 = vsub.f32 %v2459, %v2615
    %v2720 = vsub.f32 %v2460, %v2616
    %v2721 = vsub.f32 %v2461, %v2613
    %v2722 = vsub.f32 %v2462, %v2614
    %v2723 = vsub.f32 %v2463, %v2615
    %v2724 = vsub.f32 %v2464, %v2616
    %v2725 = vsub.f32 %v2465, %v2613
    %v2726 = vsub.f32 %v2466, %v2614
    %v2727 = vsub.f32 %v2467, %v2615
    %v2728 = vsub.f32 %v2468, %v2616
    %v2729 = vsub.f32 %v2469, %v2613
    %v2730 = vsub.f32 %v2470, %v2614
    %v2731 = vsub.f32 %v2471, %v2615
    %v2732 = vsub.f32 %v2472, %v2616
    %v2733 = vsub.f32 %v2473, %v2613
    %v2734 = vsub.f32 %v2474, %v2614
    %v2735 = vsub.f32 %v2475, %v2615
    %v2736 = vsub.f32 %v2476, %v2616
    %v2737 = vsub.f32 %v2477, %v2613
    %v2738 = vsub.f32 %v2478, %v2614
    %v2739 = vsub.f32 %v2479, %v2615
    %v2740 = vsub.f32 %v2480, %v2616
    %v2741 = vsub.f32 %v2481, %v2613
    %v2742 = vsub.f32 %v2482, %v2614
    %v2743 = vsub.f32 %v2483, %v2615
    %v2744 = vsub.f32 %v2484, %v2616
    %v2745 = vsub.f32 %v2485, %v2613
    %v2746 = vsub.f32 %v2486, %v2614
    %v2747 = vsub.f32 %v2487, %v2615
    %v2748 = vsub.f32 %v2488, %v2616
    %v2749 = vsub.f32 %v2489, %v2613
    %v2750 = vsub.f32 %v2490, %v2614
    %v2751 = vsub.f32 %v2491, %v2615
    %v2752 = vsub.f32 %v2492, %v2616
    %v2753 = vsub.f32 %v2493, %v2613
    %v2754 = vsub.f32 %v2494, %v2614
    %v2755 = vsub.f32 %v2495, %v2615
    %v2756 = vsub.f32 %v2496, %v2616
    %v2757 = vsub.f32 %v2497, %v2613
    %v2758 = vsub.f32 %v2498, %v2614
    %v2759 = vsub.f32 %v2499, %v2615
    %v2760 = vsub.f32 %v2500, %v2616
    %v2761 = vsub.f32 %v2501, %v2613
    %v2762 = vsub.f32 %v2502, %v2614
    %v2763 = vsub.f32 %v2503, %v2615
    %v2764 = vsub.f32 %v2504, %v2616
    %v2765 = vsub.f32 %v2505, %v2613
    %v2766 = vsub.f32 %v2506, %v2614
    %v2767 = vsub.f32 %v2507, %v2615
    %v2768 = vsub.f32 %v2508, %v2616
    %v2769 = vsub.f32 %v2509, %v2613
    %v2770 = vsub.f32 %v2510, %v2614
    %v2771 = vsub.f32 %v2511, %v2615
    %v2772 = vsub.f32 %v2512, %v2616
    %v2773 = vsub.f32 %v2513, %v2613
    %v2774 = vsub.f32 %v2514, %v2614
    %v2775 = vsub.f32 %v2515, %v2615
    %v2776 = vsub.f32 %v2516, %v2616
    %v2777 = vsub.f32 %v2517, %v2613
    %v2778 = vsub.f32 %v2518, %v2614
    %v2779 = vsub.f32 %v2519, %v2615
    %v2780 = vsub.f32 %v2520, %v2616
    %v2781 = vsub.f32 %v2521, %v2613
    %v2782 = vsub.f32 %v2522, %v2614
    %v2783 = vsub.f32 %v2523, %v2615
    %v2784 = vsub.f32 %v2524, %v2616
    %v2785 = vsub.f32 %v2525, %v2613
    %v2786 = vsub.f32 %v2526, %v2614
    %v2787 = vsub.f32 %v2527, %v2615
    %v2788 = vsub.f32 %v2528, %v2616
    %v2789 = vsub.f32 %v2529, %v2613
    %v2790 = vsub.f32 %v2530, %v2614
    %v2791 = vsub.f32 %v2531, %v2615
    %v2792 = vsub.f32 %v2532, %v2616
    %v2793 = vsub.f32 %v2533, %v2613
    %v2794 = vsub.f32 %v2534, %v2614
    %v2795 = vsub.f32 %v2535, %v2615
    %v2796 = vsub.f32 %v2536, %v2616
    %v2797 = vsub.f32 %v2537, %v2613
    %v2798 = vsub.f32 %v2538, %v2614
    %v2799 = vsub.f32 %v2539, %v2615
    %v2800 = vsub.f32 %v2540, %v2616
    %v2801 = vsub.f32 %v2541, %v2613
    %v2802 = vsub.f32 %v2542, %v2614
    %v2803 = vsub.f32 %v2543, %v2615
    %v2804 = vsub.f32 %v2544, %v2616
    %v2805 = vsub.f32 %v2545, %v2613
    %v2806 = vsub.f32 %v2546, %v2614
    %v2807 = vsub.f32 %v2547, %v2615
    %v2808 = vsub.f32 %v2548, %v2616
    %v2809 = vsub.f32 %v2549, %v2613
    %v2810 = vsub.f32 %v2550, %v2614
    %v2811 = vsub.f32 %v2551, %v2615
    %v2812 = vsub.f32 %v2552, %v2616
    %v2813 = vsub.f32 %v2553, %v2613
    %v2814 = vsub.f32 %v2554, %v2614
    %v2815 = vsub.f32 %v2555, %v2615
    %v2816 = vsub.f32 %v2556, %v2616
    %v2817 = vsub.f32 %v2557, %v2613
    %v2818 = vsub.f32 %v2558, %v2614
    %v2819 = vsub.f32 %v2559, %v2615
    %v2820 = vsub.f32 %v2560, %v2616
    %v2821 = vsub.f32 %v2561, %v2613
    %v2822 = vsub.f32 %v2562, %v2614
    %v2823 = vsub.f32 %v2563, %v2615
    %v2824 = vsub.f32 %v2564, %v2616
    %v2825 = vsub.f32 %v2565, %v2613
    %v2826 = vsub.f32 %v2566, %v2614
    %v2827 = vsub.f32 %v2567, %v2615
    %v2828 = vsub.f32 %v2568, %v2616
    %v2829 = vsub.f32 %v2569, %v2613
    %v2830 = vsub.f32 %v2570, %v2614
    %v2831 = vsub.f32 %v2571, %v2615
    %v2832 = vsub.f32 %v2572, %v2616
    %v2833 = vsub.f32 %v2573, %v2613
    %v2834 = vsub.f32 %v2574, %v2614
    %v2835 = vsub.f32 %v2575, %v2615
    %v2836 = vsub.f32 %v2576, %v2616
    %v2837 = vsub.f32 %v2577, %v2613
    %v2838 = vsub.f32 %v2578, %v2614
    %v2839 = vsub.f32 %v2579, %v2615
    %v2840 = vsub.f32 %v2580, %v2616
    %v2841 = vsub.f32 %v2581, %v2613
    %v2842 = vsub.f32 %v2582, %v2614
    %v2843 = vsub.f32 %v2583, %v2615
    %v2844 = vsub.f32 %v2584, %v2616
    %v2845 = vsub.f32 %v2585, %v2613
    %v2846 = vsub.f32 %v2586, %v2614
    %v2847 = vsub.f32 %v2587, %v2615
    %v2848 = vsub.f32 %v2588, %v2616
    %v2849 = vsub.f32 %v2589, %v2613
    %v2850 = vsub.f32 %v2590, %v2614
    %v2851 = vsub.f32 %v2591, %v2615
    %v2852 = vsub.f32 %v2592, %v2616
    %v2853 = vsub.f32 %v2593, %v2613
    %v2854 = vsub.f32 %v2594, %v2614
    %v2855 = vsub.f32 %v2595, %v2615
    %v2856 = vsub.f32 %v2596, %v2616
    %v2857 = vsub.f32 %v2597, %v2613
    %v2858 = vsub.f32 %v2598, %v2614
    %v2859 = vsub.f32 %v2599, %v2615
    %v2860 = vsub.f32 %v2600, %v2616
    %v2861 = vsub.f32 %v2601, %v2613
    %v2862 = vsub.f32 %v2602, %v2614
    %v2863 = vsub.f32 %v2603, %v2615
    %v2864 = vsub.f32 %v2604, %v2616
    %v2865 = vsub.f32 %v2605, %v2613
    %v2866 = vsub.f32 %v2606, %v2614
    %v2867 = vsub.f32 %v2607, %v2615
    %v2868 = vsub.f32 %v2608, %v2616
    %v2869 = vsub.f32 %v2609, %v2613
    %v2870 = vsub.f32 %v2610, %v2614
    %v2871 = vsub.f32 %v2611, %v2615
    %v2872 = vsub.f32 %v2612, %v2616
    %p2873 = scmp.eq.s32.totalorder 0, 0
    // Predicated region
    $region10: #{tpu_custom_call.1} parent=1 // pred_check
      %p2874 = pneg %p2873
    $region11: #{tpu_custom_call.1} parent=1 // pred_check_branch
      %2876 = sbr.rel (%p2874) target = $region13
    $region12: #{tpu_custom_call.1} parent=1 // pred_region
      %v2877 = vlaneseq
      %v2878 = vshrl.u32 %v2877, 7
      %v2879 = vadd.s32 %v2878, 8
      %v2880 = vadd.s32 %v2878, 16
      %v2881 = vadd.s32 %v2878, 24
      %v2882 = vadd.s32 %v2878, 32
      %v2883 = vadd.s32 %v2878, 40
      %v2884 = vadd.s32 %v2878, 48
      %v2885 = vadd.s32 %v2878, 56
      %v2886 = vadd.s32 %v2878, 64
      %v2887 = vadd.s32 %v2878, 72
      %v2888 = vadd.s32 %v2878, 80
      %v2889 = vadd.s32 %v2878, 88
      %v2890 = vadd.s32 %v2878, 96
      %v2891 = vadd.s32 %v2878, 104
      %v2892 = vadd.s32 %v2878, 112
      %v2893 = vadd.s32 %v2878, 120
      %v2894 = vadd.s32 %v2878, 128
      %v2895 = vadd.s32 %v2878, 136
      %v2896 = vadd.s32 %v2878, 144
      %v2897 = vadd.s32 %v2878, 152
      %v2898 = vadd.s32 %v2878, 160
      %v2899 = vadd.s32 %v2878, 168
      %v2900 = vadd.s32 %v2878, 176
      %v2901 = vadd.s32 %v2878, 184
      %v2902 = vadd.s32 %v2878, 192
      %v2903 = vadd.s32 %v2878, 200
      %v2904 = vadd.s32 %v2878, 208
      %v2905 = vadd.s32 %v2878, 216
      %v2906 = vadd.s32 %v2878, 224
      %v2907 = vadd.s32 %v2878, 232
      %v2908 = vadd.s32 %v2878, 240
      %v2909 = vadd.s32 %v2878, 248
      %v2910 = vadd.s32 %v2878, 256
      %v2911 = vadd.s32 %v2878, 264
      %v2912 = vadd.s32 %v2878, 272
      %v2913 = vadd.s32 %v2878, 280
      %v2914 = vadd.s32 %v2878, 288
      %v2915 = vadd.s32 %v2878, 296
      %v2916 = vadd.s32 %v2878, 304
      %v2917 = vadd.s32 %v2878, 312
      %v2918 = vadd.s32 %v2878, 320
      %v2919 = vadd.s32 %v2878, 328
      %v2920 = vadd.s32 %v2878, 336
      %v2921 = vadd.s32 %v2878, 344
      %v2922 = vadd.s32 %v2878, 352
      %v2923 = vadd.s32 %v2878, 360
      %v2924 = vadd.s32 %v2878, 368
      %v2925 = vadd.s32 %v2878, 376
      %v2926 = vadd.s32 %v2878, 384
      %v2927 = vadd.s32 %v2878, 392
      %v2928 = vadd.s32 %v2878, 400
      %v2929 = vadd.s32 %v2878, 408
      %v2930 = vadd.s32 %v2878, 416
      %v2931 = vadd.s32 %v2878, 424
      %v2932 = vadd.s32 %v2878, 432
      %v2933 = vadd.s32 %v2878, 440
      %v2934 = vadd.s32 %v2878, 448
      %v2935 = vadd.s32 %v2878, 456
      %v2936 = vadd.s32 %v2878, 464
      %v2937 = vadd.s32 %v2878, 472
      %v2938 = vadd.s32 %v2878, 480
      %v2939 = vadd.s32 %v2878, 488
      %v2940 = vadd.s32 %v2878, 496
      %v2941 = vadd.s32 %v2878, 504
      %v2942 = vlaneseq
      %v2943 = vand.u32 %v2942, 127
      %v2944 = vadd.s32 %v2943, 128
      %v2945 = vadd.s32 %v2943, 256
      %v2946 = vadd.s32 %v2943, 384
      %vm2947 = vcmp.eq.s32.totalorder %v2878, %v2943
      %vm2948 = vcmp.eq.s32.totalorder %v2878, %v2944
      %vm2949 = vcmp.eq.s32.totalorder %v2878, %v2945
      %vm2950 = vcmp.eq.s32.totalorder %v2878, %v2946
      %vm2951 = vcmp.eq.s32.totalorder %v2879, %v2943
      %vm2952 = vcmp.eq.s32.totalorder %v2879, %v2944
      %vm2953 = vcmp.eq.s32.totalorder %v2879, %v2945
      %vm2954 = vcmp.eq.s32.totalorder %v2879, %v2946
      %vm2955 = vcmp.eq.s32.totalorder %v2880, %v2943
      %vm2956 = vcmp.eq.s32.totalorder %v2880, %v2944
      %vm2957 = vcmp.eq.s32.totalorder %v2880, %v2945
      %vm2958 = vcmp.eq.s32.totalorder %v2880, %v2946
      %vm2959 = vcmp.eq.s32.totalorder %v2881, %v2943
      %vm2960 = vcmp.eq.s32.totalorder %v2881, %v2944
      %vm2961 = vcmp.eq.s32.totalorder %v2881, %v2945
      %vm2962 = vcmp.eq.s32.totalorder %v2881, %v2946
      %vm2963 = vcmp.eq.s32.totalorder %v2882, %v2943
      %vm2964 = vcmp.eq.s32.totalorder %v2882, %v2944
      %vm2965 = vcmp.eq.s32.totalorder %v2882, %v2945
      %vm2966 = vcmp.eq.s32.totalorder %v2882, %v2946
      %vm2967 = vcmp.eq.s32.totalorder %v2883, %v2943
      %vm2968 = vcmp.eq.s32.totalorder %v2883, %v2944
      %vm2969 = vcmp.eq.s32.totalorder %v2883, %v2945
      %vm2970 = vcmp.eq.s32.totalorder %v2883, %v2946
      %vm2971 = vcmp.eq.s32.totalorder %v2884, %v2943
      %vm2972 = vcmp.eq.s32.totalorder %v2884, %v2944
      %vm2973 = vcmp.eq.s32.totalorder %v2884, %v2945
      %vm2974 = vcmp.eq.s32.totalorder %v2884, %v2946
      %vm2975 = vcmp.eq.s32.totalorder %v2885, %v2943
      %vm2976 = vcmp.eq.s32.totalorder %v2885, %v2944
      %vm2977 = vcmp.eq.s32.totalorder %v2885, %v2945
      %vm2978 = vcmp.eq.s32.totalorder %v2885, %v2946
      %vm2979 = vcmp.eq.s32.totalorder %v2886, %v2943
      %vm2980 = vcmp.eq.s32.totalorder %v2886, %v2944
      %vm2981 = vcmp.eq.s32.totalorder %v2886, %v2945
      %vm2982 = vcmp.eq.s32.totalorder %v2886, %v2946
      %vm2983 = vcmp.eq.s32.totalorder %v2887, %v2943
      %vm2984 = vcmp.eq.s32.totalorder %v2887, %v2944
      %vm2985 = vcmp.eq.s32.totalorder %v2887, %v2945
      %vm2986 = vcmp.eq.s32.totalorder %v2887, %v2946
      %vm2987 = vcmp.eq.s32.totalorder %v2888, %v2943
      %vm2988 = vcmp.eq.s32.totalorder %v2888, %v2944
      %vm2989 = vcmp.eq.s32.totalorder %v2888, %v2945
      %vm2990 = vcmp.eq.s32.totalorder %v2888, %v2946
      %vm2991 = vcmp.eq.s32.totalorder %v2889, %v2943
      %vm2992 = vcmp.eq.s32.totalorder %v2889, %v2944
      %vm2993 = vcmp.eq.s32.totalorder %v2889, %v2945
      %vm2994 = vcmp.eq.s32.totalorder %v2889, %v2946
      %vm2995 = vcmp.eq.s32.totalorder %v2890, %v2943
      %vm2996 = vcmp.eq.s32.totalorder %v2890, %v2944
      %vm2997 = vcmp.eq.s32.totalorder %v2890, %v2945
      %vm2998 = vcmp.eq.s32.totalorder %v2890, %v2946
      %vm2999 = vcmp.eq.s32.totalorder %v2891, %v2943
      %vm3000 = vcmp.eq.s32.totalorder %v2891, %v2944
      %vm3001 = vcmp.eq.s32.totalorder %v2891, %v2945
      %vm3002 = vcmp.eq.s32.totalorder %v2891, %v2946
      %vm3003 = vcmp.eq.s32.totalorder %v2892, %v2943
      %vm3004 = vcmp.eq.s32.totalorder %v2892, %v2944
      %vm3005 = vcmp.eq.s32.totalorder %v2892, %v2945
      %vm3006 = vcmp.eq.s32.totalorder %v2892, %v2946
      %vm3007 = vcmp.eq.s32.totalorder %v2893, %v2943
      %vm3008 = vcmp.eq.s32.totalorder %v2893, %v2944
      %vm3009 = vcmp.eq.s32.totalorder %v2893, %v2945
      %vm3010 = vcmp.eq.s32.totalorder %v2893, %v2946
      %vm3011 = vcmp.eq.s32.totalorder %v2894, %v2943
      %vm3012 = vcmp.eq.s32.totalorder %v2894, %v2944
      %vm3013 = vcmp.eq.s32.totalorder %v2894, %v2945
      %vm3014 = vcmp.eq.s32.totalorder %v2894, %v2946
      %vm3015 = vcmp.eq.s32.totalorder %v2895, %v2943
      %vm3016 = vcmp.eq.s32.totalorder %v2895, %v2944
      %vm3017 = vcmp.eq.s32.totalorder %v2895, %v2945
      %vm3018 = vcmp.eq.s32.totalorder %v2895, %v2946
      %vm3019 = vcmp.eq.s32.totalorder %v2896, %v2943
      %vm3020 = vcmp.eq.s32.totalorder %v2896, %v2944
      %vm3021 = vcmp.eq.s32.totalorder %v2896, %v2945
      %vm3022 = vcmp.eq.s32.totalorder %v2896, %v2946
      %vm3023 = vcmp.eq.s32.totalorder %v2897, %v2943
      %vm3024 = vcmp.eq.s32.totalorder %v2897, %v2944
      %vm3025 = vcmp.eq.s32.totalorder %v2897, %v2945
      %vm3026 = vcmp.eq.s32.totalorder %v2897, %v2946
      %vm3027 = vcmp.eq.s32.totalorder %v2898, %v2943
      %vm3028 = vcmp.eq.s32.totalorder %v2898, %v2944
      %vm3029 = vcmp.eq.s32.totalorder %v2898, %v2945
      %vm3030 = vcmp.eq.s32.totalorder %v2898, %v2946
      %vm3031 = vcmp.eq.s32.totalorder %v2899, %v2943
      %vm3032 = vcmp.eq.s32.totalorder %v2899, %v2944
      %vm3033 = vcmp.eq.s32.totalorder %v2899, %v2945
      %vm3034 = vcmp.eq.s32.totalorder %v2899, %v2946
      %vm3035 = vcmp.eq.s32.totalorder %v2900, %v2943
      %vm3036 = vcmp.eq.s32.totalorder %v2900, %v2944
      %vm3037 = vcmp.eq.s32.totalorder %v2900, %v2945
      %vm3038 = vcmp.eq.s32.totalorder %v2900, %v2946
      %vm3039 = vcmp.eq.s32.totalorder %v2901, %v2943
      %vm3040 = vcmp.eq.s32.totalorder %v2901, %v2944
      %vm3041 = vcmp.eq.s32.totalorder %v2901, %v2945
      %vm3042 = vcmp.eq.s32.totalorder %v2901, %v2946
      %vm3043 = vcmp.eq.s32.totalorder %v2902, %v2943
      %vm3044 = vcmp.eq.s32.totalorder %v2902, %v2944
      %vm3045 = vcmp.eq.s32.totalorder %v2902, %v2945
      %vm3046 = vcmp.eq.s32.totalorder %v2902, %v2946
      %vm3047 = vcmp.eq.s32.totalorder %v2903, %v2943
      %vm3048 = vcmp.eq.s32.totalorder %v2903, %v2944
      %vm3049 = vcmp.eq.s32.totalorder %v2903, %v2945
      %vm3050 = vcmp.eq.s32.totalorder %v2903, %v2946
      %vm3051 = vcmp.eq.s32.totalorder %v2904, %v2943
      %vm3052 = vcmp.eq.s32.totalorder %v2904, %v2944
      %vm3053 = vcmp.eq.s32.totalorder %v2904, %v2945
      %vm3054 = vcmp.eq.s32.totalorder %v2904, %v2946
      %vm3055 = vcmp.eq.s32.totalorder %v2905, %v2943
      %vm3056 = vcmp.eq.s32.totalorder %v2905, %v2944
      %vm3057 = vcmp.eq.s32.totalorder %v2905, %v2945
      %vm3058 = vcmp.eq.s32.totalorder %v2905, %v2946
      %vm3059 = vcmp.eq.s32.totalorder %v2906, %v2943
      %vm3060 = vcmp.eq.s32.totalorder %v2906, %v2944
      %vm3061 = vcmp.eq.s32.totalorder %v2906, %v2945
      %vm3062 = vcmp.eq.s32.totalorder %v2906, %v2946
      %vm3063 = vcmp.eq.s32.totalorder %v2907, %v2943
      %vm3064 = vcmp.eq.s32.totalorder %v2907, %v2944
      %vm3065 = vcmp.eq.s32.totalorder %v2907, %v2945
      %vm3066 = vcmp.eq.s32.totalorder %v2907, %v2946
      %vm3067 = vcmp.eq.s32.totalorder %v2908, %v2943
      %vm3068 = vcmp.eq.s32.totalorder %v2908, %v2944
      %vm3069 = vcmp.eq.s32.totalorder %v2908, %v2945
      %vm3070 = vcmp.eq.s32.totalorder %v2908, %v2946
      %vm3071 = vcmp.eq.s32.totalorder %v2909, %v2943
      %vm3072 = vcmp.eq.s32.totalorder %v2909, %v2944
      %vm3073 = vcmp.eq.s32.totalorder %v2909, %v2945
      %vm3074 = vcmp.eq.s32.totalorder %v2909, %v2946
      %vm3075 = vcmp.eq.s32.totalorder %v2910, %v2943
      %vm3076 = vcmp.eq.s32.totalorder %v2910, %v2944
      %vm3077 = vcmp.eq.s32.totalorder %v2910, %v2945
      %vm3078 = vcmp.eq.s32.totalorder %v2910, %v2946
      %vm3079 = vcmp.eq.s32.totalorder %v2911, %v2943
      %vm3080 = vcmp.eq.s32.totalorder %v2911, %v2944
      %vm3081 = vcmp.eq.s32.totalorder %v2911, %v2945
      %vm3082 = vcmp.eq.s32.totalorder %v2911, %v2946
      %vm3083 = vcmp.eq.s32.totalorder %v2912, %v2943
      %vm3084 = vcmp.eq.s32.totalorder %v2912, %v2944
      %vm3085 = vcmp.eq.s32.totalorder %v2912, %v2945
      %vm3086 = vcmp.eq.s32.totalorder %v2912, %v2946
      %vm3087 = vcmp.eq.s32.totalorder %v2913, %v2943
      %vm3088 = vcmp.eq.s32.totalorder %v2913, %v2944
      %vm3089 = vcmp.eq.s32.totalorder %v2913, %v2945
      %vm3090 = vcmp.eq.s32.totalorder %v2913, %v2946
      %vm3091 = vcmp.eq.s32.totalorder %v2914, %v2943
      %vm3092 = vcmp.eq.s32.totalorder %v2914, %v2944
      %vm3093 = vcmp.eq.s32.totalorder %v2914, %v2945
      %vm3094 = vcmp.eq.s32.totalorder %v2914, %v2946
      %vm3095 = vcmp.eq.s32.totalorder %v2915, %v2943
      %vm3096 = vcmp.eq.s32.totalorder %v2915, %v2944
      %vm3097 = vcmp.eq.s32.totalorder %v2915, %v2945
      %vm3098 = vcmp.eq.s32.totalorder %v2915, %v2946
      %vm3099 = vcmp.eq.s32.totalorder %v2916, %v2943
      %vm3100 = vcmp.eq.s32.totalorder %v2916, %v2944
      %vm3101 = vcmp.eq.s32.totalorder %v2916, %v2945
      %vm3102 = vcmp.eq.s32.totalorder %v2916, %v2946
      %vm3103 = vcmp.eq.s32.totalorder %v2917, %v2943
      %vm3104 = vcmp.eq.s32.totalorder %v2917, %v2944
      %vm3105 = vcmp.eq.s32.totalorder %v2917, %v2945
      %vm3106 = vcmp.eq.s32.totalorder %v2917, %v2946
      %vm3107 = vcmp.eq.s32.totalorder %v2918, %v2943
      %vm3108 = vcmp.eq.s32.totalorder %v2918, %v2944
      %vm3109 = vcmp.eq.s32.totalorder %v2918, %v2945
      %vm3110 = vcmp.eq.s32.totalorder %v2918, %v2946
      %vm3111 = vcmp.eq.s32.totalorder %v2919, %v2943
      %vm3112 = vcmp.eq.s32.totalorder %v2919, %v2944
      %vm3113 = vcmp.eq.s32.totalorder %v2919, %v2945
      %vm3114 = vcmp.eq.s32.totalorder %v2919, %v2946
      %vm3115 = vcmp.eq.s32.totalorder %v2920, %v2943
      %vm3116 = vcmp.eq.s32.totalorder %v2920, %v2944
      %vm3117 = vcmp.eq.s32.totalorder %v2920, %v2945
      %vm3118 = vcmp.eq.s32.totalorder %v2920, %v2946
      %vm3119 = vcmp.eq.s32.totalorder %v2921, %v2943
      %vm3120 = vcmp.eq.s32.totalorder %v2921, %v2944
      %vm3121 = vcmp.eq.s32.totalorder %v2921, %v2945
      %vm3122 = vcmp.eq.s32.totalorder %v2921, %v2946
      %vm3123 = vcmp.eq.s32.totalorder %v2922, %v2943
      %vm3124 = vcmp.eq.s32.totalorder %v2922, %v2944
      %vm3125 = vcmp.eq.s32.totalorder %v2922, %v2945
      %vm3126 = vcmp.eq.s32.totalorder %v2922, %v2946
      %vm3127 = vcmp.eq.s32.totalorder %v2923, %v2943
      %vm3128 = vcmp.eq.s32.totalorder %v2923, %v2944
      %vm3129 = vcmp.eq.s32.totalorder %v2923, %v2945
      %vm3130 = vcmp.eq.s32.totalorder %v2923, %v2946
      %vm3131 = vcmp.eq.s32.totalorder %v2924, %v2943
      %vm3132 = vcmp.eq.s32.totalorder %v2924, %v2944
      %vm3133 = vcmp.eq.s32.totalorder %v2924, %v2945
      %vm3134 = vcmp.eq.s32.totalorder %v2924, %v2946
      %vm3135 = vcmp.eq.s32.totalorder %v2925, %v2943
      %vm3136 = vcmp.eq.s32.totalorder %v2925, %v2944
      %vm3137 = vcmp.eq.s32.totalorder %v2925, %v2945
      %vm3138 = vcmp.eq.s32.totalorder %v2925, %v2946
      %vm3139 = vcmp.eq.s32.totalorder %v2926, %v2943
      %vm3140 = vcmp.eq.s32.totalorder %v2926, %v2944
      %vm3141 = vcmp.eq.s32.totalorder %v2926, %v2945
      %vm3142 = vcmp.eq.s32.totalorder %v2926, %v2946
      %vm3143 = vcmp.eq.s32.totalorder %v2927, %v2943
      %vm3144 = vcmp.eq.s32.totalorder %v2927, %v2944
      %vm3145 = vcmp.eq.s32.totalorder %v2927, %v2945
      %vm3146 = vcmp.eq.s32.totalorder %v2927, %v2946
      %vm3147 = vcmp.eq.s32.totalorder %v2928, %v2943
      %vm3148 = vcmp.eq.s32.totalorder %v2928, %v2944
      %vm3149 = vcmp.eq.s32.totalorder %v2928, %v2945
      %vm3150 = vcmp.eq.s32.totalorder %v2928, %v2946
      %vm3151 = vcmp.eq.s32.totalorder %v2929, %v2943
      %vm3152 = vcmp.eq.s32.totalorder %v2929, %v2944
      %vm3153 = vcmp.eq.s32.totalorder %v2929, %v2945
      %vm3154 = vcmp.eq.s32.totalorder %v2929, %v2946
      %vm3155 = vcmp.eq.s32.totalorder %v2930, %v2943
      %vm3156 = vcmp.eq.s32.totalorder %v2930, %v2944
      %vm3157 = vcmp.eq.s32.totalorder %v2930, %v2945
      %vm3158 = vcmp.eq.s32.totalorder %v2930, %v2946
      %vm3159 = vcmp.eq.s32.totalorder %v2931, %v2943
      %vm3160 = vcmp.eq.s32.totalorder %v2931, %v2944
      %vm3161 = vcmp.eq.s32.totalorder %v2931, %v2945
      %vm3162 = vcmp.eq.s32.totalorder %v2931, %v2946
      %vm3163 = vcmp.eq.s32.totalorder %v2932, %v2943
      %vm3164 = vcmp.eq.s32.totalorder %v2932, %v2944
      %vm3165 = vcmp.eq.s32.totalorder %v2932, %v2945
      %vm3166 = vcmp.eq.s32.totalorder %v2932, %v2946
      %vm3167 = vcmp.eq.s32.totalorder %v2933, %v2943
      %vm3168 = vcmp.eq.s32.totalorder %v2933, %v2944
      %vm3169 = vcmp.eq.s32.totalorder %v2933, %v2945
      %vm3170 = vcmp.eq.s32.totalorder %v2933, %v2946
      %vm3171 = vcmp.eq.s32.totalorder %v2934, %v2943
      %vm3172 = vcmp.eq.s32.totalorder %v2934, %v2944
      %vm3173 = vcmp.eq.s32.totalorder %v2934, %v2945
      %vm3174 = vcmp.eq.s32.totalorder %v2934, %v2946
      %vm3175 = vcmp.eq.s32.totalorder %v2935, %v2943
      %vm3176 = vcmp.eq.s32.totalorder %v2935, %v2944
      %vm3177 = vcmp.eq.s32.totalorder %v2935, %v2945
      %vm3178 = vcmp.eq.s32.totalorder %v2935, %v2946
      %vm3179 = vcmp.eq.s32.totalorder %v2936, %v2943
      %vm3180 = vcmp.eq.s32.totalorder %v2936, %v2944
      %vm3181 = vcmp.eq.s32.totalorder %v2936, %v2945
      %vm3182 = vcmp.eq.s32.totalorder %v2936, %v2946
      %vm3183 = vcmp.eq.s32.totalorder %v2937, %v2943
      %vm3184 = vcmp.eq.s32.totalorder %v2937, %v2944
      %vm3185 = vcmp.eq.s32.totalorder %v2937, %v2945
      %vm3186 = vcmp.eq.s32.totalorder %v2937, %v2946
      %vm3187 = vcmp.eq.s32.totalorder %v2938, %v2943
      %vm3188 = vcmp.eq.s32.totalorder %v2938, %v2944
      %vm3189 = vcmp.eq.s32.totalorder %v2938, %v2945
      %vm3190 = vcmp.eq.s32.totalorder %v2938, %v2946
      %vm3191 = vcmp.eq.s32.totalorder %v2939, %v2943
      %vm3192 = vcmp.eq.s32.totalorder %v2939, %v2944
      %vm3193 = vcmp.eq.s32.totalorder %v2939, %v2945
      %vm3194 = vcmp.eq.s32.totalorder %v2939, %v2946
      %vm3195 = vcmp.eq.s32.totalorder %v2940, %v2943
      %vm3196 = vcmp.eq.s32.totalorder %v2940, %v2944
      %vm3197 = vcmp.eq.s32.totalorder %v2940, %v2945
      %vm3198 = vcmp.eq.s32.totalorder %v2940, %v2946
      %vm3199 = vcmp.eq.s32.totalorder %v2941, %v2943
      %vm3200 = vcmp.eq.s32.totalorder %v2941, %v2944
      %vm3201 = vcmp.eq.s32.totalorder %v2941, %v2945
      %vm3202 = vcmp.eq.s32.totalorder %v2941, %v2946
      %v3203 = vsel %vm2947, -inf, %v2617
      %v3204 = vsel %vm2948, -inf, %v2618
      %v3205 = vsel %vm2949, -inf, %v2619
      %v3206 = vsel %vm2950, -inf, %v2620
      %v3207 = vsel %vm2951, -inf, %v2621
      %v3208 = vsel %vm2952, -inf, %v2622
      %v3209 = vsel %vm2953, -inf, %v2623
      %v3210 = vsel %vm2954, -inf, %v2624
      %v3211 = vsel %vm2955, -inf, %v2625
      %v3212 = vsel %vm2956, -inf, %v2626
      %v3213 = vsel %vm2957, -inf, %v2627
      %v3214 = vsel %vm2958, -inf, %v2628
      %v3215 = vsel %vm2959, -inf, %v2629
      %v3216 = vsel %vm2960, -inf, %v2630
      %v3217 = vsel %vm2961, -inf, %v2631
      %v3218 = vsel %vm2962, -inf, %v2632
      %v3219 = vsel %vm2963, -inf, %v2633
      %v3220 = vsel %vm2964, -inf, %v2634
      %v3221 = vsel %vm2965, -inf, %v2635
      %v3222 = vsel %vm2966, -inf, %v2636
      %v3223 = vsel %vm2967, -inf, %v2637
      %v3224 = vsel %vm2968, -inf, %v2638
      %v3225 = vsel %vm2969, -inf, %v2639
      %v3226 = vsel %vm2970, -inf, %v2640
      %v3227 = vsel %vm2971, -inf, %v2641
      %v3228 = vsel %vm2972, -inf, %v2642
      %v3229 = vsel %vm2973, -inf, %v2643
      %v3230 = vsel %vm2974, -inf, %v2644
      %v3231 = vsel %vm2975, -inf, %v2645
      %v3232 = vsel %vm2976, -inf, %v2646
      %v3233 = vsel %vm2977, -inf, %v2647
      %v3234 = vsel %vm2978, -inf, %v2648
      %v3235 = vsel %vm2979, -inf, %v2649
      %v3236 = vsel %vm2980, -inf, %v2650
      %v3237 = vsel %vm2981, -inf, %v2651
      %v3238 = vsel %vm2982, -inf, %v2652
      %v3239 = vsel %vm2983, -inf, %v2653
      %v3240 = vsel %vm2984, -inf, %v2654
      %v3241 = vsel %vm2985, -inf, %v2655
      %v3242 = vsel %vm2986, -inf, %v2656
      %v3243 = vsel %vm2987, -inf, %v2657
      %v3244 = vsel %vm2988, -inf, %v2658
      %v3245 = vsel %vm2989, -inf, %v2659
      %v3246 = vsel %vm2990, -inf, %v2660
      %v3247 = vsel %vm2991, -inf, %v2661
      %v3248 = vsel %vm2992, -inf, %v2662
      %v3249 = vsel %vm2993, -inf, %v2663
      %v3250 = vsel %vm2994, -inf, %v2664
      %v3251 = vsel %vm2995, -inf, %v2665
      %v3252 = vsel %vm2996, -inf, %v2666
      %v3253 = vsel %vm2997, -inf, %v2667
      %v3254 = vsel %vm2998, -inf, %v2668
      %v3255 = vsel %vm2999, -inf, %v2669
      %v3256 = vsel %vm3000, -inf, %v2670
      %v3257 = vsel %vm3001, -inf, %v2671
      %v3258 = vsel %vm3002, -inf, %v2672
      %v3259 = vsel %vm3003, -inf, %v2673
      %v3260 = vsel %vm3004, -inf, %v2674
      %v3261 = vsel %vm3005, -inf, %v2675
      %v3262 = vsel %vm3006, -inf, %v2676
      %v3263 = vsel %vm3007, -inf, %v2677
      %v3264 = vsel %vm3008, -inf, %v2678
      %v3265 = vsel %vm3009, -inf, %v2679
      %v3266 = vsel %vm3010, -inf, %v2680
      %v3267 = vsel %vm3011, -inf, %v2681
      %v3268 = vsel %vm3012, -inf, %v2682
      %v3269 = vsel %vm3013, -inf, %v2683
      %v3270 = vsel %vm3014, -inf, %v2684
      %v3271 = vsel %vm3015, -inf, %v2685
      %v3272 = vsel %vm3016, -inf, %v2686
      %v3273 = vsel %vm3017, -inf, %v2687
      %v3274 = vsel %vm3018, -inf, %v2688
      %v3275 = vsel %vm3019, -inf, %v2689
      %v3276 = vsel %vm3020, -inf, %v2690
      %v3277 = vsel %vm3021, -inf, %v2691
      %v3278 = vsel %vm3022, -inf, %v2692
      %v3279 = vsel %vm3023, -inf, %v2693
      %v3280 = vsel %vm3024, -inf, %v2694
      %v3281 = vsel %vm3025, -inf, %v2695
      %v3282 = vsel %vm3026, -inf, %v2696
      %v3283 = vsel %vm3027, -inf, %v2697
      %v3284 = vsel %vm3028, -inf, %v2698
      %v3285 = vsel %vm3029, -inf, %v2699
      %v3286 = vsel %vm3030, -inf, %v2700
      %v3287 = vsel %vm3031, -inf, %v2701
      %v3288 = vsel %vm3032, -inf, %v2702
      %v3289 = vsel %vm3033, -inf, %v2703
      %v3290 = vsel %vm3034, -inf, %v2704
      %v3291 = vsel %vm3035, -inf, %v2705
      %v3292 = vsel %vm3036, -inf, %v2706
      %v3293 = vsel %vm3037, -inf, %v2707
      %v3294 = vsel %vm3038, -inf, %v2708
      %v3295 = vsel %vm3039, -inf, %v2709
      %v3296 = vsel %vm3040, -inf, %v2710
      %v3297 = vsel %vm3041, -inf, %v2711
      %v3298 = vsel %vm3042, -inf, %v2712
      %v3299 = vsel %vm3043, -inf, %v2713
      %v3300 = vsel %vm3044, -inf, %v2714
      %v3301 = vsel %vm3045, -inf, %v2715
      %v3302 = vsel %vm3046, -inf, %v2716
      %v3303 = vsel %vm3047, -inf, %v2717
      %v3304 = vsel %vm3048, -inf, %v2718
      %v3305 = vsel %vm3049, -inf, %v2719
      %v3306 = vsel %vm3050, -inf, %v2720
      %v3307 = vsel %vm3051, -inf, %v2721
      %v3308 = vsel %vm3052, -inf, %v2722
      %v3309 = vsel %vm3053, -inf, %v2723
      %v3310 = vsel %vm3054, -inf, %v2724
      %v3311 = vsel %vm3055, -inf, %v2725
      %v3312 = vsel %vm3056, -inf, %v2726
      %v3313 = vsel %vm3057, -inf, %v2727
      %v3314 = vsel %vm3058, -inf, %v2728
      %v3315 = vsel %vm3059, -inf, %v2729
      %v3316 = vsel %vm3060, -inf, %v2730
      %v3317 = vsel %vm3061, -inf, %v2731
      %v3318 = vsel %vm3062, -inf, %v2732
      %v3319 = vsel %vm3063, -inf, %v2733
      %v3320 = vsel %vm3064, -inf, %v2734
      %v3321 = vsel %vm3065, -inf, %v2735
      %v3322 = vsel %vm3066, -inf, %v2736
      %v3323 = vsel %vm3067, -inf, %v2737
      %v3324 = vsel %vm3068, -inf, %v2738
      %v3325 = vsel %vm3069, -inf, %v2739
      %v3326 = vsel %vm3070, -inf, %v2740
      %v3327 = vsel %vm3071, -inf, %v2741
      %v3328 = vsel %vm3072, -inf, %v2742
      %v3329 = vsel %vm3073, -inf, %v2743
      %v3330 = vsel %vm3074, -inf, %v2744
      %v3331 = vsel %vm3075, -inf, %v2745
      %v3332 = vsel %vm3076, -inf, %v2746
      %v3333 = vsel %vm3077, -inf, %v2747
      %v3334 = vsel %vm3078, -inf, %v2748
      %v3335 = vsel %vm3079, -inf, %v2749
      %v3336 = vsel %vm3080, -inf, %v2750
      %v3337 = vsel %vm3081, -inf, %v2751
      %v3338 = vsel %vm3082, -inf, %v2752
      %v3339 = vsel %vm3083, -inf, %v2753
      %v3340 = vsel %vm3084, -inf, %v2754
      %v3341 = vsel %vm3085, -inf, %v2755
      %v3342 = vsel %vm3086, -inf, %v2756
      %v3343 = vsel %vm3087, -inf, %v2757
      %v3344 = vsel %vm3088, -inf, %v2758
      %v3345 = vsel %vm3089, -inf, %v2759
      %v3346 = vsel %vm3090, -inf, %v2760
      %v3347 = vsel %vm3091, -inf, %v2761
      %v3348 = vsel %vm3092, -inf, %v2762
      %v3349 = vsel %vm3093, -inf, %v2763
      %v3350 = vsel %vm3094, -inf, %v2764
      %v3351 = vsel %vm3095, -inf, %v2765
      %v3352 = vsel %vm3096, -inf, %v2766
      %v3353 = vsel %vm3097, -inf, %v2767
      %v3354 = vsel %vm3098, -inf, %v2768
      %v3355 = vsel %vm3099, -inf, %v2769
      %v3356 = vsel %vm3100, -inf, %v2770
      %v3357 = vsel %vm3101, -inf, %v2771
      %v3358 = vsel %vm3102, -inf, %v2772
      %v3359 = vsel %vm3103, -inf, %v2773
      %v3360 = vsel %vm3104, -inf, %v2774
      %v3361 = vsel %vm3105, -inf, %v2775
      %v3362 = vsel %vm3106, -inf, %v2776
      %v3363 = vsel %vm3107, -inf, %v2777
      %v3364 = vsel %vm3108, -inf, %v2778
      %v3365 = vsel %vm3109, -inf, %v2779
      %v3366 = vsel %vm3110, -inf, %v2780
      %v3367 = vsel %vm3111, -inf, %v2781
      %v3368 = vsel %vm3112, -inf, %v2782
      %v3369 = vsel %vm3113, -inf, %v2783
      %v3370 = vsel %vm3114, -inf, %v2784
      %v3371 = vsel %vm3115, -inf, %v2785
      %v3372 = vsel %vm3116, -inf, %v2786
      %v3373 = vsel %vm3117, -inf, %v2787
      %v3374 = vsel %vm3118, -inf, %v2788
      %v3375 = vsel %vm3119, -inf, %v2789
      %v3376 = vsel %vm3120, -inf, %v2790
      %v3377 = vsel %vm3121, -inf, %v2791
      %v3378 = vsel %vm3122, -inf, %v2792
      %v3379 = vsel %vm3123, -inf, %v2793
      %v3380 = vsel %vm3124, -inf, %v2794
      %v3381 = vsel %vm3125, -inf, %v2795
      %v3382 = vsel %vm3126, -inf, %v2796
      %v3383 = vsel %vm3127, -inf, %v2797
      %v3384 = vsel %vm3128, -inf, %v2798
      %v3385 = vsel %vm3129, -inf, %v2799
      %v3386 = vsel %vm3130, -inf, %v2800
      %v3387 = vsel %vm3131, -inf, %v2801
      %v3388 = vsel %vm3132, -inf, %v2802
      %v3389 = vsel %vm3133, -inf, %v2803
      %v3390 = vsel %vm3134, -inf, %v2804
      %v3391 = vsel %vm3135, -inf, %v2805
      %v3392 = vsel %vm3136, -inf, %v2806
      %v3393 = vsel %vm3137, -inf, %v2807
      %v3394 = vsel %vm3138, -inf, %v2808
      %v3395 = vsel %vm3139, -inf, %v2809
      %v3396 = vsel %vm3140, -inf, %v2810
      %v3397 = vsel %vm3141, -inf, %v2811
      %v3398 = vsel %vm3142, -inf, %v2812
      %v3399 = vsel %vm3143, -inf, %v2813
      %v3400 = vsel %vm3144, -inf, %v2814
      %v3401 = vsel %vm3145, -inf, %v2815
      %v3402 = vsel %vm3146, -inf, %v2816
      %v3403 = vsel %vm3147, -inf, %v2817
      %v3404 = vsel %vm3148, -inf, %v2818
      %v3405 = vsel %vm3149, -inf, %v2819
      %v3406 = vsel %vm3150, -inf, %v2820
      %v3407 = vsel %vm3151, -inf, %v2821
      %v3408 = vsel %vm3152, -inf, %v2822
      %v3409 = vsel %vm3153, -inf, %v2823
      %v3410 = vsel %vm3154, -inf, %v2824
      %v3411 = vsel %vm3155, -inf, %v2825
      %v3412 = vsel %vm3156, -inf, %v2826
      %v3413 = vsel %vm3157, -inf, %v2827
      %v3414 = vsel %vm3158, -inf, %v2828
      %v3415 = vsel %vm3159, -inf, %v2829
      %v3416 = vsel %vm3160, -inf, %v2830
      %v3417 = vsel %vm3161, -inf, %v2831
      %v3418 = vsel %vm3162, -inf, %v2832
      %v3419 = vsel %vm3163, -inf, %v2833
      %v3420 = vsel %vm3164, -inf, %v2834
      %v3421 = vsel %vm3165, -inf, %v2835
      %v3422 = vsel %vm3166, -inf, %v2836
      %v3423 = vsel %vm3167, -inf, %v2837
      %v3424 = vsel %vm3168, -inf, %v2838
      %v3425 = vsel %vm3169, -inf, %v2839
      %v3426 = vsel %vm3170, -inf, %v2840
      %v3427 = vsel %vm3171, -inf, %v2841
      %v3428 = vsel %vm3172, -inf, %v2842
      %v3429 = vsel %vm3173, -inf, %v2843
      %v3430 = vsel %vm3174, -inf, %v2844
      %v3431 = vsel %vm3175, -inf, %v2845
      %v3432 = vsel %vm3176, -inf, %v2846
      %v3433 = vsel %vm3177, -inf, %v2847
      %v3434 = vsel %vm3178, -inf, %v2848
      %v3435 = vsel %vm3179, -inf, %v2849
      %v3436 = vsel %vm3180, -inf, %v2850
      %v3437 = vsel %vm3181, -inf, %v2851
      %v3438 = vsel %vm3182, -inf, %v2852
      %v3439 = vsel %vm3183, -inf, %v2853
      %v3440 = vsel %vm3184, -inf, %v2854
      %v3441 = vsel %vm3185, -inf, %v2855
      %v3442 = vsel %vm3186, -inf, %v2856
      %v3443 = vsel %vm3187, -inf, %v2857
      %v3444 = vsel %vm3188, -inf, %v2858
      %v3445 = vsel %vm3189, -inf, %v2859
      %v3446 = vsel %vm3190, -inf, %v2860
      %v3447 = vsel %vm3191, -inf, %v2861
      %v3448 = vsel %vm3192, -inf, %v2862
      %v3449 = vsel %vm3193, -inf, %v2863
      %v3450 = vsel %vm3194, -inf, %v2864
      %v3451 = vsel %vm3195, -inf, %v2865
      %v3452 = vsel %vm3196, -inf, %v2866
      %v3453 = vsel %vm3197, -inf, %v2867
      %v3454 = vsel %vm3198, -inf, %v2868
      %v3455 = vsel %vm3199, -inf, %v2869
      %v3456 = vsel %vm3200, -inf, %v2870
      %v3457 = vsel %vm3201, -inf, %v2871
      %v3458 = vsel %vm3202, -inf, %v2872
      %3459 = vst [vmem:[#allocation2] sm:$0xff] %v3203
      %3460 = vst [vmem:[#allocation2 + $0x8] sm:$0xff] %v3204
      %3461 = vst [vmem:[#allocation2 + $0x10] sm:$0xff] %v3205
      %3462 = vst [vmem:[#allocation2 + $0x18] sm:$0xff] %v3206
      %3463 = vst [vmem:[#allocation2 + $0x20] sm:$0xff] %v3207
      %3464 = vst [vmem:[#allocation2 + $0x28] sm:$0xff] %v3208
      %3465 = vst [vmem:[#allocation2 + $0x30] sm:$0xff] %v3209
      %3466 = vst [vmem:[#allocation2 + $0x38] sm:$0xff] %v3210
      %3467 = vst [vmem:[#allocation2 + $0x40] sm:$0xff] %v3211
      %3468 = vst [vmem:[#allocation2 + $0x48] sm:$0xff] %v3212
      %3469 = vst [vmem:[#allocation2 + $0x50] sm:$0xff] %v3213
      %3470 = vst [vmem:[#allocation2 + $0x58] sm:$0xff] %v3214
      %3471 = vst [vmem:[#allocation2 + $0x60] sm:$0xff] %v3215
      %3472 = vst [vmem:[#allocation2 + $0x68] sm:$0xff] %v3216
      %3473 = vst [vmem:[#allocation2 + $0x70] sm:$0xff] %v3217
      %3474 = vst [vmem:[#allocation2 + $0x78] sm:$0xff] %v3218
      %3475 = vst [vmem:[#allocation2 + $0x80] sm:$0xff] %v3219
      %3476 = vst [vmem:[#allocation2 + $0x88] sm:$0xff] %v3220
      %3477 = vst [vmem:[#allocation2 + $0x90] sm:$0xff] %v3221
      %3478 = vst [vmem:[#allocation2 + $0x98] sm:$0xff] %v3222
      %3479 = vst [vmem:[#allocation2 + $0xa0] sm:$0xff] %v3223
      %3480 = vst [vmem:[#allocation2 + $0xa8] sm:$0xff] %v3224
      %3481 = vst [vmem:[#allocation2 + $0xb0] sm:$0xff] %v3225
      %3482 = vst [vmem:[#allocation2 + $0xb8] sm:$0xff] %v3226
      %3483 = vst [vmem:[#allocation2 + $0xc0] sm:$0xff] %v3227
      %3484 = vst [vmem:[#allocation2 + $0xc8] sm:$0xff] %v3228
      %3485 = vst [vmem:[#allocation2 + $0xd0] sm:$0xff] %v3229
      %3486 = vst [vmem:[#allocation2 + $0xd8] sm:$0xff] %v3230
      %3487 = vst [vmem:[#allocation2 + $0xe0] sm:$0xff] %v3231
      %3488 = vst [vmem:[#allocation2 + $0xe8] sm:$0xff] %v3232
      %3489 = vst [vmem:[#allocation2 + $0xf0] sm:$0xff] %v3233
      %3490 = vst [vmem:[#allocation2 + $0xf8] sm:$0xff] %v3234
      %3491 = vst [vmem:[#allocation2 + $0x100] sm:$0xff] %v3235
      %3492 = vst [vmem:[#allocation2 + $0x108] sm:$0xff] %v3236
      %3493 = vst [vmem:[#allocation2 + $0x110] sm:$0xff] %v3237
      %3494 = vst [vmem:[#allocation2 + $0x118] sm:$0xff] %v3238
      %3495 = vst [vmem:[#allocation2 + $0x120] sm:$0xff] %v3239
      %3496 = vst [vmem:[#allocation2 + $0x128] sm:$0xff] %v3240
      %3497 = vst [vmem:[#allocation2 + $0x130] sm:$0xff] %v3241
      %3498 = vst [vmem:[#allocation2 + $0x138] sm:$0xff] %v3242
      %3499 = vst [vmem:[#allocation2 + $0x140] sm:$0xff] %v3243
      %3500 = vst [vmem:[#allocation2 + $0x148] sm:$0xff] %v3244
      %3501 = vst [vmem:[#allocation2 + $0x150] sm:$0xff] %v3245
      %3502 = vst [vmem:[#allocation2 + $0x158] sm:$0xff] %v3246
      %3503 = vst [vmem:[#allocation2 + $0x160] sm:$0xff] %v3247
      %3504 = vst [vmem:[#allocation2 + $0x168] sm:$0xff] %v3248
      %3505 = vst [vmem:[#allocation2 + $0x170] sm:$0xff] %v3249
      %3506 = vst [vmem:[#allocation2 + $0x178] sm:$0xff] %v3250
      %3507 = vst [vmem:[#allocation2 + $0x180] sm:$0xff] %v3251
      %3508 = vst [vmem:[#allocation2 + $0x188] sm:$0xff] %v3252
      %3509 = vst [vmem:[#allocation2 + $0x190] sm:$0xff] %v3253
      %3510 = vst [vmem:[#allocation2 + $0x198] sm:$0xff] %v3254
      %3511 = vst [vmem:[#allocation2 + $0x1a0] sm:$0xff] %v3255
      %3512 = vst [vmem:[#allocation2 + $0x1a8] sm:$0xff] %v3256
      %3513 = vst [vmem:[#allocation2 + $0x1b0] sm:$0xff] %v3257
      %3514 = vst [vmem:[#allocation2 + $0x1b8] sm:$0xff] %v3258
      %3515 = vst [vmem:[#allocation2 + $0x1c0] sm:$0xff] %v3259
      %3516 = vst [vmem:[#allocation2 + $0x1c8] sm:$0xff] %v3260
      %3517 = vst [vmem:[#allocation2 + $0x1d0] sm:$0xff] %v3261
      %3518 = vst [vmem:[#allocation2 + $0x1d8] sm:$0xff] %v3262
      %3519 = vst [vmem:[#allocation2 + $0x1e0] sm:$0xff] %v3263
      %3520 = vst [vmem:[#allocation2 + $0x1e8] sm:$0xff] %v3264
      %3521 = vst [vmem:[#allocation2 + $0x1f0] sm:$0xff] %v3265
      %3522 = vst [vmem:[#allocation2 + $0x1f8] sm:$0xff] %v3266
      %3523 = vst [vmem:[#allocation2 + $0x200] sm:$0xff] %v3267
      %3524 = vst [vmem:[#allocation2 + $0x208] sm:$0xff] %v3268
      %3525 = vst [vmem:[#allocation2 + $0x210] sm:$0xff] %v3269
      %3526 = vst [vmem:[#allocation2 + $0x218] sm:$0xff] %v3270
      %3527 = vst [vmem:[#allocation2 + $0x220] sm:$0xff] %v3271
      %3528 = vst [vmem:[#allocation2 + $0x228] sm:$0xff] %v3272
      %3529 = vst [vmem:[#allocation2 + $0x230] sm:$0xff] %v3273
      %3530 = vst [vmem:[#allocation2 + $0x238] sm:$0xff] %v3274
      %3531 = vst [vmem:[#allocation2 + $0x240] sm:$0xff] %v3275
      %3532 = vst [vmem:[#allocation2 + $0x248] sm:$0xff] %v3276
      %3533 = vst [vmem:[#allocation2 + $0x250] sm:$0xff] %v3277
      %3534 = vst [vmem:[#allocation2 + $0x258] sm:$0xff] %v3278
      %3535 = vst [vmem:[#allocation2 + $0x260] sm:$0xff] %v3279
      %3536 = vst [vmem:[#allocation2 + $0x268] sm:$0xff] %v3280
      %3537 = vst [vmem:[#allocation2 + $0x270] sm:$0xff] %v3281
      %3538 = vst [vmem:[#allocation2 + $0x278] sm:$0xff] %v3282
      %3539 = vst [vmem:[#allocation2 + $0x280] sm:$0xff] %v3283
      %3540 = vst [vmem:[#allocation2 + $0x288] sm:$0xff] %v3284
      %3541 = vst [vmem:[#allocation2 + $0x290] sm:$0xff] %v3285
      %3542 = vst [vmem:[#allocation2 + $0x298] sm:$0xff] %v3286
      %3543 = vst [vmem:[#allocation2 + $0x2a0] sm:$0xff] %v3287
      %3544 = vst [vmem:[#allocation2 + $0x2a8] sm:$0xff] %v3288
      %3545 = vst [vmem:[#allocation2 + $0x2b0] sm:$0xff] %v3289
      %3546 = vst [vmem:[#allocation2 + $0x2b8] sm:$0xff] %v3290
      %3547 = vst [vmem:[#allocation2 + $0x2c0] sm:$0xff] %v3291
      %3548 = vst [vmem:[#allocation2 + $0x2c8] sm:$0xff] %v3292
      %3549 = vst [vmem:[#allocation2 + $0x2d0] sm:$0xff] %v3293
      %3550 = vst [vmem:[#allocation2 + $0x2d8] sm:$0xff] %v3294
      %3551 = vst [vmem:[#allocation2 + $0x2e0] sm:$0xff] %v3295
      %3552 = vst [vmem:[#allocation2 + $0x2e8] sm:$0xff] %v3296
      %3553 = vst [vmem:[#allocation2 + $0x2f0] sm:$0xff] %v3297
      %3554 = vst [vmem:[#allocation2 + $0x2f8] sm:$0xff] %v3298
      %3555 = vst [vmem:[#allocation2 + $0x300] sm:$0xff] %v3299
      %3556 = vst [vmem:[#allocation2 + $0x308] sm:$0xff] %v3300
      %3557 = vst [vmem:[#allocation2 + $0x310] sm:$0xff] %v3301
      %3558 = vst [vmem:[#allocation2 + $0x318] sm:$0xff] %v3302
      %3559 = vst [vmem:[#allocation2 + $0x320] sm:$0xff] %v3303
      %3560 = vst [vmem:[#allocation2 + $0x328] sm:$0xff] %v3304
      %3561 = vst [vmem:[#allocation2 + $0x330] sm:$0xff] %v3305
      %3562 = vst [vmem:[#allocation2 + $0x338] sm:$0xff] %v3306
      %3563 = vst [vmem:[#allocation2 + $0x340] sm:$0xff] %v3307
      %3564 = vst [vmem:[#allocation2 + $0x348] sm:$0xff] %v3308
      %3565 = vst [vmem:[#allocation2 + $0x350] sm:$0xff] %v3309
      %3566 = vst [vmem:[#allocation2 + $0x358] sm:$0xff] %v3310
      %3567 = vst [vmem:[#allocation2 + $0x360] sm:$0xff] %v3311
      %3568 = vst [vmem:[#allocation2 + $0x368] sm:$0xff] %v3312
      %3569 = vst [vmem:[#allocation2 + $0x370] sm:$0xff] %v3313
      %3570 = vst [vmem:[#allocation2 + $0x378] sm:$0xff] %v3314
      %3571 = vst [vmem:[#allocation2 + $0x380] sm:$0xff] %v3315
      %3572 = vst [vmem:[#allocation2 + $0x388] sm:$0xff] %v3316
      %3573 = vst [vmem:[#allocation2 + $0x390] sm:$0xff] %v3317
      %3574 = vst [vmem:[#allocation2 + $0x398] sm:$0xff] %v3318
      %3575 = vst [vmem:[#allocation2 + $0x3a0] sm:$0xff] %v3319
      %3576 = vst [vmem:[#allocation2 + $0x3a8] sm:$0xff] %v3320
      %3577 = vst [vmem:[#allocation2 + $0x3b0] sm:$0xff] %v3321
      %3578 = vst [vmem:[#allocation2 + $0x3b8] sm:$0xff] %v3322
      %3579 = vst [vmem:[#allocation2 + $0x3c0] sm:$0xff] %v3323
      %3580 = vst [vmem:[#allocation2 + $0x3c8] sm:$0xff] %v3324
      %3581 = vst [vmem:[#allocation2 + $0x3d0] sm:$0xff] %v3325
      %3582 = vst [vmem:[#allocation2 + $0x3d8] sm:$0xff] %v3326
      %3583 = vst [vmem:[#allocation2 + $0x3e0] sm:$0xff] %v3327
      %3584 = vst [vmem:[#allocation2 + $0x3e8] sm:$0xff] %v3328
      %3585 = vst [vmem:[#allocation2 + $0x3f0] sm:$0xff] %v3329
      %3586 = vst [vmem:[#allocation2 + $0x3f8] sm:$0xff] %v3330
      %3587 = vst [vmem:[#allocation2 + $0x400] sm:$0xff] %v3331
      %3588 = vst [vmem:[#allocation2 + $0x408] sm:$0xff] %v3332
      %3589 = vst [vmem:[#allocation2 + $0x410] sm:$0xff] %v3333
      %3590 = vst [vmem:[#allocation2 + $0x418] sm:$0xff] %v3334
      %3591 = vst [vmem:[#allocation2 + $0x420] sm:$0xff] %v3335
      %3592 = vst [vmem:[#allocation2 + $0x428] sm:$0xff] %v3336
      %3593 = vst [vmem:[#allocation2 + $0x430] sm:$0xff] %v3337
      %3594 = vst [vmem:[#allocation2 + $0x438] sm:$0xff] %v3338
      %3595 = vst [vmem:[#allocation2 + $0x440] sm:$0xff] %v3339
      %3596 = vst [vmem:[#allocation2 + $0x448] sm:$0xff] %v3340
      %3597 = vst [vmem:[#allocation2 + $0x450] sm:$0xff] %v3341
      %3598 = vst [vmem:[#allocation2 + $0x458] sm:$0xff] %v3342
      %3599 = vst [vmem:[#allocation2 + $0x460] sm:$0xff] %v3343
      %3600 = vst [vmem:[#allocation2 + $0x468] sm:$0xff] %v3344
      %3601 = vst [vmem:[#allocation2 + $0x470] sm:$0xff] %v3345
      %3602 = vst [vmem:[#allocation2 + $0x478] sm:$0xff] %v3346
      %3603 = vst [vmem:[#allocation2 + $0x480] sm:$0xff] %v3347
      %3604 = vst [vmem:[#allocation2 + $0x488] sm:$0xff] %v3348
      %3605 = vst [vmem:[#allocation2 + $0x490] sm:$0xff] %v3349
      %3606 = vst [vmem:[#allocation2 + $0x498] sm:$0xff] %v3350
      %3607 = vst [vmem:[#allocation2 + $0x4a0] sm:$0xff] %v3351
      %3608 = vst [vmem:[#allocation2 + $0x4a8] sm:$0xff] %v3352
      %3609 = vst [vmem:[#allocation2 + $0x4b0] sm:$0xff] %v3353
      %3610 = vst [vmem:[#allocation2 + $0x4b8] sm:$0xff] %v3354
      %3611 = vst [vmem:[#allocation2 + $0x4c0] sm:$0xff] %v3355
      %3612 = vst [vmem:[#allocation2 + $0x4c8] sm:$0xff] %v3356
      %3613 = vst [vmem:[#allocation2 + $0x4d0] sm:$0xff] %v3357
      %3614 = vst [vmem:[#allocation2 + $0x4d8] sm:$0xff] %v3358
      %3615 = vst [vmem:[#allocation2 + $0x4e0] sm:$0xff] %v3359
      %3616 = vst [vmem:[#allocation2 + $0x4e8] sm:$0xff] %v3360
      %3617 = vst [vmem:[#allocation2 + $0x4f0] sm:$0xff] %v3361
      %3618 = vst [vmem:[#allocation2 + $0x4f8] sm:$0xff] %v3362
      %3619 = vst [vmem:[#allocation2 + $0x500] sm:$0xff] %v3363
      %3620 = vst [vmem:[#allocation2 + $0x508] sm:$0xff] %v3364
      %3621 = vst [vmem:[#allocation2 + $0x510] sm:$0xff] %v3365
      %3622 = vst [vmem:[#allocation2 + $0x518] sm:$0xff] %v3366
      %3623 = vst [vmem:[#allocation2 + $0x520] sm:$0xff] %v3367
      %3624 = vst [vmem:[#allocation2 + $0x528] sm:$0xff] %v3368
      %3625 = vst [vmem:[#allocation2 + $0x530] sm:$0xff] %v3369
      %3626 = vst [vmem:[#allocation2 + $0x538] sm:$0xff] %v3370
      %3627 = vst [vmem:[#allocation2 + $0x540] sm:$0xff] %v3371
      %3628 = vst [vmem:[#allocation2 + $0x548] sm:$0xff] %v3372
      %3629 = vst [vmem:[#allocation2 + $0x550] sm:$0xff] %v3373
      %3630 = vst [vmem:[#allocation2 + $0x558] sm:$0xff] %v3374
      %3631 = vst [vmem:[#allocation2 + $0x560] sm:$0xff] %v3375
      %3632 = vst [vmem:[#allocation2 + $0x568] sm:$0xff] %v3376
      %3633 = vst [vmem:[#allocation2 + $0x570] sm:$0xff] %v3377
      %3634 = vst [vmem:[#allocation2 + $0x578] sm:$0xff] %v3378
      %3635 = vst [vmem:[#allocation2 + $0x580] sm:$0xff] %v3379
      %3636 = vst [vmem:[#allocation2 + $0x588] sm:$0xff] %v3380
      %3637 = vst [vmem:[#allocation2 + $0x590] sm:$0xff] %v3381
      %3638 = vst [vmem:[#allocation2 + $0x598] sm:$0xff] %v3382
      %3639 = vst [vmem:[#allocation2 + $0x5a0] sm:$0xff] %v3383
      %3640 = vst [vmem:[#allocation2 + $0x5a8] sm:$0xff] %v3384
      %3641 = vst [vmem:[#allocation2 + $0x5b0] sm:$0xff] %v3385
      %3642 = vst [vmem:[#allocation2 + $0x5b8] sm:$0xff] %v3386
      %3643 = vst [vmem:[#allocation2 + $0x5c0] sm:$0xff] %v3387
      %3644 = vst [vmem:[#allocation2 + $0x5c8] sm:$0xff] %v3388
      %3645 = vst [vmem:[#allocation2 + $0x5d0] sm:$0xff] %v3389
      %3646 = vst [vmem:[#allocation2 + $0x5d8] sm:$0xff] %v3390
      %3647 = vst [vmem:[#allocation2 + $0x5e0] sm:$0xff] %v3391
      %3648 = vst [vmem:[#allocation2 + $0x5e8] sm:$0xff] %v3392
      %3649 = vst [vmem:[#allocation2 + $0x5f0] sm:$0xff] %v3393
      %3650 = vst [vmem:[#allocation2 + $0x5f8] sm:$0xff] %v3394
      %3651 = vst [vmem:[#allocation2 + $0x600] sm:$0xff] %v3395
      %3652 = vst [vmem:[#allocation2 + $0x608] sm:$0xff] %v3396
      %3653 = vst [vmem:[#allocation2 + $0x610] sm:$0xff] %v3397
      %3654 = vst [vmem:[#allocation2 + $0x618] sm:$0xff] %v3398
      %3655 = vst [vmem:[#allocation2 + $0x620] sm:$0xff] %v3399
      %3656 = vst [vmem:[#allocation2 + $0x628] sm:$0xff] %v3400
      %3657 = vst [vmem:[#allocation2 + $0x630] sm:$0xff] %v3401
      %3658 = vst [vmem:[#allocation2 + $0x638] sm:$0xff] %v3402
      %3659 = vst [vmem:[#allocation2 + $0x640] sm:$0xff] %v3403
      %3660 = vst [vmem:[#allocation2 + $0x648] sm:$0xff] %v3404
      %3661 = vst [vmem:[#allocation2 + $0x650] sm:$0xff] %v3405
      %3662 = vst [vmem:[#allocation2 + $0x658] sm:$0xff] %v3406
      %3663 = vst [vmem:[#allocation2 + $0x660] sm:$0xff] %v3407
      %3664 = vst [vmem:[#allocation2 + $0x668] sm:$0xff] %v3408
      %3665 = vst [vmem:[#allocation2 + $0x670] sm:$0xff] %v3409
      %3666 = vst [vmem:[#allocation2 + $0x678] sm:$0xff] %v3410
      %3667 = vst [vmem:[#allocation2 + $0x680] sm:$0xff] %v3411
      %3668 = vst [vmem:[#allocation2 + $0x688] sm:$0xff] %v3412
      %3669 = vst [vmem:[#allocation2 + $0x690] sm:$0xff] %v3413
      %3670 = vst [vmem:[#allocation2 + $0x698] sm:$0xff] %v3414
      %3671 = vst [vmem:[#allocation2 + $0x6a0] sm:$0xff] %v3415
      %3672 = vst [vmem:[#allocation2 + $0x6a8] sm:$0xff] %v3416
      %3673 = vst [vmem:[#allocation2 + $0x6b0] sm:$0xff] %v3417
      %3674 = vst [vmem:[#allocation2 + $0x6b8] sm:$0xff] %v3418
      %3675 = vst [vmem:[#allocation2 + $0x6c0] sm:$0xff] %v3419
      %3676 = vst [vmem:[#allocation2 + $0x6c8] sm:$0xff] %v3420
      %3677 = vst [vmem:[#allocation2 + $0x6d0] sm:$0xff] %v3421
      %3678 = vst [vmem:[#allocation2 + $0x6d8] sm:$0xff] %v3422
      %3679 = vst [vmem:[#allocation2 + $0x6e0] sm:$0xff] %v3423
      %3680 = vst [vmem:[#allocation2 + $0x6e8] sm:$0xff] %v3424
      %3681 = vst [vmem:[#allocation2 + $0x6f0] sm:$0xff] %v3425
      %3682 = vst [vmem:[#allocation2 + $0x6f8] sm:$0xff] %v3426
      %3683 = vst [vmem:[#allocation2 + $0x700] sm:$0xff] %v3427
      %3684 = vst [vmem:[#allocation2 + $0x708] sm:$0xff] %v3428
      %3685 = vst [vmem:[#allocation2 + $0x710] sm:$0xff] %v3429
      %3686 = vst [vmem:[#allocation2 + $0x718] sm:$0xff] %v3430
      %3687 = vst [vmem:[#allocation2 + $0x720] sm:$0xff] %v3431
      %3688 = vst [vmem:[#allocation2 + $0x728] sm:$0xff] %v3432
      %3689 = vst [vmem:[#allocation2 + $0x730] sm:$0xff] %v3433
      %3690 = vst [vmem:[#allocation2 + $0x738] sm:$0xff] %v3434
      %3691 = vst [vmem:[#allocation2 + $0x740] sm:$0xff] %v3435
      %3692 = vst [vmem:[#allocation2 + $0x748] sm:$0xff] %v3436
      %3693 = vst [vmem:[#allocation2 + $0x750] sm:$0xff] %v3437
      %3694 = vst [vmem:[#allocation2 + $0x758] sm:$0xff] %v3438
      %3695 = vst [vmem:[#allocation2 + $0x760] sm:$0xff] %v3439
      %3696 = vst [vmem:[#allocation2 + $0x768] sm:$0xff] %v3440
      %3697 = vst [vmem:[#allocation2 + $0x770] sm:$0xff] %v3441
      %3698 = vst [vmem:[#allocation2 + $0x778] sm:$0xff] %v3442
      %3699 = vst [vmem:[#allocation2 + $0x780] sm:$0xff] %v3443
      %3700 = vst [vmem:[#allocation2 + $0x788] sm:$0xff] %v3444
      %3701 = vst [vmem:[#allocation2 + $0x790] sm:$0xff] %v3445
      %3702 = vst [vmem:[#allocation2 + $0x798] sm:$0xff] %v3446
      %3703 = vst [vmem:[#allocation2 + $0x7a0] sm:$0xff] %v3447
      %3704 = vst [vmem:[#allocation2 + $0x7a8] sm:$0xff] %v3448
      %3705 = vst [vmem:[#allocation2 + $0x7b0] sm:$0xff] %v3449
      %3706 = vst [vmem:[#allocation2 + $0x7b8] sm:$0xff] %v3450
      %3707 = vst [vmem:[#allocation2 + $0x7c0] sm:$0xff] %v3451
      %3708 = vst [vmem:[#allocation2 + $0x7c8] sm:$0xff] %v3452
      %3709 = vst [vmem:[#allocation2 + $0x7d0] sm:$0xff] %v3453
      %3710 = vst [vmem:[#allocation2 + $0x7d8] sm:$0xff] %v3454
      %3711 = vst [vmem:[#allocation2 + $0x7e0] sm:$0xff] %v3455
      %3712 = vst [vmem:[#allocation2 + $0x7e8] sm:$0xff] %v3456
      %3713 = vst [vmem:[#allocation2 + $0x7f0] sm:$0xff] %v3457
      %3714 = vst [vmem:[#allocation2 + $0x7f8] sm:$0xff] %v3458
    $region13: #{tpu_custom_call.1} parent=1 // pred_fallthru
      _
    %p3715 = scmp.ne.s32.totalorder 0, 0
    // Predicated region
    $region14: #{tpu_custom_call.1} parent=1 // pred_check
      %p3716 = pneg %p3715
    $region15: #{tpu_custom_call.1} parent=1 // pred_check_branch
      %3718 = sbr.rel (%p3716) target = $region17
    $region16: #{tpu_custom_call.1} parent=1 // pred_region
      %3719 = vst [vmem:[#allocation2] sm:$0xff] %v2617
      %3720 = vst [vmem:[#allocation2 + $0x8] sm:$0xff] %v2618
      %3721 = vst [vmem:[#allocation2 + $0x10] sm:$0xff] %v2619
      %3722 = vst [vmem:[#allocation2 + $0x18] sm:$0xff] %v2620
      %3723 = vst [vmem:[#allocation2 + $0x20] sm:$0xff] %v2621
      %3724 = vst [vmem:[#allocation2 + $0x28] sm:$0xff] %v2622
      %3725 = vst [vmem:[#allocation2 + $0x30] sm:$0xff] %v2623
      %3726 = vst [vmem:[#allocation2 + $0x38] sm:$0xff] %v2624
      %3727 = vst [vmem:[#allocation2 + $0x40] sm:$0xff] %v2625
      %3728 = vst [vmem:[#allocation2 + $0x48] sm:$0xff] %v2626
      %3729 = vst [vmem:[#allocation2 + $0x50] sm:$0xff] %v2627
      %3730 = vst [vmem:[#allocation2 + $0x58] sm:$0xff] %v2628
      %3731 = vst [vmem:[#allocation2 + $0x60] sm:$0xff] %v2629
      %3732 = vst [vmem:[#allocation2 + $0x68] sm:$0xff] %v2630
      %3733 = vst [vmem:[#allocation2 + $0x70] sm:$0xff] %v2631
      %3734 = vst [vmem:[#allocation2 + $0x78] sm:$0xff] %v2632
      %3735 = vst [vmem:[#allocation2 + $0x80] sm:$0xff] %v2633
      %3736 = vst [vmem:[#allocation2 + $0x88] sm:$0xff] %v2634
      %3737 = vst [vmem:[#allocation2 + $0x90] sm:$0xff] %v2635
      %3738 = vst [vmem:[#allocation2 + $0x98] sm:$0xff] %v2636
      %3739 = vst [vmem:[#allocation2 + $0xa0] sm:$0xff] %v2637
      %3740 = vst [vmem:[#allocation2 + $0xa8] sm:$0xff] %v2638
      %3741 = vst [vmem:[#allocation2 + $0xb0] sm:$0xff] %v2639
      %3742 = vst [vmem:[#allocation2 + $0xb8] sm:$0xff] %v2640
      %3743 = vst [vmem:[#allocation2 + $0xc0] sm:$0xff] %v2641
      %3744 = vst [vmem:[#allocation2 + $0xc8] sm:$0xff] %v2642
      %3745 = vst [vmem:[#allocation2 + $0xd0] sm:$0xff] %v2643
      %3746 = vst [vmem:[#allocation2 + $0xd8] sm:$0xff] %v2644
      %3747 = vst [vmem:[#allocation2 + $0xe0] sm:$0xff] %v2645
      %3748 = vst [vmem:[#allocation2 + $0xe8] sm:$0xff] %v2646
      %3749 = vst [vmem:[#allocation2 + $0xf0] sm:$0xff] %v2647
      %3750 = vst [vmem:[#allocation2 + $0xf8] sm:$0xff] %v2648
      %3751 = vst [vmem:[#allocation2 + $0x100] sm:$0xff] %v2649
      %3752 = vst [vmem:[#allocation2 + $0x108] sm:$0xff] %v2650
      %3753 = vst [vmem:[#allocation2 + $0x110] sm:$0xff] %v2651
      %3754 = vst [vmem:[#allocation2 + $0x118] sm:$0xff] %v2652
      %3755 = vst [vmem:[#allocation2 + $0x120] sm:$0xff] %v2653
      %3756 = vst [vmem:[#allocation2 + $0x128] sm:$0xff] %v2654
      %3757 = vst [vmem:[#allocation2 + $0x130] sm:$0xff] %v2655
      %3758 = vst [vmem:[#allocation2 + $0x138] sm:$0xff] %v2656
      %3759 = vst [vmem:[#allocation2 + $0x140] sm:$0xff] %v2657
      %3760 = vst [vmem:[#allocation2 + $0x148] sm:$0xff] %v2658
      %3761 = vst [vmem:[#allocation2 + $0x150] sm:$0xff] %v2659
      %3762 = vst [vmem:[#allocation2 + $0x158] sm:$0xff] %v2660
      %3763 = vst [vmem:[#allocation2 + $0x160] sm:$0xff] %v2661
      %3764 = vst [vmem:[#allocation2 + $0x168] sm:$0xff] %v2662
      %3765 = vst [vmem:[#allocation2 + $0x170] sm:$0xff] %v2663
      %3766 = vst [vmem:[#allocation2 + $0x178] sm:$0xff] %v2664
      %3767 = vst [vmem:[#allocation2 + $0x180] sm:$0xff] %v2665
      %3768 = vst [vmem:[#allocation2 + $0x188] sm:$0xff] %v2666
      %3769 = vst [vmem:[#allocation2 + $0x190] sm:$0xff] %v2667
      %3770 = vst [vmem:[#allocation2 + $0x198] sm:$0xff] %v2668
      %3771 = vst [vmem:[#allocation2 + $0x1a0] sm:$0xff] %v2669
      %3772 = vst [vmem:[#allocation2 + $0x1a8] sm:$0xff] %v2670
      %3773 = vst [vmem:[#allocation2 + $0x1b0] sm:$0xff] %v2671
      %3774 = vst [vmem:[#allocation2 + $0x1b8] sm:$0xff] %v2672
      %3775 = vst [vmem:[#allocation2 + $0x1c0] sm:$0xff] %v2673
      %3776 = vst [vmem:[#allocation2 + $0x1c8] sm:$0xff] %v2674
      %3777 = vst [vmem:[#allocation2 + $0x1d0] sm:$0xff] %v2675
      %3778 = vst [vmem:[#allocation2 + $0x1d8] sm:$0xff] %v2676
      %3779 = vst [vmem:[#allocation2 + $0x1e0] sm:$0xff] %v2677
      %3780 = vst [vmem:[#allocation2 + $0x1e8] sm:$0xff] %v2678
      %3781 = vst [vmem:[#allocation2 + $0x1f0] sm:$0xff] %v2679
      %3782 = vst [vmem:[#allocation2 + $0x1f8] sm:$0xff] %v2680
      %3783 = vst [vmem:[#allocation2 + $0x200] sm:$0xff] %v2681
      %3784 = vst [vmem:[#allocation2 + $0x208] sm:$0xff] %v2682
      %3785 = vst [vmem:[#allocation2 + $0x210] sm:$0xff] %v2683
      %3786 = vst [vmem:[#allocation2 + $0x218] sm:$0xff] %v2684
      %3787 = vst [vmem:[#allocation2 + $0x220] sm:$0xff] %v2685
      %3788 = vst [vmem:[#allocation2 + $0x228] sm:$0xff] %v2686
      %3789 = vst [vmem:[#allocation2 + $0x230] sm:$0xff] %v2687
      %3790 = vst [vmem:[#allocation2 + $0x238] sm:$0xff] %v2688
      %3791 = vst [vmem:[#allocation2 + $0x240] sm:$0xff] %v2689
      %3792 = vst [vmem:[#allocation2 + $0x248] sm:$0xff] %v2690
      %3793 = vst [vmem:[#allocation2 + $0x250] sm:$0xff] %v2691
      %3794 = vst [vmem:[#allocation2 + $0x258] sm:$0xff] %v2692
      %3795 = vst [vmem:[#allocation2 + $0x260] sm:$0xff] %v2693
      %3796 = vst [vmem:[#allocation2 + $0x268] sm:$0xff] %v2694
      %3797 = vst [vmem:[#allocation2 + $0x270] sm:$0xff] %v2695
      %3798 = vst [vmem:[#allocation2 + $0x278] sm:$0xff] %v2696
      %3799 = vst [vmem:[#allocation2 + $0x280] sm:$0xff] %v2697
      %3800 = vst [vmem:[#allocation2 + $0x288] sm:$0xff] %v2698
      %3801 = vst [vmem:[#allocation2 + $0x290] sm:$0xff] %v2699
      %3802 = vst [vmem:[#allocation2 + $0x298] sm:$0xff] %v2700
      %3803 = vst [vmem:[#allocation2 + $0x2a0] sm:$0xff] %v2701
      %3804 = vst [vmem:[#allocation2 + $0x2a8] sm:$0xff] %v2702
      %3805 = vst [vmem:[#allocation2 + $0x2b0] sm:$0xff] %v2703
      %3806 = vst [vmem:[#allocation2 + $0x2b8] sm:$0xff] %v2704
      %3807 = vst [vmem:[#allocation2 + $0x2c0] sm:$0xff] %v2705
      %3808 = vst [vmem:[#allocation2 + $0x2c8] sm:$0xff] %v2706
      %3809 = vst [vmem:[#allocation2 + $0x2d0] sm:$0xff] %v2707
      %3810 = vst [vmem:[#allocation2 + $0x2d8] sm:$0xff] %v2708
      %3811 = vst [vmem:[#allocation2 + $0x2e0] sm:$0xff] %v2709
      %3812 = vst [vmem:[#allocation2 + $0x2e8] sm:$0xff] %v2710
      %3813 = vst [vmem:[#allocation2 + $0x2f0] sm:$0xff] %v2711
      %3814 = vst [vmem:[#allocation2 + $0x2f8] sm:$0xff] %v2712
      %3815 = vst [vmem:[#allocation2 + $0x300] sm:$0xff] %v2713
      %3816 = vst [vmem:[#allocation2 + $0x308] sm:$0xff] %v2714
      %3817 = vst [vmem:[#allocation2 + $0x310] sm:$0xff] %v2715
      %3818 = vst [vmem:[#allocation2 + $0x318] sm:$0xff] %v2716
      %3819 = vst [vmem:[#allocation2 + $0x320] sm:$0xff] %v2717
      %3820 = vst [vmem:[#allocation2 + $0x328] sm:$0xff] %v2718
      %3821 = vst [vmem:[#allocation2 + $0x330] sm:$0xff] %v2719
      %3822 = vst [vmem:[#allocation2 + $0x338] sm:$0xff] %v2720
      %3823 = vst [vmem:[#allocation2 + $0x340] sm:$0xff] %v2721
      %3824 = vst [vmem:[#allocation2 + $0x348] sm:$0xff] %v2722
      %3825 = vst [vmem:[#allocation2 + $0x350] sm:$0xff] %v2723
      %3826 = vst [vmem:[#allocation2 + $0x358] sm:$0xff] %v2724
      %3827 = vst [vmem:[#allocation2 + $0x360] sm:$0xff] %v2725
      %3828 = vst [vmem:[#allocation2 + $0x368] sm:$0xff] %v2726
      %3829 = vst [vmem:[#allocation2 + $0x370] sm:$0xff] %v2727
      %3830 = vst [vmem:[#allocation2 + $0x378] sm:$0xff] %v2728
      %3831 = vst [vmem:[#allocation2 + $0x380] sm:$0xff] %v2729
      %3832 = vst [vmem:[#allocation2 + $0x388] sm:$0xff] %v2730
      %3833 = vst [vmem:[#allocation2 + $0x390] sm:$0xff] %v2731
      %3834 = vst [vmem:[#allocation2 + $0x398] sm:$0xff] %v2732
      %3835 = vst [vmem:[#allocation2 + $0x3a0] sm:$0xff] %v2733
      %3836 = vst [vmem:[#allocation2 + $0x3a8] sm:$0xff] %v2734
      %3837 = vst [vmem:[#allocation2 + $0x3b0] sm:$0xff] %v2735
      %3838 = vst [vmem:[#allocation2 + $0x3b8] sm:$0xff] %v2736
      %3839 = vst [vmem:[#allocation2 + $0x3c0] sm:$0xff] %v2737
      %3840 = vst [vmem:[#allocation2 + $0x3c8] sm:$0xff] %v2738
      %3841 = vst [vmem:[#allocation2 + $0x3d0] sm:$0xff] %v2739
      %3842 = vst [vmem:[#allocation2 + $0x3d8] sm:$0xff] %v2740
      %3843 = vst [vmem:[#allocation2 + $0x3e0] sm:$0xff] %v2741
      %3844 = vst [vmem:[#allocation2 + $0x3e8] sm:$0xff] %v2742
      %3845 = vst [vmem:[#allocation2 + $0x3f0] sm:$0xff] %v2743
      %3846 = vst [vmem:[#allocation2 + $0x3f8] sm:$0xff] %v2744
      %3847 = vst [vmem:[#allocation2 + $0x400] sm:$0xff] %v2745
      %3848 = vst [vmem:[#allocation2 + $0x408] sm:$0xff] %v2746
      %3849 = vst [vmem:[#allocation2 + $0x410] sm:$0xff] %v2747
      %3850 = vst [vmem:[#allocation2 + $0x418] sm:$0xff] %v2748
      %3851 = vst [vmem:[#allocation2 + $0x420] sm:$0xff] %v2749
      %3852 = vst [vmem:[#allocation2 + $0x428] sm:$0xff] %v2750
      %3853 = vst [vmem:[#allocation2 + $0x430] sm:$0xff] %v2751
      %3854 = vst [vmem:[#allocation2 + $0x438] sm:$0xff] %v2752
      %3855 = vst [vmem:[#allocation2 + $0x440] sm:$0xff] %v2753
      %3856 = vst [vmem:[#allocation2 + $0x448] sm:$0xff] %v2754
      %3857 = vst [vmem:[#allocation2 + $0x450] sm:$0xff] %v2755
      %3858 = vst [vmem:[#allocation2 + $0x458] sm:$0xff] %v2756
      %3859 = vst [vmem:[#allocation2 + $0x460] sm:$0xff] %v2757
      %3860 = vst [vmem:[#allocation2 + $0x468] sm:$0xff] %v2758
      %3861 = vst [vmem:[#allocation2 + $0x470] sm:$0xff] %v2759
      %3862 = vst [vmem:[#allocation2 + $0x478] sm:$0xff] %v2760
      %3863 = vst [vmem:[#allocation2 + $0x480] sm:$0xff] %v2761
      %3864 = vst [vmem:[#allocation2 + $0x488] sm:$0xff] %v2762
      %3865 = vst [vmem:[#allocation2 + $0x490] sm:$0xff] %v2763
      %3866 = vst [vmem:[#allocation2 + $0x498] sm:$0xff] %v2764
      %3867 = vst [vmem:[#allocation2 + $0x4a0] sm:$0xff] %v2765
      %3868 = vst [vmem:[#allocation2 + $0x4a8] sm:$0xff] %v2766
      %3869 = vst [vmem:[#allocation2 + $0x4b0] sm:$0xff] %v2767
      %3870 = vst [vmem:[#allocation2 + $0x4b8] sm:$0xff] %v2768
      %3871 = vst [vmem:[#allocation2 + $0x4c0] sm:$0xff] %v2769
      %3872 = vst [vmem:[#allocation2 + $0x4c8] sm:$0xff] %v2770
      %3873 = vst [vmem:[#allocation2 + $0x4d0] sm:$0xff] %v2771
      %3874 = vst [vmem:[#allocation2 + $0x4d8] sm:$0xff] %v2772
      %3875 = vst [vmem:[#allocation2 + $0x4e0] sm:$0xff] %v2773
      %3876 = vst [vmem:[#allocation2 + $0x4e8] sm:$0xff] %v2774
      %3877 = vst [vmem:[#allocation2 + $0x4f0] sm:$0xff] %v2775
      %3878 = vst [vmem:[#allocation2 + $0x4f8] sm:$0xff] %v2776
      %3879 = vst [vmem:[#allocation2 + $0x500] sm:$0xff] %v2777
      %3880 = vst [vmem:[#allocation2 + $0x508] sm:$0xff] %v2778
      %3881 = vst [vmem:[#allocation2 + $0x510] sm:$0xff] %v2779
      %3882 = vst [vmem:[#allocation2 + $0x518] sm:$0xff] %v2780
      %3883 = vst [vmem:[#allocation2 + $0x520] sm:$0xff] %v2781
      %3884 = vst [vmem:[#allocation2 + $0x528] sm:$0xff] %v2782
      %3885 = vst [vmem:[#allocation2 + $0x530] sm:$0xff] %v2783
      %3886 = vst [vmem:[#allocation2 + $0x538] sm:$0xff] %v2784
      %3887 = vst [vmem:[#allocation2 + $0x540] sm:$0xff] %v2785
      %3888 = vst [vmem:[#allocation2 + $0x548] sm:$0xff] %v2786
      %3889 = vst [vmem:[#allocation2 + $0x550] sm:$0xff] %v2787
      %3890 = vst [vmem:[#allocation2 + $0x558] sm:$0xff] %v2788
      %3891 = vst [vmem:[#allocation2 + $0x560] sm:$0xff] %v2789
      %3892 = vst [vmem:[#allocation2 + $0x568] sm:$0xff] %v2790
      %3893 = vst [vmem:[#allocation2 + $0x570] sm:$0xff] %v2791
      %3894 = vst [vmem:[#allocation2 + $0x578] sm:$0xff] %v2792
      %3895 = vst [vmem:[#allocation2 + $0x580] sm:$0xff] %v2793
      %3896 = vst [vmem:[#allocation2 + $0x588] sm:$0xff] %v2794
      %3897 = vst [vmem:[#allocation2 + $0x590] sm:$0xff] %v2795
      %3898 = vst [vmem:[#allocation2 + $0x598] sm:$0xff] %v2796
      %3899 = vst [vmem:[#allocation2 + $0x5a0] sm:$0xff] %v2797
      %3900 = vst [vmem:[#allocation2 + $0x5a8] sm:$0xff] %v2798
      %3901 = vst [vmem:[#allocation2 + $0x5b0] sm:$0xff] %v2799
      %3902 = vst [vmem:[#allocation2 + $0x5b8] sm:$0xff] %v2800
      %3903 = vst [vmem:[#allocation2 + $0x5c0] sm:$0xff] %v2801
      %3904 = vst [vmem:[#allocation2 + $0x5c8] sm:$0xff] %v2802
      %3905 = vst [vmem:[#allocation2 + $0x5d0] sm:$0xff] %v2803
      %3906 = vst [vmem:[#allocation2 + $0x5d8] sm:$0xff] %v2804
      %3907 = vst [vmem:[#allocation2 + $0x5e0] sm:$0xff] %v2805
      %3908 = vst [vmem:[#allocation2 + $0x5e8] sm:$0xff] %v2806
      %3909 = vst [vmem:[#allocation2 + $0x5f0] sm:$0xff] %v2807
      %3910 = vst [vmem:[#allocation2 + $0x5f8] sm:$0xff] %v2808
      %3911 = vst [vmem:[#allocation2 + $0x600] sm:$0xff] %v2809
      %3912 = vst [vmem:[#allocation2 + $0x608] sm:$0xff] %v2810
      %3913 = vst [vmem:[#allocation2 + $0x610] sm:$0xff] %v2811
      %3914 = vst [vmem:[#allocation2 + $0x618] sm:$0xff] %v2812
      %3915 = vst [vmem:[#allocation2 + $0x620] sm:$0xff] %v2813
      %3916 = vst [vmem:[#allocation2 + $0x628] sm:$0xff] %v2814
      %3917 = vst [vmem:[#allocation2 + $0x630] sm:$0xff] %v2815
      %3918 = vst [vmem:[#allocation2 + $0x638] sm:$0xff] %v2816
      %3919 = vst [vmem:[#allocation2 + $0x640] sm:$0xff] %v2817
      %3920 = vst [vmem:[#allocation2 + $0x648] sm:$0xff] %v2818
      %3921 = vst [vmem:[#allocation2 + $0x650] sm:$0xff] %v2819
      %3922 = vst [vmem:[#allocation2 + $0x658] sm:$0xff] %v2820
      %3923 = vst [vmem:[#allocation2 + $0x660] sm:$0xff] %v2821
      %3924 = vst [vmem:[#allocation2 + $0x668] sm:$0xff] %v2822
      %3925 = vst [vmem:[#allocation2 + $0x670] sm:$0xff] %v2823
      %3926 = vst [vmem:[#allocation2 + $0x678] sm:$0xff] %v2824
      %3927 = vst [vmem:[#allocation2 + $0x680] sm:$0xff] %v2825
      %3928 = vst [vmem:[#allocation2 + $0x688] sm:$0xff] %v2826
      %3929 = vst [vmem:[#allocation2 + $0x690] sm:$0xff] %v2827
      %3930 = vst [vmem:[#allocation2 + $0x698] sm:$0xff] %v2828
      %3931 = vst [vmem:[#allocation2 + $0x6a0] sm:$0xff] %v2829
      %3932 = vst [vmem:[#allocation2 + $0x6a8] sm:$0xff] %v2830
      %3933 = vst [vmem:[#allocation2 + $0x6b0] sm:$0xff] %v2831
      %3934 = vst [vmem:[#allocation2 + $0x6b8] sm:$0xff] %v2832
      %3935 = vst [vmem:[#allocation2 + $0x6c0] sm:$0xff] %v2833
      %3936 = vst [vmem:[#allocation2 + $0x6c8] sm:$0xff] %v2834
      %3937 = vst [vmem:[#allocation2 + $0x6d0] sm:$0xff] %v2835
      %3938 = vst [vmem:[#allocation2 + $0x6d8] sm:$0xff] %v2836
      %3939 = vst [vmem:[#allocation2 + $0x6e0] sm:$0xff] %v2837
      %3940 = vst [vmem:[#allocation2 + $0x6e8] sm:$0xff] %v2838
      %3941 = vst [vmem:[#allocation2 + $0x6f0] sm:$0xff] %v2839
      %3942 = vst [vmem:[#allocation2 + $0x6f8] sm:$0xff] %v2840
      %3943 = vst [vmem:[#allocation2 + $0x700] sm:$0xff] %v2841
      %3944 = vst [vmem:[#allocation2 + $0x708] sm:$0xff] %v2842
      %3945 = vst [vmem:[#allocation2 + $0x710] sm:$0xff] %v2843
      %3946 = vst [vmem:[#allocation2 + $0x718] sm:$0xff] %v2844
      %3947 = vst [vmem:[#allocation2 + $0x720] sm:$0xff] %v2845
      %3948 = vst [vmem:[#allocation2 + $0x728] sm:$0xff] %v2846
      %3949 = vst [vmem:[#allocation2 + $0x730] sm:$0xff] %v2847
      %3950 = vst [vmem:[#allocation2 + $0x738] sm:$0xff] %v2848
      %3951 = vst [vmem:[#allocation2 + $0x740] sm:$0xff] %v2849
      %3952 = vst [vmem:[#allocation2 + $0x748] sm:$0xff] %v2850
      %3953 = vst [vmem:[#allocation2 + $0x750] sm:$0xff] %v2851
      %3954 = vst [vmem:[#allocation2 + $0x758] sm:$0xff] %v2852
      %3955 = vst [vmem:[#allocation2 + $0x760] sm:$0xff] %v2853
      %3956 = vst [vmem:[#allocation2 + $0x768] sm:$0xff] %v2854
      %3957 = vst [vmem:[#allocation2 + $0x770] sm:$0xff] %v2855
      %3958 = vst [vmem:[#allocation2 + $0x778] sm:$0xff] %v2856
      %3959 = vst [vmem:[#allocation2 + $0x780] sm:$0xff] %v2857
      %3960 = vst [vmem:[#allocation2 + $0x788] sm:$0xff] %v2858
      %3961 = vst [vmem:[#allocation2 + $0x790] sm:$0xff] %v2859
      %3962 = vst [vmem:[#allocation2 + $0x798] sm:$0xff] %v2860
      %3963 = vst [vmem:[#allocation2 + $0x7a0] sm:$0xff] %v2861
      %3964 = vst [vmem:[#allocation2 + $0x7a8] sm:$0xff] %v2862
      %3965 = vst [vmem:[#allocation2 + $0x7b0] sm:$0xff] %v2863
      %3966 = vst [vmem:[#allocation2 + $0x7b8] sm:$0xff] %v2864
      %3967 = vst [vmem:[#allocation2 + $0x7c0] sm:$0xff] %v2865
      %3968 = vst [vmem:[#allocation2 + $0x7c8] sm:$0xff] %v2866
      %3969 = vst [vmem:[#allocation2 + $0x7d0] sm:$0xff] %v2867
      %3970 = vst [vmem:[#allocation2 + $0x7d8] sm:$0xff] %v2868
      %3971 = vst [vmem:[#allocation2 + $0x7e0] sm:$0xff] %v2869
      %3972 = vst [vmem:[#allocation2 + $0x7e8] sm:$0xff] %v2870
      %3973 = vst [vmem:[#allocation2 + $0x7f0] sm:$0xff] %v2871
      %3974 = vst [vmem:[#allocation2 + $0x7f8] sm:$0xff] %v2872
    $region17: #{tpu_custom_call.1} parent=1 // pred_fallthru
      _
    // Predicated region
    $region18: #{tpu_custom_call.1} parent=1 // pred_check
      _
    $region19: #{tpu_custom_call.1} parent=1 // pred_check_branch
      %3976 = sbr.rel (0) target = $region21
    $region20: #{tpu_custom_call.1} parent=1 // pred_region
      %3978 = vsyncadd [#allocation3], 0
      %s3979 = sshll.u32 [#allocation2], 4
      %s3980 = int_to_ptr.vmem [resolvable:$true] %s3979
      %s3981 = sshll.u32 %s2, 4
      %s3982 = int_to_ptr.hbm [resolvable:$true] %s3981
      %3987 = dma.vmem_to_hbm [thread:$0]  %s3980, 32768, %s3982, [#allocation3], 512, 512, 32
    $region21: #{tpu_custom_call.1} parent=1 // pred_fallthru
      _
    // Predicated region
    $region22: #{tpu_custom_call.1} parent=1 // pred_check
      _
    $region23: #{tpu_custom_call.1} parent=1 // pred_check_branch
      %3989 = sbr.rel (0) target = $region25
    $region24: #{tpu_custom_call.1} parent=1 // pred_region
      %3991 = dma.done [#allocation3], 32768
    $region25: #{tpu_custom_call.1} parent=1 // pred_fallthru
      _
    %3992 = vsyncpa [#allocation3], 1

</llo_original>
